<compile_context>
chip_gen: v7x
topology: tpu7x:2x2x1
jax: 0.10.0
libtpu: 0.0.40
codegen_flags: <defaults>
</compile_context>

<pallas_src>
import jax
import jax.numpy as jnp
from jax.experimental import pallas as pl
from jax.experimental.pallas import tpu as pltpu


# --------------------------------------------------------------------------- #
# Kernel
# --------------------------------------------------------------------------- #
def _ffn_kernel(x_ref, g_ref, beta_ref, w1_ref, b1_ref, w2_ref, b2_ref, wo_ref,
                o_ref, xn_ref, acc_ref):
    k = pl.program_id(1)

    # ---- first I-chunk: one-pass LayerNorm, cache bf16 xn, zero accumulator ----
    @pl.when(k == 0)
    def _():
        x = x_ref[...].astype(jnp.float32)                        # (tm, H)
        inv_h = 1.0 / x.shape[-1]
        s1 = jnp.sum(x, axis=-1, keepdims=True)
        s2 = jnp.sum(x * x, axis=-1, keepdims=True)
        mean = s1 * inv_h
        var = s2 * inv_h - mean * mean                            # f32 one-pass var
        xn = (x - mean) * jax.lax.rsqrt(var + 1e-5)
        xn = xn * g_ref[...] + beta_ref[...]
        xn_ref[...] = xn.astype(jnp.bfloat16)                     # reused across k
        acc_ref[...] = jnp.zeros_like(acc_ref)

    # ---- per I-chunk: gate GEMMs, activations, output-proj accumulation ----
    xn = xn_ref[...]                                              # (tm, H) bf16
    h1 = jnp.dot(xn, w1_ref[...], preferred_element_type=jnp.float32) + b1_ref[...]
    h2 = jnp.dot(xn, w2_ref[...], preferred_element_type=jnp.float32) + b2_ref[...]
    h = jax.nn.sigmoid(h1) * jnp.maximum(h2, 0.0)                 # (tm, ti) f32

    # Dropout: eval-mode identity (deterministic).
    # TODO(synk): training-mode dropout would use pltpu.prng_seed / prng_random_bits.

    acc_ref[...] += jnp.dot(h.astype(jnp.bfloat16), wo_ref[...],
                            preferred_element_type=jnp.float32)   # (tm, H) f32

    @pl.when(k == pl.num_programs(1) - 1)
    def _():
        o_ref[...] = acc_ref[...].astype(o_ref.dtype)


# --------------------------------------------------------------------------- #
# Wrapper helpers
# --------------------------------------------------------------------------- #
def _round_up(a, b):
    return (a + b - 1) // b * b


def _vmem_capacity_bytes():
    try:
        return int(pltpu.get_tpu_info().vmem_capacity_bytes)
    except Exception:
        return 128 << 20  # conservative assumption (v5e/v6e)


def _spec(shape, index_map, *, single_buffer=False):
    """BlockSpec; constant-index operands get a single pipeline buffer."""
    if single_buffer:
        try:
            return pl.BlockSpec(shape, index_map, pipeline_mode=pl.Buffered(1))
        except TypeError:  # older jax without pipeline_mode support
            pass
    return pl.BlockSpec(shape, index_map)


def _pick_tile_i(intermediate_size):
    for cand in (512, 384, 256, 128):
        if intermediate_size % cand == 0:
            return cand
    return intermediate_size


def prepare_weights(params):
    """One-time repack (hoisted out of the forward): bf16 matmul weights,
    f32 biases / LayerNorm params, 2-D lane-dense shapes."""
    H, I = params["w1"].shape
    return {
        "g": params["ln_gamma"].reshape(1, H).astype(jnp.float32),
        "beta": params["ln_beta"].reshape(1, H).astype(jnp.float32),
        "w1": params["w1"].astype(jnp.bfloat16),          # (H, I)
        "b1": params["b1"].reshape(1, I).astype(jnp.float32),
        "w2": params["w2"].astype(jnp.bfloat16),          # (H, I)
        "b2": params["b2"].reshape(1, I).astype(jnp.float32),
        "wo": params["wo"].astype(jnp.bfloat16),          # (I, H)
    }


def intermediate_layer(x, packed, *, tile_m=None, tile_i=None):
    """x: (B, S, H) float32. packed: output of prepare_weights()."""
    B, S, H = x.shape
    M = B * S
    I = packed["w1"].shape[1]

    vmem_cap = _vmem_capacity_bytes()
    # Row tile: big tiles amortize per-grid-step overhead; 512 on 128 MiB chips,
    # 256 on v7x (64 MiB).  Always a multiple of 8 sublanes.
    if tile_m is None:
        tile_m = 512 if vmem_cap >= (100 << 20) else 256
    tm = min(_round_up(tile_m, 8), _round_up(M, 8))
    Mp = _round_up(M, tm)
    # Intermediate-dimension chunk (multiple of 128 lanes, divides I).
    ti = tile_i if tile_i is not None else _pick_tile_i(I)
    assert I % ti == 0
    nk = I // ti

    x2d = x.reshape(M, H)
    if Mp != M:
        x2d = jnp.pad(x2d, ((0, Mp - M), (0, 0)))

    n_row = Mp // tm
    flops = 2 * Mp * H * (2 * I) + 2 * Mp * I * H
    bytes_accessed = (2 * Mp * H * 4                          # x in + out (f32)
                      + n_row * (2 * H * I + I * H) * 2       # bf16 weight streams
                      + (2 * H + 2 * I) * 4)                  # gamma/beta/biases
    cost = pl.CostEstimate(flops=flops,
                           transcendentals=Mp * (I + 1),
                           bytes_accessed=bytes_accessed)

    single_w = (nk == 1)   # weights constant across the grid -> 1 buffer suffices
    out2d = pl.pallas_call(
        _ffn_kernel,
        out_shape=jax.ShapeDtypeStruct((Mp, H), x.dtype),
        grid_spec=pltpu.PrefetchScalarGridSpec(
            num_scalar_prefetch=0,
            grid=(n_row, nk),
            in_specs=[
                pl.BlockSpec((tm, H), lambda i, k: (i, 0)),                 # x rows
                _spec((1, H), lambda i, k: (0, 0), single_buffer=True),     # ln gamma
                _spec((1, H), lambda i, k: (0, 0), single_buffer=True),     # ln beta
                _spec((H, ti), lambda i, k: (0, k), single_buffer=single_w),  # w1 chunk
                _spec((1, ti), lambda i, k: (0, k), single_buffer=single_w),  # b1 chunk
                _spec((H, ti), lambda i, k: (0, k), single_buffer=single_w),  # w2 chunk
                _spec((1, ti), lambda i, k: (0, k), single_buffer=single_w),  # b2 chunk
                _spec((ti, H), lambda i, k: (k, 0), single_buffer=single_w),  # wo chunk
            ],
            out_specs=pl.BlockSpec((tm, H), lambda i, k: (i, 0)),
            scratch_shapes=[
                pltpu.VMEM((tm, H), jnp.bfloat16),   # cached normalized activations
                pltpu.VMEM((tm, H), jnp.float32),    # output-proj accumulator
            ],
        ),
        compiler_params=pltpu.CompilerParams(
            dimension_semantics=("parallel", "arbitrary"),
            # ~80% of physical VMEM: ~102 MiB on v5e/v6e, ~51 MiB on v7x —
            # headroom for compiler scratch / double buffers.
            vmem_limit_bytes=int(vmem_cap * 0.8)),
        cost_estimate=cost,
    )(x2d, packed["g"], packed["beta"],
      packed["w1"], packed["b1"], packed["w2"], packed["b2"], packed["wo"])

    return out2d[:M].reshape(B, S, H)


# --------------------------------------------------------------------------- #
# Params / reference
# --------------------------------------------------------------------------- #
def init_params(key, hidden_size, intermediate_size):
    """Deterministic parameter init. Linear weights stored as (in, out)
    (i.e. already transposed relative to PyTorch's (out, in))."""
    k1, k2, k3, k4, k5 = jax.random.split(key, 5)
    s_h = 1.0 / jnp.sqrt(hidden_size)
    s_i = 1.0 / jnp.sqrt(intermediate_size)
    return {
        "ln_gamma": jnp.ones((hidden_size,), jnp.float32),
        "ln_beta": jnp.zeros((hidden_size,), jnp.float32),
        "w1": jax.random.uniform(k1, (hidden_size, intermediate_size),
                                 jnp.float32, -s_h, s_h),
        "b1": jax.random.uniform(k2, (intermediate_size,), jnp.float32, -s_h, s_h),
        "w2": jax.random.uniform(k3, (hidden_size, intermediate_size),
                                 jnp.float32, -s_h, s_h),
        "b2": jax.random.uniform(k4, (intermediate_size,), jnp.float32, -s_h, s_h),
        "wo": jax.random.uniform(k5, (intermediate_size, hidden_size),
                                 jnp.float32, -s_i, s_i),
    }


def reference(x, p):
    """Pure-JAX f32 reference of the PyTorch forward (eval mode)."""
    mean = jnp.mean(x, axis=-1, keepdims=True)
    var = jnp.mean(jnp.square(x - mean), axis=-1, keepdims=True)
    xn = (x - mean) / jnp.sqrt(var + 1e-5) * p["ln_gamma"] + p["ln_beta"]
    reset = jax.nn.sigmoid(xn @ p["w1"] + p["b1"])
    act = jax.nn.relu(xn @ p["w2"] + p["b2"])
    return (reset * act) @ p["wo"]


if __name__ == "__main__":
    # Lane-dense small shapes: H and I multiples of 128 so stores are unmasked.
    B, S, H, I = 2, 256, 128, 256          # M = 512 rows
    key = jax.random.PRNGKey(0)
    kx, kp = jax.random.split(key)
    x = jax.random.normal(kx, (B, S, H), jnp.float32)
    params = init_params(kp, H, I)

    # One-time weight repack (bf16 cast) — NOT repeated per forward call.
    packed = prepare_weights(params)

    out = intermediate_layer(x, packed)
    out = jax.block_until_ready(out)

    ref = reference(x, params)
    assert out.shape == (B, S, H)
    # bf16 matmul inputs (f32 accumulation) -> expect ~1e-2-level agreement.
    max_err = float(jnp.max(jnp.abs(out - ref)))
    assert jnp.allclose(out, ref, atol=2e-2, rtol=2e-2), f"max err {max_err}"
    print("KERNEL_OK")
</pallas_src>

<mosaic_0001>
module attributes {stable_mosaic.version = 11 : i64} {
  func.func @_ffn_kernel(%arg0: i32, %arg1: i32, %arg2: memref<512x128xf32, #tpu.memory_space<vmem>>, %arg3: memref<1x128xf32, #tpu.memory_space<vmem>>, %arg4: memref<1x128xf32, #tpu.memory_space<vmem>>, %arg5: memref<128x256xbf16, #tpu.memory_space<vmem>>, %arg6: memref<1x256xf32, #tpu.memory_space<vmem>>, %arg7: memref<128x256xbf16, #tpu.memory_space<vmem>>, %arg8: memref<1x256xf32, #tpu.memory_space<vmem>>, %arg9: memref<256x128xbf16, #tpu.memory_space<vmem>>, %arg10: memref<512x128xf32, #tpu.memory_space<vmem>>, %arg11: memref<512x128xbf16, #tpu.memory_space<vmem>>, %arg12: memref<512x128xf32, #tpu.memory_space<vmem>>) attributes {dimension_semantics = [#tpu.dimension_semantics<parallel>, #tpu.dimension_semantics<arbitrary>], iteration_bounds = array<i64: 1, 1>, scalar_prefetch = 0 : i64, scratch_operands = 2 : i64, tpu.core_type = #tpu.core_type<tc>, window_params = [{transform_indices = @transform_0, window_bounds = array<i64: 512, 128>}, {pipeline_mode = #tpu.pipeline_mode<synchronous>, transform_indices = @transform_1, window_bounds = array<i64: 1, 128>}, {pipeline_mode = #tpu.pipeline_mode<synchronous>, transform_indices = @transform_2, window_bounds = array<i64: 1, 128>}, {pipeline_mode = #tpu.pipeline_mode<synchronous>, transform_indices = @transform_3, window_bounds = array<i64: 128, 256>}, {pipeline_mode = #tpu.pipeline_mode<synchronous>, transform_indices = @transform_4, window_bounds = array<i64: 1, 256>}, {pipeline_mode = #tpu.pipeline_mode<synchronous>, transform_indices = @transform_5, window_bounds = array<i64: 128, 256>}, {pipeline_mode = #tpu.pipeline_mode<synchronous>, transform_indices = @transform_6, window_bounds = array<i64: 1, 256>}, {pipeline_mode = #tpu.pipeline_mode<synchronous>, transform_indices = @transform_7, window_bounds = array<i64: 256, 128>}, {transform_indices = @transform_8, window_bounds = array<i64: 512, 128>}]} {
    %c0_i32 = arith.constant 0 : i32
    %0 = arith.cmpi eq, %arg1, %c0_i32 : i32
    %1 = arith.extui %0 : i1 to i32
    %c0_i32_0 = arith.constant 0 : i32
    %2 = arith.cmpi ne, %1, %c0_i32_0 : i32
    scf.if %2 {
      %c0_22 = arith.constant 0 : index
      %c0_23 = arith.constant 0 : index
      %31 = vector.load %arg2[%c0_22, %c0_23] : memref<512x128xf32, #tpu.memory_space<vmem>>, vector<512x128xf32>
      %cst_24 = arith.constant dense<0.000000e+00> : vector<512xf32>
      %32 = vector.multi_reduction <add>, %31, %cst_24 [1] : vector<512x128xf32> to vector<512xf32>
      %33 = vector.shape_cast %32 : vector<512xf32> to vector<512x1xf32>
      %34 = arith.mulf %31, %31 : vector<512x128xf32>
      %cst_25 = arith.constant dense<0.000000e+00> : vector<512xf32>
      %35 = vector.multi_reduction <add>, %34, %cst_25 [1] : vector<512x128xf32> to vector<512xf32>
      %36 = vector.shape_cast %35 : vector<512xf32> to vector<512x1xf32>
      %cst_26 = arith.constant 7.812500e-03 : f32
      %37 = vector.broadcast %cst_26 : f32 to vector<512x1xf32>
      %38 = arith.mulf %33, %37 : vector<512x1xf32>
      %cst_27 = arith.constant 7.812500e-03 : f32
      %39 = vector.broadcast %cst_27 : f32 to vector<512x1xf32>
      %40 = arith.mulf %36, %39 : vector<512x1xf32>
      %41 = arith.mulf %38, %38 : vector<512x1xf32>
      %42 = arith.subf %40, %41 : vector<512x1xf32>
      %43 = vector.broadcast %38 : vector<512x1xf32> to vector<512x128xf32>
      %44 = arith.subf %31, %43 : vector<512x128xf32>
      %cst_28 = arith.constant 9.99999974E-6 : f32
      %45 = vector.broadcast %cst_28 : f32 to vector<512x1xf32>
      %46 = arith.addf %42, %45 : vector<512x1xf32>
      %47 = math.rsqrt %46 : vector<512x1xf32>
      %48 = vector.broadcast %47 : vector<512x1xf32> to vector<512x128xf32>
      %49 = arith.mulf %44, %48 : vector<512x128xf32>
      %c0_29 = arith.constant 0 : index
      %c0_30 = arith.constant 0 : index
      %50 = vector.load %arg3[%c0_29, %c0_30] : memref<1x128xf32, #tpu.memory_space<vmem>>, vector<1x128xf32>
      %51 = vector.broadcast %50 : vector<1x128xf32> to vector<512x128xf32>
      %52 = arith.mulf %49, %51 : vector<512x128xf32>
      %c0_31 = arith.constant 0 : index
      %c0_32 = arith.constant 0 : index
      %53 = vector.load %arg4[%c0_31, %c0_32] : memref<1x128xf32, #tpu.memory_space<vmem>>, vector<1x128xf32>
      %54 = vector.broadcast %53 : vector<1x128xf32> to vector<512x128xf32>
      %55 = arith.addf %52, %54 : vector<512x128xf32>
      %56 = arith.truncf %55 : vector<512x128xf32> to vector<512x128xbf16>
      %c0_33 = arith.constant 0 : index
      %c0_34 = arith.constant 0 : index
      %57 = vector.load %arg11[%c0_33, %c0_34] : memref<512x128xbf16, #tpu.memory_space<vmem>>, vector<512x128xbf16>
      tpu.vector_store %arg11[%c0_33, %c0_34], %56 {strides = array<i32>} : memref<512x128xbf16, #tpu.memory_space<vmem>>, vector<512x128xbf16>,
      %cst_35 = arith.constant 0.000000e+00 : f32
      %58 = vector.broadcast %cst_35 : f32 to vector<512x128xf32>
      %c0_36 = arith.constant 0 : index
      %c0_37 = arith.constant 0 : index
      %59 = vector.load %arg12[%c0_36, %c0_37] : memref<512x128xf32, #tpu.memory_space<vmem>>, vector<512x128xf32>
      tpu.vector_store %arg12[%c0_36, %c0_37], %58 {strides = array<i32>} : memref<512x128xf32, #tpu.memory_space<vmem>>, vector<512x128xf32>,
    } else {
    }
    %c0 = arith.constant 0 : index
    %c0_1 = arith.constant 0 : index
    %3 = vector.load %arg11[%c0, %c0_1] : memref<512x128xbf16, #tpu.memory_space<vmem>>, vector<512x128xbf16>
    %c0_2 = arith.constant 0 : index
    %c0_3 = arith.constant 0 : index
    %4 = vector.load %arg5[%c0_2, %c0_3] : memref<128x256xbf16, #tpu.memory_space<vmem>>, vector<128x256xbf16>
    %cst = arith.constant dense<0.000000e+00> : vector<512x256xf32>
    %5 = tpu.matmul %3, %4, %cst {dimension_numbers = #tpu.dot_dimension_numbers<[1], [0], [0], [1], [0, 0, 1, 1], [], []>} : vector<512x128xbf16>, vector<128x256xbf16>, vector<512x256xf32> -> vector<512x256xf32>
    %c0_4 = arith.constant 0 : index
    %c0_5 = arith.constant 0 : index
    %6 = vector.load %arg6[%c0_4, %c0_5] : memref<1x256xf32, #tpu.memory_space<vmem>>, vector<1x256xf32>
    %7 = vector.broadcast %6 : vector<1x256xf32> to vector<512x256xf32>
    %8 = arith.addf %5, %7 : vector<512x256xf32>
    %c0_6 = arith.constant 0 : index
    %c0_7 = arith.constant 0 : index
    %9 = vector.load %arg7[%c0_6, %c0_7] : memref<128x256xbf16, #tpu.memory_space<vmem>>, vector<128x256xbf16>
    %cst_8 = arith.constant dense<0.000000e+00> : vector<512x256xf32>
    %10 = tpu.matmul %3, %9, %cst_8 {dimension_numbers = #tpu.dot_dimension_numbers<[1], [0], [0], [1], [0, 0, 1, 1], [], []>} : vector<512x128xbf16>, vector<128x256xbf16>, vector<512x256xf32> -> vector<512x256xf32>
    %c0_9 = arith.constant 0 : index
    %c0_10 = arith.constant 0 : index
    %11 = vector.load %arg8[%c0_9, %c0_10] : memref<1x256xf32, #tpu.memory_space<vmem>>, vector<1x256xf32>
    %12 = vector.broadcast %11 : vector<1x256xf32> to vector<512x256xf32>
    %13 = arith.addf %10, %12 : vector<512x256xf32>
    %14 = arith.negf %8 : vector<512x256xf32>
    %15 = math.exp %14 : vector<512x256xf32>
    %cst_11 = arith.constant 1.000000e+00 : f32
    %16 = vector.broadcast %cst_11 : f32 to vector<512x256xf32>
    %17 = arith.addf %16, %15 : vector<512x256xf32>
    %18 = arith.divf %16, %17 : vector<512x256xf32>
    %cst_12 = arith.constant 0.000000e+00 : f32
    %19 = vector.broadcast %cst_12 : f32 to vector<512x256xf32>
    %20 = arith.maximumf %13, %19 : vector<512x256xf32>
    %21 = arith.mulf %18, %20 : vector<512x256xf32>
    %c0_13 = arith.constant 0 : index
    %c0_14 = arith.constant 0 : index
    %22 = vector.load %arg12[%c0_13, %c0_14] : memref<512x128xf32, #tpu.memory_space<vmem>>, vector<512x128xf32>
    %23 = arith.truncf %21 : vector<512x256xf32> to vector<512x256xbf16>
    %c0_15 = arith.constant 0 : index
    %c0_16 = arith.constant 0 : index
    %24 = vector.load %arg9[%c0_15, %c0_16] : memref<256x128xbf16, #tpu.memory_space<vmem>>, vector<256x128xbf16>
    %cst_17 = arith.constant dense<0.000000e+00> : vector<512x128xf32>
    %25 = tpu.matmul %23, %24, %cst_17 {dimension_numbers = #tpu.dot_dimension_numbers<[1], [0], [0], [1], [0, 0, 1, 1], [], []>} : vector<512x256xbf16>, vector<256x128xbf16>, vector<512x128xf32> -> vector<512x128xf32>
    %26 = arith.addf %22, %25 : vector<512x128xf32>
    %c0_18 = arith.constant 0 : index
    %c0_19 = arith.constant 0 : index
    %27 = vector.load %arg12[%c0_18, %c0_19] : memref<512x128xf32, #tpu.memory_space<vmem>>, vector<512x128xf32>
    tpu.vector_store %arg12[%c0_18, %c0_19], %26 {strides = array<i32>} : memref<512x128xf32, #tpu.memory_space<vmem>>, vector<512x128xf32>,
    %c0_i32_20 = arith.constant 0 : i32
    %28 = arith.cmpi eq, %arg1, %c0_i32_20 : i32
    %29 = arith.extui %28 : i1 to i32
    %c0_i32_21 = arith.constant 0 : i32
    %30 = arith.cmpi ne, %29, %c0_i32_21 : i32
    scf.if %30 {
      %c0_22 = arith.constant 0 : index
      %c0_23 = arith.constant 0 : index
      %31 = vector.load %arg12[%c0_22, %c0_23] : memref<512x128xf32, #tpu.memory_space<vmem>>, vector<512x128xf32>
      %c0_24 = arith.constant 0 : index
      %c0_25 = arith.constant 0 : index
      %32 = vector.load %arg10[%c0_24, %c0_25] : memref<512x128xf32, #tpu.memory_space<vmem>>, vector<512x128xf32>
      tpu.vector_store %arg10[%c0_24, %c0_25], %31 {strides = array<i32>} : memref<512x128xf32, #tpu.memory_space<vmem>>, vector<512x128xf32>,
    } else {
    }
    return
  }
  func.func @transform_0(%arg0: i32, %arg1: i32) -> (i32, i32) {
    %c0_i32 = arith.constant 0 : i32
    %c0_i32_0 = arith.constant 0 : i32
    return %arg0, %c0_i32 : i32, i32
  }
  func.func @transform_1(%arg0: i32, %arg1: i32) -> (i32, i32) {
    %c0_i32 = arith.constant 0 : i32
    %c0_i32_0 = arith.constant 0 : i32
    %c0_i32_1 = arith.constant 0 : i32
    return %c0_i32, %c0_i32_0 : i32, i32
  }
  func.func @transform_2(%arg0: i32, %arg1: i32) -> (i32, i32) {
    %c0_i32 = arith.constant 0 : i32
    %c0_i32_0 = arith.constant 0 : i32
    %c0_i32_1 = arith.constant 0 : i32
    return %c0_i32, %c0_i32_0 : i32, i32
  }
  func.func @transform_3(%arg0: i32, %arg1: i32) -> (i32, i32) {
    %c0_i32 = arith.constant 0 : i32
    %c0_i32_0 = arith.constant 0 : i32
    return %c0_i32, %arg1 : i32, i32
  }
  func.func @transform_4(%arg0: i32, %arg1: i32) -> (i32, i32) {
    %c0_i32 = arith.constant 0 : i32
    %c0_i32_0 = arith.constant 0 : i32
    return %c0_i32, %arg1 : i32, i32
  }
  func.func @transform_5(%arg0: i32, %arg1: i32) -> (i32, i32) {
    %c0_i32 = arith.constant 0 : i32
    %c0_i32_0 = arith.constant 0 : i32
    return %c0_i32, %arg1 : i32, i32
  }
  func.func @transform_6(%arg0: i32, %arg1: i32) -> (i32, i32) {
    %c0_i32 = arith.constant 0 : i32
    %c0_i32_0 = arith.constant 0 : i32
    return %c0_i32, %arg1 : i32, i32
  }
  func.func @transform_7(%arg0: i32, %arg1: i32) -> (i32, i32) {
    %c0_i32 = arith.constant 0 : i32
    %c0_i32_0 = arith.constant 0 : i32
    return %arg1, %c0_i32 : i32, i32
  }
  func.func @transform_8(%arg0: i32, %arg1: i32) -> (i32, i32) {
    %c0_i32 = arith.constant 0 : i32
    %c0_i32_0 = arith.constant 0 : i32
    return %arg0, %c0_i32 : i32, i32
  }
}

</mosaic_0001>

<llo_original>
// kernel: tpu_custom_call.1
$region0: #{tpu_custom_call.1}
  #allocation0 [shape = 'u32[]', space=smem, size = 0x4, offset = 0x4, fixed_abs, tag = 'smem constant byte address 0x4 - core index']
  #allocation1 [shape = 'u32[144,128]{1,0:T(1,128)}', space=vmem, size = 0x12000, scoped, tag = 'internal scratch']
  #allocation2 [shape = 'bf16[512,128]{1,0:T(16,128)(2,1)}', space=vmem, size = 0x20000, scoped, tag = 'scratch operand']
  #allocation3 [shape = 'f32[512,128]{1,0:T(8,128)}', space=vmem, size = 0x40000, scoped, tag = 'scratch operand']
  %s0 = inlined_call_operand.hbm [shape: f32[512,128], index: 0, kind: input, shape index: {}]
  %s1 = inlined_call_operand.hbm [shape: f32[1,128], index: 1, kind: input, shape index: {}]
  %s2 = inlined_call_operand.hbm [shape: f32[1,128], index: 2, kind: input, shape index: {}]
  %s3 = inlined_call_operand.hbm [shape: bf16[128,256], index: 3, kind: input, shape index: {}]
  %s4 = inlined_call_operand.hbm [shape: f32[1,256], index: 4, kind: input, shape index: {}]
  %s5 = inlined_call_operand.hbm [shape: bf16[128,256], index: 5, kind: input, shape index: {}]
  %s6 = inlined_call_operand.hbm [shape: f32[1,256], index: 6, kind: input, shape index: {}]
  %s7 = inlined_call_operand.hbm [shape: bf16[256,128], index: 7, kind: input, shape index: {}]
  %s8 = inlined_call_operand.hbm [shape: f32[512,128], index: 8, kind: output, shape index: {}]
  %s9 = sld [smem:[#allocation0]]
  $region82: #{tpu_custom_call.1} parent=0
    _
  %s11 = ssub.s32 1, %s9
  %s12 = scalar_select 0, %s11, %s9
  $region1: #{tpu_custom_call.1} parent=0
    #allocation4 [shape = 'u8[262144]{0}', space=vmem, size = 0x40000, scoped, tag = 'input window, operand 0, single buffered']
    #allocation5 [shape = 's32[1]{0}', space=sflag, size = 0x4, scoped, tag = 'scoped memory for tpu_custom_call.1']
    #allocation6 [shape = 's32[1]{0}', space=sflag, size = 0x4, scoped, tag = 'scoped memory for tpu_custom_call.1']
    #allocation7 [shape = 'u8[512]{0}', space=vmem, size = 0x400, scoped, tag = 'input window, operand 1, single buffered']
    #allocation8 [shape = 's32[1]{0}', space=sflag, size = 0x4, scoped, tag = 'scoped memory for tpu_custom_call.1']
    #allocation9 [shape = 'u8[512]{0}', space=vmem, size = 0x400, scoped, tag = 'input window, operand 2, single buffered']
    #allocation10 [shape = 'u8[65536]{0}', space=vmem, size = 0x10000, scoped, tag = 'input window, operand 3, single buffered']
    #allocation11 [shape = 's32[1]{0}', space=sflag, size = 0x4, scoped, tag = 'scoped memory for tpu_custom_call.1']
    #allocation12 [shape = 'u8[1024]{0}', space=vmem, size = 0x400, scoped, tag = 'input window, operand 4, single buffered']
    #allocation13 [shape = 'u8[65536]{0}', space=vmem, size = 0x10000, scoped, tag = 'input window, operand 5, single buffered']
    #allocation14 [shape = 's32[1]{0}', space=sflag, size = 0x4, scoped, tag = 'scoped memory for tpu_custom_call.1']
    #allocation15 [shape = 'u8[1024]{0}', space=vmem, size = 0x400, scoped, tag = 'input window, operand 6, single buffered']
    #allocation16 [shape = 'u8[65536]{0}', space=vmem, size = 0x10000, scoped, tag = 'input window, operand 7, single buffered']
    #allocation17 [shape = 's32[1]{0}', space=sflag, size = 0x4, scoped, tag = 'scoped memory for tpu_custom_call.1']
    #allocation18 [shape = 'u8[262144]{0}', space=vmem, size = 0x40000, scoped, tag = 'output window, operand 0, single buffered']
    %13 = vsyncpa [#allocation5], 0
    %14 = vsyncpa [#allocation8], 0
    %15 = vsyncpa [#allocation11], 0
    %16 = vsyncpa [#allocation14], 0
    %17 = vsyncpa [#allocation17], 0
    %18 = vsyncpa [#allocation6], 0
    // Predicated region
    $region2: #{tpu_custom_call.1} parent=1 // pred_check
      _
    $region3: #{tpu_custom_call.1} parent=1 // pred_check_branch
      %20 = sbr.rel (0) target = $region5
    $region4: #{tpu_custom_call.1} parent=1 // pred_region
      %s22 = ssub.s32 8192, 8192
      %23 = vsyncadd [#allocation5], %s22
      %s24 = sshll.u32 [#allocation4], 4
      %s25 = int_to_ptr.vmem [resolvable:$true] %s24
      %30 = dma.hbm_to_vmem [thread:$0]  %s0, 8192, %s25, [#allocation5], 128, 128, 8
    $region5: #{tpu_custom_call.1} parent=1 // pred_fallthru
      _
    // Predicated region
    $region6: #{tpu_custom_call.1} parent=1 // pred_check
      _
    $region7: #{tpu_custom_call.1} parent=1 // pred_check_branch
      %32 = sbr.rel (0) target = $region9
    $region8: #{tpu_custom_call.1} parent=1 // pred_region
      %s34 = ssub.s32 16, 16
      %35 = vsyncadd [#allocation8], %s34
      %s37 = sshll.u32 [#allocation7], 4
      %s38 = int_to_ptr.vmem [resolvable:$true] %s37
      %40 = dma.hbm_to_vmem [thread:$0]  %s1, 16, %s38, [#allocation8]
    $region9: #{tpu_custom_call.1} parent=1 // pred_fallthru
      _
    // Predicated region
    $region10: #{tpu_custom_call.1} parent=1 // pred_check
      _
    $region11: #{tpu_custom_call.1} parent=1 // pred_check_branch
      %42 = sbr.rel (0) target = $region13
    $region12: #{tpu_custom_call.1} parent=1 // pred_region
      %s44 = ssub.s32 16, 16
      %45 = vsyncadd [#allocation8], %s44
      %s47 = sshll.u32 [#allocation9], 4
      %s48 = int_to_ptr.vmem [resolvable:$true] %s47
      %50 = dma.hbm_to_vmem [thread:$0]  %s2, 16, %s48, [#allocation8]
    $region13: #{tpu_custom_call.1} parent=1 // pred_fallthru
      _
    // Predicated region
    $region14: #{tpu_custom_call.1} parent=1 // pred_check
      _
    $region15: #{tpu_custom_call.1} parent=1 // pred_check_branch
      %52 = sbr.rel (0) target = $region17
    $region16: #{tpu_custom_call.1} parent=1 // pred_region
      %s54 = ssub.s32 2048, 2048
      %55 = vsyncadd [#allocation11], %s54
      %s56 = sshll.u32 [#allocation10], 4
      %s57 = int_to_ptr.vmem [resolvable:$true] %s56
      %62 = dma.hbm_to_vmem [thread:$0]  %s3, 2048, %s57, [#allocation11], 128, 128, 8
    $region17: #{tpu_custom_call.1} parent=1 // pred_fallthru
      _
    // Predicated region
    $region18: #{tpu_custom_call.1} parent=1 // pred_check
      _
    $region19: #{tpu_custom_call.1} parent=1 // pred_check_branch
      %64 = sbr.rel (0) target = $region21
    $region20: #{tpu_custom_call.1} parent=1 // pred_region
      %s66 = ssub.s32 32, 32
      %67 = vsyncadd [#allocation11], %s66
      %s69 = sshll.u32 [#allocation12], 4
      %s70 = int_to_ptr.vmem [resolvable:$true] %s69
      %72 = dma.hbm_to_vmem [thread:$0]  %s4, 32, %s70, [#allocation11]
    $region21: #{tpu_custom_call.1} parent=1 // pred_fallthru
      _
    // Predicated region
    $region22: #{tpu_custom_call.1} parent=1 // pred_check
      _
    $region23: #{tpu_custom_call.1} parent=1 // pred_check_branch
      %74 = sbr.rel (0) target = $region25
    $region24: #{tpu_custom_call.1} parent=1 // pred_region
      %s76 = ssub.s32 2048, 2048
      %77 = vsyncadd [#allocation14], %s76
      %s78 = sshll.u32 [#allocation13], 4
      %s79 = int_to_ptr.vmem [resolvable:$true] %s78
      %84 = dma.hbm_to_vmem [thread:$0]  %s5, 2048, %s79, [#allocation14], 128, 128, 8
    $region25: #{tpu_custom_call.1} parent=1 // pred_fallthru
      _
    // Predicated region
    $region26: #{tpu_custom_call.1} parent=1 // pred_check
      _
    $region27: #{tpu_custom_call.1} parent=1 // pred_check_branch
      %86 = sbr.rel (0) target = $region29
    $region28: #{tpu_custom_call.1} parent=1 // pred_region
      %s88 = ssub.s32 32, 32
      %89 = vsyncadd [#allocation14], %s88
      %s91 = sshll.u32 [#allocation15], 4
      %s92 = int_to_ptr.vmem [resolvable:$true] %s91
      %94 = dma.hbm_to_vmem [thread:$0]  %s6, 32, %s92, [#allocation14]
    $region29: #{tpu_custom_call.1} parent=1 // pred_fallthru
      _
    // Predicated region
    $region30: #{tpu_custom_call.1} parent=1 // pred_check
      _
    $region31: #{tpu_custom_call.1} parent=1 // pred_check_branch
      %96 = sbr.rel (0) target = $region33
    $region32: #{tpu_custom_call.1} parent=1 // pred_region
      %s98 = ssub.s32 2048, 2048
      %99 = vsyncadd [#allocation17], %s98
      %s100 = sshll.u32 [#allocation16], 4
      %s101 = int_to_ptr.vmem [resolvable:$true] %s100
      %106 = dma.hbm_to_vmem [thread:$0]  %s7, 2048, %s101, [#allocation17], 64, 64, 4
    $region33: #{tpu_custom_call.1} parent=1 // pred_fallthru
      _
    // Predicated region
    $region34: #{tpu_custom_call.1} parent=1 // pred_check
      _
    $region35: #{tpu_custom_call.1} parent=1 // pred_check_branch
      %108 = sbr.rel (0) target = $region37
    $region36: #{tpu_custom_call.1} parent=1 // pred_region
      %109 = dma.done [#allocation5], 8192
    $region37: #{tpu_custom_call.1} parent=1 // pred_fallthru
      _
    // Predicated region
    $region38: #{tpu_custom_call.1} parent=1 // pred_check
      _
    $region39: #{tpu_custom_call.1} parent=1 // pred_check_branch
      %111 = sbr.rel (0) target = $region41
    $region40: #{tpu_custom_call.1} parent=1 // pred_region
      %112 = dma.done [#allocation8], 16
    $region41: #{tpu_custom_call.1} parent=1 // pred_fallthru
      _
    // Predicated region
    $region42: #{tpu_custom_call.1} parent=1 // pred_check
      _
    $region43: #{tpu_custom_call.1} parent=1 // pred_check_branch
      %114 = sbr.rel (0) target = $region45
    $region44: #{tpu_custom_call.1} parent=1 // pred_region
      %115 = dma.done [#allocation8], 16
    $region45: #{tpu_custom_call.1} parent=1 // pred_fallthru
      _
    // Predicated region
    $region46: #{tpu_custom_call.1} parent=1 // pred_check
      _
    $region47: #{tpu_custom_call.1} parent=1 // pred_check_branch
      %117 = sbr.rel (0) target = $region49
    $region48: #{tpu_custom_call.1} parent=1 // pred_region
      %118 = dma.done [#allocation11], 2048
    $region49: #{tpu_custom_call.1} parent=1 // pred_fallthru
      _
    // Predicated region
    $region50: #{tpu_custom_call.1} parent=1 // pred_check
      _
    $region51: #{tpu_custom_call.1} parent=1 // pred_check_branch
      %120 = sbr.rel (0) target = $region53
    $region52: #{tpu_custom_call.1} parent=1 // pred_region
      %121 = dma.done [#allocation11], 32
    $region53: #{tpu_custom_call.1} parent=1 // pred_fallthru
      _
    // Predicated region
    $region54: #{tpu_custom_call.1} parent=1 // pred_check
      _
    $region55: #{tpu_custom_call.1} parent=1 // pred_check_branch
      %123 = sbr.rel (0) target = $region57
    $region56: #{tpu_custom_call.1} parent=1 // pred_region
      %124 = dma.done [#allocation14], 2048
    $region57: #{tpu_custom_call.1} parent=1 // pred_fallthru
      _
    // Predicated region
    $region58: #{tpu_custom_call.1} parent=1 // pred_check
      _
    $region59: #{tpu_custom_call.1} parent=1 // pred_check_branch
      %126 = sbr.rel (0) target = $region61
    $region60: #{tpu_custom_call.1} parent=1 // pred_region
      %127 = dma.done [#allocation14], 32
    $region61: #{tpu_custom_call.1} parent=1 // pred_fallthru
      _
    // Predicated region
    $region62: #{tpu_custom_call.1} parent=1 // pred_check
      _
    $region63: #{tpu_custom_call.1} parent=1 // pred_check_branch
      %129 = sbr.rel (0) target = $region65
    $region64: #{tpu_custom_call.1} parent=1 // pred_region
      %130 = dma.done [#allocation17], 2048
    $region65: #{tpu_custom_call.1} parent=1 // pred_fallthru
      _
    %p132 = scmp.eq.s32.totalorder 0, 0
    // Predicated region
    $region66: #{tpu_custom_call.1} parent=1 // pred_check
      %p133 = pneg %p132
    $region67: #{tpu_custom_call.1} parent=1 // pred_check_branch
      %135 = sbr.rel (%p133) target = $region69
    $region68: #{tpu_custom_call.1} parent=1 // pred_region
      %v136 = vld [vmem:[#allocation4] sm:$0xff]
      %v137 = vld [vmem:[#allocation4 + $0x8] sm:$0xff]
      %v138 = vld [vmem:[#allocation4 + $0x10] sm:$0xff]
      %v139 = vld [vmem:[#allocation4 + $0x18] sm:$0xff]
      %v140 = vld [vmem:[#allocation4 + $0x20] sm:$0xff]
      %v141 = vld [vmem:[#allocation4 + $0x28] sm:$0xff]
      %v142 = vld [vmem:[#allocation4 + $0x30] sm:$0xff]
      %v143 = vld [vmem:[#allocation4 + $0x38] sm:$0xff]
      %v144 = vld [vmem:[#allocation4 + $0x40] sm:$0xff]
      %v145 = vld [vmem:[#allocation4 + $0x48] sm:$0xff]
      %v146 = vld [vmem:[#allocation4 + $0x50] sm:$0xff]
      %v147 = vld [vmem:[#allocation4 + $0x58] sm:$0xff]
      %v148 = vld [vmem:[#allocation4 + $0x60] sm:$0xff]
      %v149 = vld [vmem:[#allocation4 + $0x68] sm:$0xff]
      %v150 = vld [vmem:[#allocation4 + $0x70] sm:$0xff]
      %v151 = vld [vmem:[#allocation4 + $0x78] sm:$0xff]
      %v152 = vld [vmem:[#allocation4 + $0x80] sm:$0xff]
      %v153 = vld [vmem:[#allocation4 + $0x88] sm:$0xff]
      %v154 = vld [vmem:[#allocation4 + $0x90] sm:$0xff]
      %v155 = vld [vmem:[#allocation4 + $0x98] sm:$0xff]
      %v156 = vld [vmem:[#allocation4 + $0xa0] sm:$0xff]
      %v157 = vld [vmem:[#allocation4 + $0xa8] sm:$0xff]
      %v158 = vld [vmem:[#allocation4 + $0xb0] sm:$0xff]
      %v159 = vld [vmem:[#allocation4 + $0xb8] sm:$0xff]
      %v160 = vld [vmem:[#allocation4 + $0xc0] sm:$0xff]
      %v161 = vld [vmem:[#allocation4 + $0xc8] sm:$0xff]
      %v162 = vld [vmem:[#allocation4 + $0xd0] sm:$0xff]
      %v163 = vld [vmem:[#allocation4 + $0xd8] sm:$0xff]
      %v164 = vld [vmem:[#allocation4 + $0xe0] sm:$0xff]
      %v165 = vld [vmem:[#allocation4 + $0xe8] sm:$0xff]
      %v166 = vld [vmem:[#allocation4 + $0xf0] sm:$0xff]
      %v167 = vld [vmem:[#allocation4 + $0xf8] sm:$0xff]
      %v168 = vld [vmem:[#allocation4 + $0x100] sm:$0xff]
      %v169 = vld [vmem:[#allocation4 + $0x108] sm:$0xff]
      %v170 = vld [vmem:[#allocation4 + $0x110] sm:$0xff]
      %v171 = vld [vmem:[#allocation4 + $0x118] sm:$0xff]
      %v172 = vld [vmem:[#allocation4 + $0x120] sm:$0xff]
      %v173 = vld [vmem:[#allocation4 + $0x128] sm:$0xff]
      %v174 = vld [vmem:[#allocation4 + $0x130] sm:$0xff]
      %v175 = vld [vmem:[#allocation4 + $0x138] sm:$0xff]
      %v176 = vld [vmem:[#allocation4 + $0x140] sm:$0xff]
      %v177 = vld [vmem:[#allocation4 + $0x148] sm:$0xff]
      %v178 = vld [vmem:[#allocation4 + $0x150] sm:$0xff]
      %v179 = vld [vmem:[#allocation4 + $0x158] sm:$0xff]
      %v180 = vld [vmem:[#allocation4 + $0x160] sm:$0xff]
      %v181 = vld [vmem:[#allocation4 + $0x168] sm:$0xff]
      %v182 = vld [vmem:[#allocation4 + $0x170] sm:$0xff]
      %v183 = vld [vmem:[#allocation4 + $0x178] sm:$0xff]
      %v184 = vld [vmem:[#allocation4 + $0x180] sm:$0xff]
      %v185 = vld [vmem:[#allocation4 + $0x188] sm:$0xff]
      %v186 = vld [vmem:[#allocation4 + $0x190] sm:$0xff]
      %v187 = vld [vmem:[#allocation4 + $0x198] sm:$0xff]
      %v188 = vld [vmem:[#allocation4 + $0x1a0] sm:$0xff]
      %v189 = vld [vmem:[#allocation4 + $0x1a8] sm:$0xff]
      %v190 = vld [vmem:[#allocation4 + $0x1b0] sm:$0xff]
      %v191 = vld [vmem:[#allocation4 + $0x1b8] sm:$0xff]
      %v192 = vld [vmem:[#allocation4 + $0x1c0] sm:$0xff]
      %v193 = vld [vmem:[#allocation4 + $0x1c8] sm:$0xff]
      %v194 = vld [vmem:[#allocation4 + $0x1d0] sm:$0xff]
      %v195 = vld [vmem:[#allocation4 + $0x1d8] sm:$0xff]
      %v196 = vld [vmem:[#allocation4 + $0x1e0] sm:$0xff]
      %v197 = vld [vmem:[#allocation4 + $0x1e8] sm:$0xff]
      %v198 = vld [vmem:[#allocation4 + $0x1f0] sm:$0xff]
      %v199 = vld [vmem:[#allocation4 + $0x1f8] sm:$0xff]
      %200 = vadd.xlane.f32.xlu0 %v136
      %v201 = vpop.xlane.xlu0 %200
      %202 = vadd.xlane.f32.xlu0 %v137
      %v203 = vpop.xlane.xlu0 %202
      %204 = vadd.xlane.f32.xlu0 %v138
      %v205 = vpop.xlane.xlu0 %204
      %206 = vadd.xlane.f32.xlu0 %v139
      %v207 = vpop.xlane.xlu0 %206
      %208 = vadd.xlane.f32.xlu0 %v140
      %v209 = vpop.xlane.xlu0 %208
      %210 = vadd.xlane.f32.xlu0 %v141
      %v211 = vpop.xlane.xlu0 %210
      %212 = vadd.xlane.f32.xlu0 %v142
      %v213 = vpop.xlane.xlu0 %212
      %214 = vadd.xlane.f32.xlu0 %v143
      %v215 = vpop.xlane.xlu0 %214
      %216 = vadd.xlane.f32.xlu0 %v144
      %v217 = vpop.xlane.xlu0 %216
      %218 = vadd.xlane.f32.xlu0 %v145
      %v219 = vpop.xlane.xlu0 %218
      %220 = vadd.xlane.f32.xlu0 %v146
      %v221 = vpop.xlane.xlu0 %220
      %222 = vadd.xlane.f32.xlu0 %v147
      %v223 = vpop.xlane.xlu0 %222
      %224 = vadd.xlane.f32.xlu0 %v148
      %v225 = vpop.xlane.xlu0 %224
      %226 = vadd.xlane.f32.xlu0 %v149
      %v227 = vpop.xlane.xlu0 %226
      %228 = vadd.xlane.f32.xlu0 %v150
      %v229 = vpop.xlane.xlu0 %228
      %230 = vadd.xlane.f32.xlu0 %v151
      %v231 = vpop.xlane.xlu0 %230
      %232 = vadd.xlane.f32.xlu0 %v152
      %v233 = vpop.xlane.xlu0 %232
      %234 = vadd.xlane.f32.xlu0 %v153
      %v235 = vpop.xlane.xlu0 %234
      %236 = vadd.xlane.f32.xlu0 %v154
      %v237 = vpop.xlane.xlu0 %236
      %238 = vadd.xlane.f32.xlu0 %v155
      %v239 = vpop.xlane.xlu0 %238
      %240 = vadd.xlane.f32.xlu0 %v156
      %v241 = vpop.xlane.xlu0 %240
      %242 = vadd.xlane.f32.xlu0 %v157
      %v243 = vpop.xlane.xlu0 %242
      %244 = vadd.xlane.f32.xlu0 %v158
      %v245 = vpop.xlane.xlu0 %244
      %246 = vadd.xlane.f32.xlu0 %v159
      %v247 = vpop.xlane.xlu0 %246
      %248 = vadd.xlane.f32.xlu0 %v160
      %v249 = vpop.xlane.xlu0 %248
      %250 = vadd.xlane.f32.xlu0 %v161
      %v251 = vpop.xlane.xlu0 %250
      %252 = vadd.xlane.f32.xlu0 %v162
      %v253 = vpop.xlane.xlu0 %252
      %254 = vadd.xlane.f32.xlu0 %v163
      %v255 = vpop.xlane.xlu0 %254
      %256 = vadd.xlane.f32.xlu0 %v164
      %v257 = vpop.xlane.xlu0 %256
      %258 = vadd.xlane.f32.xlu0 %v165
      %v259 = vpop.xlane.xlu0 %258
      %260 = vadd.xlane.f32.xlu0 %v166
      %v261 = vpop.xlane.xlu0 %260
      %262 = vadd.xlane.f32.xlu0 %v167
      %v263 = vpop.xlane.xlu0 %262
      %264 = vadd.xlane.f32.xlu0 %v168
      %v265 = vpop.xlane.xlu0 %264
      %266 = vadd.xlane.f32.xlu0 %v169
      %v267 = vpop.xlane.xlu0 %266
      %268 = vadd.xlane.f32.xlu0 %v170
      %v269 = vpop.xlane.xlu0 %268
      %270 = vadd.xlane.f32.xlu0 %v171
      %v271 = vpop.xlane.xlu0 %270
      %272 = vadd.xlane.f32.xlu0 %v172
      %v273 = vpop.xlane.xlu0 %272
      %274 = vadd.xlane.f32.xlu0 %v173
      %v275 = vpop.xlane.xlu0 %274
      %276 = vadd.xlane.f32.xlu0 %v174
      %v277 = vpop.xlane.xlu0 %276
      %278 = vadd.xlane.f32.xlu0 %v175
      %v279 = vpop.xlane.xlu0 %278
      %280 = vadd.xlane.f32.xlu0 %v176
      %v281 = vpop.xlane.xlu0 %280
      %282 = vadd.xlane.f32.xlu0 %v177
      %v283 = vpop.xlane.xlu0 %282
      %284 = vadd.xlane.f32.xlu0 %v178
      %v285 = vpop.xlane.xlu0 %284
      %286 = vadd.xlane.f32.xlu0 %v179
      %v287 = vpop.xlane.xlu0 %286
      %288 = vadd.xlane.f32.xlu0 %v180
      %v289 = vpop.xlane.xlu0 %288
      %290 = vadd.xlane.f32.xlu0 %v181
      %v291 = vpop.xlane.xlu0 %290
      %292 = vadd.xlane.f32.xlu0 %v182
      %v293 = vpop.xlane.xlu0 %292
      %294 = vadd.xlane.f32.xlu0 %v183
      %v295 = vpop.xlane.xlu0 %294
      %296 = vadd.xlane.f32.xlu0 %v184
      %v297 = vpop.xlane.xlu0 %296
      %298 = vadd.xlane.f32.xlu0 %v185
      %v299 = vpop.xlane.xlu0 %298
      %300 = vadd.xlane.f32.xlu0 %v186
      %v301 = vpop.xlane.xlu0 %300
      %302 = vadd.xlane.f32.xlu0 %v187
      %v303 = vpop.xlane.xlu0 %302
      %304 = vadd.xlane.f32.xlu0 %v188
      %v305 = vpop.xlane.xlu0 %304
      %306 = vadd.xlane.f32.xlu0 %v189
      %v307 = vpop.xlane.xlu0 %306
      %308 = vadd.xlane.f32.xlu0 %v190
      %v309 = vpop.xlane.xlu0 %308
      %310 = vadd.xlane.f32.xlu0 %v191
      %v311 = vpop.xlane.xlu0 %310
      %312 = vadd.xlane.f32.xlu0 %v192
      %v313 = vpop.xlane.xlu0 %312
      %314 = vadd.xlane.f32.xlu0 %v193
      %v315 = vpop.xlane.xlu0 %314
      %316 = vadd.xlane.f32.xlu0 %v194
      %v317 = vpop.xlane.xlu0 %316
      %318 = vadd.xlane.f32.xlu0 %v195
      %v319 = vpop.xlane.xlu0 %318
      %320 = vadd.xlane.f32.xlu0 %v196
      %v321 = vpop.xlane.xlu0 %320
      %322 = vadd.xlane.f32.xlu0 %v197
      %v323 = vpop.xlane.xlu0 %322
      %324 = vadd.xlane.f32.xlu0 %v198
      %v325 = vpop.xlane.xlu0 %324
      %326 = vadd.xlane.f32.xlu0 %v199
      %v327 = vpop.xlane.xlu0 %326
      %v328 = vmul.f32 %v136, %v136
      %v329 = vmul.f32 %v137, %v137
      %v330 = vmul.f32 %v138, %v138
      %v331 = vmul.f32 %v139, %v139
      %v332 = vmul.f32 %v140, %v140
      %v333 = vmul.f32 %v141, %v141
      %v334 = vmul.f32 %v142, %v142
      %v335 = vmul.f32 %v143, %v143
      %v336 = vmul.f32 %v144, %v144
      %v337 = vmul.f32 %v145, %v145
      %v338 = vmul.f32 %v146, %v146
      %v339 = vmul.f32 %v147, %v147
      %v340 = vmul.f32 %v148, %v148
      %v341 = vmul.f32 %v149, %v149
      %v342 = vmul.f32 %v150, %v150
      %v343 = vmul.f32 %v151, %v151
      %v344 = vmul.f32 %v152, %v152
      %v345 = vmul.f32 %v153, %v153
      %v346 = vmul.f32 %v154, %v154
      %v347 = vmul.f32 %v155, %v155
      %v348 = vmul.f32 %v156, %v156
      %v349 = vmul.f32 %v157, %v157
      %v350 = vmul.f32 %v158, %v158
      %v351 = vmul.f32 %v159, %v159
      %v352 = vmul.f32 %v160, %v160
      %v353 = vmul.f32 %v161, %v161
      %v354 = vmul.f32 %v162, %v162
      %v355 = vmul.f32 %v163, %v163
      %v356 = vmul.f32 %v164, %v164
      %v357 = vmul.f32 %v165, %v165
      %v358 = vmul.f32 %v166, %v166
      %v359 = vmul.f32 %v167, %v167
      %v360 = vmul.f32 %v168, %v168
      %v361 = vmul.f32 %v169, %v169
      %v362 = vmul.f32 %v170, %v170
      %v363 = vmul.f32 %v171, %v171
      %v364 = vmul.f32 %v172, %v172
      %v365 = vmul.f32 %v173, %v173
      %v366 = vmul.f32 %v174, %v174
      %v367 = vmul.f32 %v175, %v175
      %v368 = vmul.f32 %v176, %v176
      %v369 = vmul.f32 %v177, %v177
      %v370 = vmul.f32 %v178, %v178
      %v371 = vmul.f32 %v179, %v179
      %v372 = vmul.f32 %v180, %v180
      %v373 = vmul.f32 %v181, %v181
      %v374 = vmul.f32 %v182, %v182
      %v375 = vmul.f32 %v183, %v183
      %v376 = vmul.f32 %v184, %v184
      %v377 = vmul.f32 %v185, %v185
      %v378 = vmul.f32 %v186, %v186
      %v379 = vmul.f32 %v187, %v187
      %v380 = vmul.f32 %v188, %v188
      %v381 = vmul.f32 %v189, %v189
      %v382 = vmul.f32 %v190, %v190
      %v383 = vmul.f32 %v191, %v191
      %v384 = vmul.f32 %v192, %v192
      %v385 = vmul.f32 %v193, %v193
      %v386 = vmul.f32 %v194, %v194
      %v387 = vmul.f32 %v195, %v195
      %v388 = vmul.f32 %v196, %v196
      %v389 = vmul.f32 %v197, %v197
      %v390 = vmul.f32 %v198, %v198
      %v391 = vmul.f32 %v199, %v199
      %392 = vadd.xlane.f32.xlu0 %v328
      %v393 = vpop.xlane.xlu0 %392
      %394 = vadd.xlane.f32.xlu0 %v329
      %v395 = vpop.xlane.xlu0 %394
      %396 = vadd.xlane.f32.xlu0 %v330
      %v397 = vpop.xlane.xlu0 %396
      %398 = vadd.xlane.f32.xlu0 %v331
      %v399 = vpop.xlane.xlu0 %398
      %400 = vadd.xlane.f32.xlu0 %v332
      %v401 = vpop.xlane.xlu0 %400
      %402 = vadd.xlane.f32.xlu0 %v333
      %v403 = vpop.xlane.xlu0 %402
      %404 = vadd.xlane.f32.xlu0 %v334
      %v405 = vpop.xlane.xlu0 %404
      %406 = vadd.xlane.f32.xlu0 %v335
      %v407 = vpop.xlane.xlu0 %406
      %408 = vadd.xlane.f32.xlu0 %v336
      %v409 = vpop.xlane.xlu0 %408
      %410 = vadd.xlane.f32.xlu0 %v337
      %v411 = vpop.xlane.xlu0 %410
      %412 = vadd.xlane.f32.xlu0 %v338
      %v413 = vpop.xlane.xlu0 %412
      %414 = vadd.xlane.f32.xlu0 %v339
      %v415 = vpop.xlane.xlu0 %414
      %416 = vadd.xlane.f32.xlu0 %v340
      %v417 = vpop.xlane.xlu0 %416
      %418 = vadd.xlane.f32.xlu0 %v341
      %v419 = vpop.xlane.xlu0 %418
      %420 = vadd.xlane.f32.xlu0 %v342
      %v421 = vpop.xlane.xlu0 %420
      %422 = vadd.xlane.f32.xlu0 %v343
      %v423 = vpop.xlane.xlu0 %422
      %424 = vadd.xlane.f32.xlu0 %v344
      %v425 = vpop.xlane.xlu0 %424
      %426 = vadd.xlane.f32.xlu0 %v345
      %v427 = vpop.xlane.xlu0 %426
      %428 = vadd.xlane.f32.xlu0 %v346
      %v429 = vpop.xlane.xlu0 %428
      %430 = vadd.xlane.f32.xlu0 %v347
      %v431 = vpop.xlane.xlu0 %430
      %432 = vadd.xlane.f32.xlu0 %v348
      %v433 = vpop.xlane.xlu0 %432
      %434 = vadd.xlane.f32.xlu0 %v349
      %v435 = vpop.xlane.xlu0 %434
      %436 = vadd.xlane.f32.xlu0 %v350
      %v437 = vpop.xlane.xlu0 %436
      %438 = vadd.xlane.f32.xlu0 %v351
      %v439 = vpop.xlane.xlu0 %438
      %440 = vadd.xlane.f32.xlu0 %v352
      %v441 = vpop.xlane.xlu0 %440
      %442 = vadd.xlane.f32.xlu0 %v353
      %v443 = vpop.xlane.xlu0 %442
      %444 = vadd.xlane.f32.xlu0 %v354
      %v445 = vpop.xlane.xlu0 %444
      %446 = vadd.xlane.f32.xlu0 %v355
      %v447 = vpop.xlane.xlu0 %446
      %448 = vadd.xlane.f32.xlu0 %v356
      %v449 = vpop.xlane.xlu0 %448
      %450 = vadd.xlane.f32.xlu0 %v357
      %v451 = vpop.xlane.xlu0 %450
      %452 = vadd.xlane.f32.xlu0 %v358
      %v453 = vpop.xlane.xlu0 %452
      %454 = vadd.xlane.f32.xlu0 %v359
      %v455 = vpop.xlane.xlu0 %454
      %456 = vadd.xlane.f32.xlu0 %v360
      %v457 = vpop.xlane.xlu0 %456
      %458 = vadd.xlane.f32.xlu0 %v361
      %v459 = vpop.xlane.xlu0 %458
      %460 = vadd.xlane.f32.xlu0 %v362
      %v461 = vpop.xlane.xlu0 %460
      %462 = vadd.xlane.f32.xlu0 %v363
      %v463 = vpop.xlane.xlu0 %462
      %464 = vadd.xlane.f32.xlu0 %v364
      %v465 = vpop.xlane.xlu0 %464
      %466 = vadd.xlane.f32.xlu0 %v365
      %v467 = vpop.xlane.xlu0 %466
      %468 = vadd.xlane.f32.xlu0 %v366
      %v469 = vpop.xlane.xlu0 %468
      %470 = vadd.xlane.f32.xlu0 %v367
      %v471 = vpop.xlane.xlu0 %470
      %472 = vadd.xlane.f32.xlu0 %v368
      %v473 = vpop.xlane.xlu0 %472
      %474 = vadd.xlane.f32.xlu0 %v369
      %v475 = vpop.xlane.xlu0 %474
      %476 = vadd.xlane.f32.xlu0 %v370
      %v477 = vpop.xlane.xlu0 %476
      %478 = vadd.xlane.f32.xlu0 %v371
      %v479 = vpop.xlane.xlu0 %478
      %480 = vadd.xlane.f32.xlu0 %v372
      %v481 = vpop.xlane.xlu0 %480
      %482 = vadd.xlane.f32.xlu0 %v373
      %v483 = vpop.xlane.xlu0 %482
      %484 = vadd.xlane.f32.xlu0 %v374
      %v485 = vpop.xlane.xlu0 %484
      %486 = vadd.xlane.f32.xlu0 %v375
      %v487 = vpop.xlane.xlu0 %486
      %488 = vadd.xlane.f32.xlu0 %v376
      %v489 = vpop.xlane.xlu0 %488
      %490 = vadd.xlane.f32.xlu0 %v377
      %v491 = vpop.xlane.xlu0 %490
      %492 = vadd.xlane.f32.xlu0 %v378
      %v493 = vpop.xlane.xlu0 %492
      %494 = vadd.xlane.f32.xlu0 %v379
      %v495 = vpop.xlane.xlu0 %494
      %496 = vadd.xlane.f32.xlu0 %v380
      %v497 = vpop.xlane.xlu0 %496
      %498 = vadd.xlane.f32.xlu0 %v381
      %v499 = vpop.xlane.xlu0 %498
      %500 = vadd.xlane.f32.xlu0 %v382
      %v501 = vpop.xlane.xlu0 %500
      %502 = vadd.xlane.f32.xlu0 %v383
      %v503 = vpop.xlane.xlu0 %502
      %504 = vadd.xlane.f32.xlu0 %v384
      %v505 = vpop.xlane.xlu0 %504
      %506 = vadd.xlane.f32.xlu0 %v385
      %v507 = vpop.xlane.xlu0 %506
      %508 = vadd.xlane.f32.xlu0 %v386
      %v509 = vpop.xlane.xlu0 %508
      %510 = vadd.xlane.f32.xlu0 %v387
      %v511 = vpop.xlane.xlu0 %510
      %512 = vadd.xlane.f32.xlu0 %v388
      %v513 = vpop.xlane.xlu0 %512
      %514 = vadd.xlane.f32.xlu0 %v389
      %v515 = vpop.xlane.xlu0 %514
      %516 = vadd.xlane.f32.xlu0 %v390
      %v517 = vpop.xlane.xlu0 %516
      %518 = vadd.xlane.f32.xlu0 %v391
      %v519 = vpop.xlane.xlu0 %518
      %v520 = vmul.f32 %v201, 0.0078125
      %v521 = vmul.f32 %v203, 0.0078125
      %v522 = vmul.f32 %v205, 0.0078125
      %v523 = vmul.f32 %v207, 0.0078125
      %v524 = vmul.f32 %v209, 0.0078125
      %v525 = vmul.f32 %v211, 0.0078125
      %v526 = vmul.f32 %v213, 0.0078125
      %v527 = vmul.f32 %v215, 0.0078125
      %v528 = vmul.f32 %v217, 0.0078125
      %v529 = vmul.f32 %v219, 0.0078125
      %v530 = vmul.f32 %v221, 0.0078125
      %v531 = vmul.f32 %v223, 0.0078125
      %v532 = vmul.f32 %v225, 0.0078125
      %v533 = vmul.f32 %v227, 0.0078125
      %v534 = vmul.f32 %v229, 0.0078125
      %v535 = vmul.f32 %v231, 0.0078125
      %v536 = vmul.f32 %v233, 0.0078125
      %v537 = vmul.f32 %v235, 0.0078125
      %v538 = vmul.f32 %v237, 0.0078125
      %v539 = vmul.f32 %v239, 0.0078125
      %v540 = vmul.f32 %v241, 0.0078125
      %v541 = vmul.f32 %v243, 0.0078125
      %v542 = vmul.f32 %v245, 0.0078125
      %v543 = vmul.f32 %v247, 0.0078125
      %v544 = vmul.f32 %v249, 0.0078125
      %v545 = vmul.f32 %v251, 0.0078125
      %v546 = vmul.f32 %v253, 0.0078125
      %v547 = vmul.f32 %v255, 0.0078125
      %v548 = vmul.f32 %v257, 0.0078125
      %v549 = vmul.f32 %v259, 0.0078125
      %v550 = vmul.f32 %v261, 0.0078125
      %v551 = vmul.f32 %v263, 0.0078125
      %v552 = vmul.f32 %v265, 0.0078125
      %v553 = vmul.f32 %v267, 0.0078125
      %v554 = vmul.f32 %v269, 0.0078125
      %v555 = vmul.f32 %v271, 0.0078125
      %v556 = vmul.f32 %v273, 0.0078125
      %v557 = vmul.f32 %v275, 0.0078125
      %v558 = vmul.f32 %v277, 0.0078125
      %v559 = vmul.f32 %v279, 0.0078125
      %v560 = vmul.f32 %v281, 0.0078125
      %v561 = vmul.f32 %v283, 0.0078125
      %v562 = vmul.f32 %v285, 0.0078125
      %v563 = vmul.f32 %v287, 0.0078125
      %v564 = vmul.f32 %v289, 0.0078125
      %v565 = vmul.f32 %v291, 0.0078125
      %v566 = vmul.f32 %v293, 0.0078125
      %v567 = vmul.f32 %v295, 0.0078125
      %v568 = vmul.f32 %v297, 0.0078125
      %v569 = vmul.f32 %v299, 0.0078125
      %v570 = vmul.f32 %v301, 0.0078125
      %v571 = vmul.f32 %v303, 0.0078125
      %v572 = vmul.f32 %v305, 0.0078125
      %v573 = vmul.f32 %v307, 0.0078125
      %v574 = vmul.f32 %v309, 0.0078125
      %v575 = vmul.f32 %v311, 0.0078125
      %v576 = vmul.f32 %v313, 0.0078125
      %v577 = vmul.f32 %v315, 0.0078125
      %v578 = vmul.f32 %v317, 0.0078125
      %v579 = vmul.f32 %v319, 0.0078125
      %v580 = vmul.f32 %v321, 0.0078125
      %v581 = vmul.f32 %v323, 0.0078125
      %v582 = vmul.f32 %v325, 0.0078125
      %v583 = vmul.f32 %v327, 0.0078125
      %v584 = vmul.f32 %v393, 0.0078125
      %v585 = vmul.f32 %v395, 0.0078125
      %v586 = vmul.f32 %v397, 0.0078125
      %v587 = vmul.f32 %v399, 0.0078125
      %v588 = vmul.f32 %v401, 0.0078125
      %v589 = vmul.f32 %v403, 0.0078125
      %v590 = vmul.f32 %v405, 0.0078125
      %v591 = vmul.f32 %v407, 0.0078125
      %v592 = vmul.f32 %v409, 0.0078125
      %v593 = vmul.f32 %v411, 0.0078125
      %v594 = vmul.f32 %v413, 0.0078125
      %v595 = vmul.f32 %v415, 0.0078125
      %v596 = vmul.f32 %v417, 0.0078125
      %v597 = vmul.f32 %v419, 0.0078125
      %v598 = vmul.f32 %v421, 0.0078125
      %v599 = vmul.f32 %v423, 0.0078125
      %v600 = vmul.f32 %v425, 0.0078125
      %v601 = vmul.f32 %v427, 0.0078125
      %v602 = vmul.f32 %v429, 0.0078125
      %v603 = vmul.f32 %v431, 0.0078125
      %v604 = vmul.f32 %v433, 0.0078125
      %v605 = vmul.f32 %v435, 0.0078125
      %v606 = vmul.f32 %v437, 0.0078125
      %v607 = vmul.f32 %v439, 0.0078125
      %v608 = vmul.f32 %v441, 0.0078125
      %v609 = vmul.f32 %v443, 0.0078125
      %v610 = vmul.f32 %v445, 0.0078125
      %v611 = vmul.f32 %v447, 0.0078125
      %v612 = vmul.f32 %v449, 0.0078125
      %v613 = vmul.f32 %v451, 0.0078125
      %v614 = vmul.f32 %v453, 0.0078125
      %v615 = vmul.f32 %v455, 0.0078125
      %v616 = vmul.f32 %v457, 0.0078125
      %v617 = vmul.f32 %v459, 0.0078125
      %v618 = vmul.f32 %v461, 0.0078125
      %v619 = vmul.f32 %v463, 0.0078125
      %v620 = vmul.f32 %v465, 0.0078125
      %v621 = vmul.f32 %v467, 0.0078125
      %v622 = vmul.f32 %v469, 0.0078125
      %v623 = vmul.f32 %v471, 0.0078125
      %v624 = vmul.f32 %v473, 0.0078125
      %v625 = vmul.f32 %v475, 0.0078125
      %v626 = vmul.f32 %v477, 0.0078125
      %v627 = vmul.f32 %v479, 0.0078125
      %v628 = vmul.f32 %v481, 0.0078125
      %v629 = vmul.f32 %v483, 0.0078125
      %v630 = vmul.f32 %v485, 0.0078125
      %v631 = vmul.f32 %v487, 0.0078125
      %v632 = vmul.f32 %v489, 0.0078125
      %v633 = vmul.f32 %v491, 0.0078125
      %v634 = vmul.f32 %v493, 0.0078125
      %v635 = vmul.f32 %v495, 0.0078125
      %v636 = vmul.f32 %v497, 0.0078125
      %v637 = vmul.f32 %v499, 0.0078125
      %v638 = vmul.f32 %v501, 0.0078125
      %v639 = vmul.f32 %v503, 0.0078125
      %v640 = vmul.f32 %v505, 0.0078125
      %v641 = vmul.f32 %v507, 0.0078125
      %v642 = vmul.f32 %v509, 0.0078125
      %v643 = vmul.f32 %v511, 0.0078125
      %v644 = vmul.f32 %v513, 0.0078125
      %v645 = vmul.f32 %v515, 0.0078125
      %v646 = vmul.f32 %v517, 0.0078125
      %v647 = vmul.f32 %v519, 0.0078125
      %v648 = vmul.f32 %v520, %v520
      %v649 = vmul.f32 %v521, %v521
      %v650 = vmul.f32 %v522, %v522
      %v651 = vmul.f32 %v523, %v523
      %v652 = vmul.f32 %v524, %v524
      %v653 = vmul.f32 %v525, %v525
      %v654 = vmul.f32 %v526, %v526
      %v655 = vmul.f32 %v527, %v527
      %v656 = vmul.f32 %v528, %v528
      %v657 = vmul.f32 %v529, %v529
      %v658 = vmul.f32 %v530, %v530
      %v659 = vmul.f32 %v531, %v531
      %v660 = vmul.f32 %v532, %v532
      %v661 = vmul.f32 %v533, %v533
      %v662 = vmul.f32 %v534, %v534
      %v663 = vmul.f32 %v535, %v535
      %v664 = vmul.f32 %v536, %v536
      %v665 = vmul.f32 %v537, %v537
      %v666 = vmul.f32 %v538, %v538
      %v667 = vmul.f32 %v539, %v539
      %v668 = vmul.f32 %v540, %v540
      %v669 = vmul.f32 %v541, %v541
      %v670 = vmul.f32 %v542, %v542
      %v671 = vmul.f32 %v543, %v543
      %v672 = vmul.f32 %v544, %v544
      %v673 = vmul.f32 %v545, %v545
      %v674 = vmul.f32 %v546, %v546
      %v675 = vmul.f32 %v547, %v547
      %v676 = vmul.f32 %v548, %v548
      %v677 = vmul.f32 %v549, %v549
      %v678 = vmul.f32 %v550, %v550
      %v679 = vmul.f32 %v551, %v551
      %v680 = vmul.f32 %v552, %v552
      %v681 = vmul.f32 %v553, %v553
      %v682 = vmul.f32 %v554, %v554
      %v683 = vmul.f32 %v555, %v555
      %v684 = vmul.f32 %v556, %v556
      %v685 = vmul.f32 %v557, %v557
      %v686 = vmul.f32 %v558, %v558
      %v687 = vmul.f32 %v559, %v559
      %v688 = vmul.f32 %v560, %v560
      %v689 = vmul.f32 %v561, %v561
      %v690 = vmul.f32 %v562, %v562
      %v691 = vmul.f32 %v563, %v563
      %v692 = vmul.f32 %v564, %v564
      %v693 = vmul.f32 %v565, %v565
      %v694 = vmul.f32 %v566, %v566
      %v695 = vmul.f32 %v567, %v567
      %v696 = vmul.f32 %v568, %v568
      %v697 = vmul.f32 %v569, %v569
      %v698 = vmul.f32 %v570, %v570
      %v699 = vmul.f32 %v571, %v571
      %v700 = vmul.f32 %v572, %v572
      %v701 = vmul.f32 %v573, %v573
      %v702 = vmul.f32 %v574, %v574
      %v703 = vmul.f32 %v575, %v575
      %v704 = vmul.f32 %v576, %v576
      %v705 = vmul.f32 %v577, %v577
      %v706 = vmul.f32 %v578, %v578
      %v707 = vmul.f32 %v579, %v579
      %v708 = vmul.f32 %v580, %v580
      %v709 = vmul.f32 %v581, %v581
      %v710 = vmul.f32 %v582, %v582
      %v711 = vmul.f32 %v583, %v583
      %v712 = vsub.f32 %v584, %v648
      %v713 = vsub.f32 %v585, %v649
      %v714 = vsub.f32 %v586, %v650
      %v715 = vsub.f32 %v587, %v651
      %v716 = vsub.f32 %v588, %v652
      %v717 = vsub.f32 %v589, %v653
      %v718 = vsub.f32 %v590, %v654
      %v719 = vsub.f32 %v591, %v655
      %v720 = vsub.f32 %v592, %v656
      %v721 = vsub.f32 %v593, %v657
      %v722 = vsub.f32 %v594, %v658
      %v723 = vsub.f32 %v595, %v659
      %v724 = vsub.f32 %v596, %v660
      %v725 = vsub.f32 %v597, %v661
      %v726 = vsub.f32 %v598, %v662
      %v727 = vsub.f32 %v599, %v663
      %v728 = vsub.f32 %v600, %v664
      %v729 = vsub.f32 %v601, %v665
      %v730 = vsub.f32 %v602, %v666
      %v731 = vsub.f32 %v603, %v667
      %v732 = vsub.f32 %v604, %v668
      %v733 = vsub.f32 %v605, %v669
      %v734 = vsub.f32 %v606, %v670
      %v735 = vsub.f32 %v607, %v671
      %v736 = vsub.f32 %v608, %v672
      %v737 = vsub.f32 %v609, %v673
      %v738 = vsub.f32 %v610, %v674
      %v739 = vsub.f32 %v611, %v675
      %v740 = vsub.f32 %v612, %v676
      %v741 = vsub.f32 %v613, %v677
      %v742 = vsub.f32 %v614, %v678
      %v743 = vsub.f32 %v615, %v679
      %v744 = vsub.f32 %v616, %v680
      %v745 = vsub.f32 %v617, %v681
      %v746 = vsub.f32 %v618, %v682
      %v747 = vsub.f32 %v619, %v683
      %v748 = vsub.f32 %v620, %v684
      %v749 = vsub.f32 %v621, %v685
      %v750 = vsub.f32 %v622, %v686
      %v751 = vsub.f32 %v623, %v687
      %v752 = vsub.f32 %v624, %v688
      %v753 = vsub.f32 %v625, %v689
      %v754 = vsub.f32 %v626, %v690
      %v755 = vsub.f32 %v627, %v691
      %v756 = vsub.f32 %v628, %v692
      %v757 = vsub.f32 %v629, %v693
      %v758 = vsub.f32 %v630, %v694
      %v759 = vsub.f32 %v631, %v695
      %v760 = vsub.f32 %v632, %v696
      %v761 = vsub.f32 %v633, %v697
      %v762 = vsub.f32 %v634, %v698
      %v763 = vsub.f32 %v635, %v699
      %v764 = vsub.f32 %v636, %v700
      %v765 = vsub.f32 %v637, %v701
      %v766 = vsub.f32 %v638, %v702
      %v767 = vsub.f32 %v639, %v703
      %v768 = vsub.f32 %v640, %v704
      %v769 = vsub.f32 %v641, %v705
      %v770 = vsub.f32 %v642, %v706
      %v771 = vsub.f32 %v643, %v707
      %v772 = vsub.f32 %v644, %v708
      %v773 = vsub.f32 %v645, %v709
      %v774 = vsub.f32 %v646, %v710
      %v775 = vsub.f32 %v647, %v711
      %v776 = vsub.f32 %v136, %v520
      %v777 = vsub.f32 %v137, %v521
      %v778 = vsub.f32 %v138, %v522
      %v779 = vsub.f32 %v139, %v523
      %v780 = vsub.f32 %v140, %v524
      %v781 = vsub.f32 %v141, %v525
      %v782 = vsub.f32 %v142, %v526
      %v783 = vsub.f32 %v143, %v527
      %v784 = vsub.f32 %v144, %v528
      %v785 = vsub.f32 %v145, %v529
      %v786 = vsub.f32 %v146, %v530
      %v787 = vsub.f32 %v147, %v531
      %v788 = vsub.f32 %v148, %v532
      %v789 = vsub.f32 %v149, %v533
      %v790 = vsub.f32 %v150, %v534
      %v791 = vsub.f32 %v151, %v535
      %v792 = vsub.f32 %v152, %v536
      %v793 = vsub.f32 %v153, %v537
      %v794 = vsub.f32 %v154, %v538
      %v795 = vsub.f32 %v155, %v539
      %v796 = vsub.f32 %v156, %v540
      %v797 = vsub.f32 %v157, %v541
      %v798 = vsub.f32 %v158, %v542
      %v799 = vsub.f32 %v159, %v543
      %v800 = vsub.f32 %v160, %v544
      %v801 = vsub.f32 %v161, %v545
      %v802 = vsub.f32 %v162, %v546
      %v803 = vsub.f32 %v163, %v547
      %v804 = vsub.f32 %v164, %v548
      %v805 = vsub.f32 %v165, %v549
      %v806 = vsub.f32 %v166, %v550
      %v807 = vsub.f32 %v167, %v551
      %v808 = vsub.f32 %v168, %v552
      %v809 = vsub.f32 %v169, %v553
      %v810 = vsub.f32 %v170, %v554
      %v811 = vsub.f32 %v171, %v555
      %v812 = vsub.f32 %v172, %v556
      %v813 = vsub.f32 %v173, %v557
      %v814 = vsub.f32 %v174, %v558
      %v815 = vsub.f32 %v175, %v559
      %v816 = vsub.f32 %v176, %v560
      %v817 = vsub.f32 %v177, %v561
      %v818 = vsub.f32 %v178, %v562
      %v819 = vsub.f32 %v179, %v563
      %v820 = vsub.f32 %v180, %v564
      %v821 = vsub.f32 %v181, %v565
      %v822 = vsub.f32 %v182, %v566
      %v823 = vsub.f32 %v183, %v567
      %v824 = vsub.f32 %v184, %v568
      %v825 = vsub.f32 %v185, %v569
      %v826 = vsub.f32 %v186, %v570
      %v827 = vsub.f32 %v187, %v571
      %v828 = vsub.f32 %v188, %v572
      %v829 = vsub.f32 %v189, %v573
      %v830 = vsub.f32 %v190, %v574
      %v831 = vsub.f32 %v191, %v575
      %v832 = vsub.f32 %v192, %v576
      %v833 = vsub.f32 %v193, %v577
      %v834 = vsub.f32 %v194, %v578
      %v835 = vsub.f32 %v195, %v579
      %v836 = vsub.f32 %v196, %v580
      %v837 = vsub.f32 %v197, %v581
      %v838 = vsub.f32 %v198, %v582
      %v839 = vsub.f32 %v199, %v583
      %v840 = vadd.f32 %v712, 1e-05
      %v841 = vadd.f32 %v713, 1e-05
      %v842 = vadd.f32 %v714, 1e-05
      %v843 = vadd.f32 %v715, 1e-05
      %v844 = vadd.f32 %v716, 1e-05
      %v845 = vadd.f32 %v717, 1e-05
      %v846 = vadd.f32 %v718, 1e-05
      %v847 = vadd.f32 %v719, 1e-05
      %v848 = vadd.f32 %v720, 1e-05
      %v849 = vadd.f32 %v721, 1e-05
      %v850 = vadd.f32 %v722, 1e-05
      %v851 = vadd.f32 %v723, 1e-05
      %v852 = vadd.f32 %v724, 1e-05
      %v853 = vadd.f32 %v725, 1e-05
      %v854 = vadd.f32 %v726, 1e-05
      %v855 = vadd.f32 %v727, 1e-05
      %v856 = vadd.f32 %v728, 1e-05
      %v857 = vadd.f32 %v729, 1e-05
      %v858 = vadd.f32 %v730, 1e-05
      %v859 = vadd.f32 %v731, 1e-05
      %v860 = vadd.f32 %v732, 1e-05
      %v861 = vadd.f32 %v733, 1e-05
      %v862 = vadd.f32 %v734, 1e-05
      %v863 = vadd.f32 %v735, 1e-05
      %v864 = vadd.f32 %v736, 1e-05
      %v865 = vadd.f32 %v737, 1e-05
      %v866 = vadd.f32 %v738, 1e-05
      %v867 = vadd.f32 %v739, 1e-05
      %v868 = vadd.f32 %v740, 1e-05
      %v869 = vadd.f32 %v741, 1e-05
      %v870 = vadd.f32 %v742, 1e-05
      %v871 = vadd.f32 %v743, 1e-05
      %v872 = vadd.f32 %v744, 1e-05
      %v873 = vadd.f32 %v745, 1e-05
      %v874 = vadd.f32 %v746, 1e-05
      %v875 = vadd.f32 %v747, 1e-05
      %v876 = vadd.f32 %v748, 1e-05
      %v877 = vadd.f32 %v749, 1e-05
      %v878 = vadd.f32 %v750, 1e-05
      %v879 = vadd.f32 %v751, 1e-05
      %v880 = vadd.f32 %v752, 1e-05
      %v881 = vadd.f32 %v753, 1e-05
      %v882 = vadd.f32 %v754, 1e-05
      %v883 = vadd.f32 %v755, 1e-05
      %v884 = vadd.f32 %v756, 1e-05
      %v885 = vadd.f32 %v757, 1e-05
      %v886 = vadd.f32 %v758, 1e-05
      %v887 = vadd.f32 %v759, 1e-05
      %v888 = vadd.f32 %v760, 1e-05
      %v889 = vadd.f32 %v761, 1e-05
      %v890 = vadd.f32 %v762, 1e-05
      %v891 = vadd.f32 %v763, 1e-05
      %v892 = vadd.f32 %v764, 1e-05
      %v893 = vadd.f32 %v765, 1e-05
      %v894 = vadd.f32 %v766, 1e-05
      %v895 = vadd.f32 %v767, 1e-05
      %v896 = vadd.f32 %v768, 1e-05
      %v897 = vadd.f32 %v769, 1e-05
      %v898 = vadd.f32 %v770, 1e-05
      %v899 = vadd.f32 %v771, 1e-05
      %v900 = vadd.f32 %v772, 1e-05
      %v901 = vadd.f32 %v773, 1e-05
      %v902 = vadd.f32 %v774, 1e-05
      %v903 = vadd.f32 %v775, 1e-05
      %v904 = vrsqrt.pop %v840
      %v905 = vrsqrt.pop %v841
      %v906 = vrsqrt.pop %v842
      %v907 = vrsqrt.pop %v843
      %v908 = vrsqrt.pop %v844
      %v909 = vrsqrt.pop %v845
      %v910 = vrsqrt.pop %v846
      %v911 = vrsqrt.pop %v847
      %v912 = vrsqrt.pop %v848
      %v913 = vrsqrt.pop %v849
      %v914 = vrsqrt.pop %v850
      %v915 = vrsqrt.pop %v851
      %v916 = vrsqrt.pop %v852
      %v917 = vrsqrt.pop %v853
      %v918 = vrsqrt.pop %v854
      %v919 = vrsqrt.pop %v855
      %v920 = vrsqrt.pop %v856
      %v921 = vrsqrt.pop %v857
      %v922 = vrsqrt.pop %v858
      %v923 = vrsqrt.pop %v859
      %v924 = vrsqrt.pop %v860
      %v925 = vrsqrt.pop %v861
      %v926 = vrsqrt.pop %v862
      %v927 = vrsqrt.pop %v863
      %v928 = vrsqrt.pop %v864
      %v929 = vrsqrt.pop %v865
      %v930 = vrsqrt.pop %v866
      %v931 = vrsqrt.pop %v867
      %v932 = vrsqrt.pop %v868
      %v933 = vrsqrt.pop %v869
      %v934 = vrsqrt.pop %v870
      %v935 = vrsqrt.pop %v871
      %v936 = vrsqrt.pop %v872
      %v937 = vrsqrt.pop %v873
      %v938 = vrsqrt.pop %v874
      %v939 = vrsqrt.pop %v875
      %v940 = vrsqrt.pop %v876
      %v941 = vrsqrt.pop %v877
      %v942 = vrsqrt.pop %v878
      %v943 = vrsqrt.pop %v879
      %v944 = vrsqrt.pop %v880
      %v945 = vrsqrt.pop %v881
      %v946 = vrsqrt.pop %v882
      %v947 = vrsqrt.pop %v883
      %v948 = vrsqrt.pop %v884
      %v949 = vrsqrt.pop %v885
      %v950 = vrsqrt.pop %v886
      %v951 = vrsqrt.pop %v887
      %v952 = vrsqrt.pop %v888
      %v953 = vrsqrt.pop %v889
      %v954 = vrsqrt.pop %v890
      %v955 = vrsqrt.pop %v891
      %v956 = vrsqrt.pop %v892
      %v957 = vrsqrt.pop %v893
      %v958 = vrsqrt.pop %v894
      %v959 = vrsqrt.pop %v895
      %v960 = vrsqrt.pop %v896
      %v961 = vrsqrt.pop %v897
      %v962 = vrsqrt.pop %v898
      %v963 = vrsqrt.pop %v899
      %v964 = vrsqrt.pop %v900
      %v965 = vrsqrt.pop %v901
      %v966 = vrsqrt.pop %v902
      %v967 = vrsqrt.pop %v903
      %v968 = vmul.f32 %v776, %v904
      %v969 = vmul.f32 %v777, %v905
      %v970 = vmul.f32 %v778, %v906
      %v971 = vmul.f32 %v779, %v907
      %v972 = vmul.f32 %v780, %v908
      %v973 = vmul.f32 %v781, %v909
      %v974 = vmul.f32 %v782, %v910
      %v975 = vmul.f32 %v783, %v911
      %v976 = vmul.f32 %v784, %v912
      %v977 = vmul.f32 %v785, %v913
      %v978 = vmul.f32 %v786, %v914
      %v979 = vmul.f32 %v787, %v915
      %v980 = vmul.f32 %v788, %v916
      %v981 = vmul.f32 %v789, %v917
      %v982 = vmul.f32 %v790, %v918
      %v983 = vmul.f32 %v791, %v919
      %v984 = vmul.f32 %v792, %v920
      %v985 = vmul.f32 %v793, %v921
      %v986 = vmul.f32 %v794, %v922
      %v987 = vmul.f32 %v795, %v923
      %v988 = vmul.f32 %v796, %v924
      %v989 = vmul.f32 %v797, %v925
      %v990 = vmul.f32 %v798, %v926
      %v991 = vmul.f32 %v799, %v927
      %v992 = vmul.f32 %v800, %v928
      %v993 = vmul.f32 %v801, %v929
      %v994 = vmul.f32 %v802, %v930
      %v995 = vmul.f32 %v803, %v931
      %v996 = vmul.f32 %v804, %v932
      %v997 = vmul.f32 %v805, %v933
      %v998 = vmul.f32 %v806, %v934
      %v999 = vmul.f32 %v807, %v935
      %v1000 = vmul.f32 %v808, %v936
      %v1001 = vmul.f32 %v809, %v937
      %v1002 = vmul.f32 %v810, %v938
      %v1003 = vmul.f32 %v811, %v939
      %v1004 = vmul.f32 %v812, %v940
      %v1005 = vmul.f32 %v813, %v941
      %v1006 = vmul.f32 %v814, %v942
      %v1007 = vmul.f32 %v815, %v943
      %v1008 = vmul.f32 %v816, %v944
      %v1009 = vmul.f32 %v817, %v945
      %v1010 = vmul.f32 %v818, %v946
      %v1011 = vmul.f32 %v819, %v947
      %v1012 = vmul.f32 %v820, %v948
      %v1013 = vmul.f32 %v821, %v949
      %v1014 = vmul.f32 %v822, %v950
      %v1015 = vmul.f32 %v823, %v951
      %v1016 = vmul.f32 %v824, %v952
      %v1017 = vmul.f32 %v825, %v953
      %v1018 = vmul.f32 %v826, %v954
      %v1019 = vmul.f32 %v827, %v955
      %v1020 = vmul.f32 %v828, %v956
      %v1021 = vmul.f32 %v829, %v957
      %v1022 = vmul.f32 %v830, %v958
      %v1023 = vmul.f32 %v831, %v959
      %v1024 = vmul.f32 %v832, %v960
      %v1025 = vmul.f32 %v833, %v961
      %v1026 = vmul.f32 %v834, %v962
      %v1027 = vmul.f32 %v835, %v963
      %v1028 = vmul.f32 %v836, %v964
      %v1029 = vmul.f32 %v837, %v965
      %v1030 = vmul.f32 %v838, %v966
      %v1031 = vmul.f32 %v839, %v967
      %v1032 = vld [vmem:[#allocation7] sm:$0x1]
      %v1034 = vlaneseq
      %v1035 = vshrl.u32 %v1034, 7
      %v1036 = vsub.s32 0, %v1035
      %v1037 = vrot.slane %v1032, %v1036
      %v1039 = vmul.f32 %v968, %v1037
      %v1040 = vmul.f32 %v969, %v1037
      %v1041 = vmul.f32 %v970, %v1037
      %v1042 = vmul.f32 %v971, %v1037
      %v1043 = vmul.f32 %v972, %v1037
      %v1044 = vmul.f32 %v973, %v1037
      %v1045 = vmul.f32 %v974, %v1037
      %v1046 = vmul.f32 %v975, %v1037
      %v1047 = vmul.f32 %v976, %v1037
      %v1048 = vmul.f32 %v977, %v1037
      %v1049 = vmul.f32 %v978, %v1037
      %v1050 = vmul.f32 %v979, %v1037
      %v1051 = vmul.f32 %v980, %v1037
      %v1052 = vmul.f32 %v981, %v1037
      %v1053 = vmul.f32 %v982, %v1037
      %v1054 = vmul.f32 %v983, %v1037
      %v1055 = vmul.f32 %v984, %v1037
      %v1056 = vmul.f32 %v985, %v1037
      %v1057 = vmul.f32 %v986, %v1037
      %v1058 = vmul.f32 %v987, %v1037
      %v1059 = vmul.f32 %v988, %v1037
      %v1060 = vmul.f32 %v989, %v1037
      %v1061 = vmul.f32 %v990, %v1037
      %v1062 = vmul.f32 %v991, %v1037
      %v1063 = vmul.f32 %v992, %v1037
      %v1064 = vmul.f32 %v993, %v1037
      %v1065 = vmul.f32 %v994, %v1037
      %v1066 = vmul.f32 %v995, %v1037
      %v1067 = vmul.f32 %v996, %v1037
      %v1068 = vmul.f32 %v997, %v1037
      %v1069 = vmul.f32 %v998, %v1037
      %v1070 = vmul.f32 %v999, %v1037
      %v1071 = vmul.f32 %v1000, %v1037
      %v1072 = vmul.f32 %v1001, %v1037
      %v1073 = vmul.f32 %v1002, %v1037
      %v1074 = vmul.f32 %v1003, %v1037
      %v1075 = vmul.f32 %v1004, %v1037
      %v1076 = vmul.f32 %v1005, %v1037
      %v1077 = vmul.f32 %v1006, %v1037
      %v1078 = vmul.f32 %v1007, %v1037
      %v1079 = vmul.f32 %v1008, %v1037
      %v1080 = vmul.f32 %v1009, %v1037
      %v1081 = vmul.f32 %v1010, %v1037
      %v1082 = vmul.f32 %v1011, %v1037
      %v1083 = vmul.f32 %v1012, %v1037
      %v1084 = vmul.f32 %v1013, %v1037
      %v1085 = vmul.f32 %v1014, %v1037
      %v1086 = vmul.f32 %v1015, %v1037
      %v1087 = vmul.f32 %v1016, %v1037
      %v1088 = vmul.f32 %v1017, %v1037
      %v1089 = vmul.f32 %v1018, %v1037
      %v1090 = vmul.f32 %v1019, %v1037
      %v1091 = vmul.f32 %v1020, %v1037
      %v1092 = vmul.f32 %v1021, %v1037
      %v1093 = vmul.f32 %v1022, %v1037
      %v1094 = vmul.f32 %v1023, %v1037
      %v1095 = vmul.f32 %v1024, %v1037
      %v1096 = vmul.f32 %v1025, %v1037
      %v1097 = vmul.f32 %v1026, %v1037
      %v1098 = vmul.f32 %v1027, %v1037
      %v1099 = vmul.f32 %v1028, %v1037
      %v1100 = vmul.f32 %v1029, %v1037
      %v1101 = vmul.f32 %v1030, %v1037
      %v1102 = vmul.f32 %v1031, %v1037
      %v1103 = vld [vmem:[#allocation9] sm:$0x1]
      %v1105 = vlaneseq
      %v1106 = vshrl.u32 %v1105, 7
      %v1107 = vsub.s32 0, %v1106
      %v1108 = vrot.slane %v1103, %v1107
      %v1110 = vadd.f32 %v1039, %v1108
      %v1111 = vadd.f32 %v1040, %v1108
      %v1112 = vadd.f32 %v1041, %v1108
      %v1113 = vadd.f32 %v1042, %v1108
      %v1114 = vadd.f32 %v1043, %v1108
      %v1115 = vadd.f32 %v1044, %v1108
      %v1116 = vadd.f32 %v1045, %v1108
      %v1117 = vadd.f32 %v1046, %v1108
      %v1118 = vadd.f32 %v1047, %v1108
      %v1119 = vadd.f32 %v1048, %v1108
      %v1120 = vadd.f32 %v1049, %v1108
      %v1121 = vadd.f32 %v1050, %v1108
      %v1122 = vadd.f32 %v1051, %v1108
      %v1123 = vadd.f32 %v1052, %v1108
      %v1124 = vadd.f32 %v1053, %v1108
      %v1125 = vadd.f32 %v1054, %v1108
      %v1126 = vadd.f32 %v1055, %v1108
      %v1127 = vadd.f32 %v1056, %v1108
      %v1128 = vadd.f32 %v1057, %v1108
      %v1129 = vadd.f32 %v1058, %v1108
      %v1130 = vadd.f32 %v1059, %v1108
      %v1131 = vadd.f32 %v1060, %v1108
      %v1132 = vadd.f32 %v1061, %v1108
      %v1133 = vadd.f32 %v1062, %v1108
      %v1134 = vadd.f32 %v1063, %v1108
      %v1135 = vadd.f32 %v1064, %v1108
      %v1136 = vadd.f32 %v1065, %v1108
      %v1137 = vadd.f32 %v1066, %v1108
      %v1138 = vadd.f32 %v1067, %v1108
      %v1139 = vadd.f32 %v1068, %v1108
      %v1140 = vadd.f32 %v1069, %v1108
      %v1141 = vadd.f32 %v1070, %v1108
      %v1142 = vadd.f32 %v1071, %v1108
      %v1143 = vadd.f32 %v1072, %v1108
      %v1144 = vadd.f32 %v1073, %v1108
      %v1145 = vadd.f32 %v1074, %v1108
      %v1146 = vadd.f32 %v1075, %v1108
      %v1147 = vadd.f32 %v1076, %v1108
      %v1148 = vadd.f32 %v1077, %v1108
      %v1149 = vadd.f32 %v1078, %v1108
      %v1150 = vadd.f32 %v1079, %v1108
      %v1151 = vadd.f32 %v1080, %v1108
      %v1152 = vadd.f32 %v1081, %v1108
      %v1153 = vadd.f32 %v1082, %v1108
      %v1154 = vadd.f32 %v1083, %v1108
      %v1155 = vadd.f32 %v1084, %v1108
      %v1156 = vadd.f32 %v1085, %v1108
      %v1157 = vadd.f32 %v1086, %v1108
      %v1158 = vadd.f32 %v1087, %v1108
      %v1159 = vadd.f32 %v1088, %v1108
      %v1160 = vadd.f32 %v1089, %v1108
      %v1161 = vadd.f32 %v1090, %v1108
      %v1162 = vadd.f32 %v1091, %v1108
      %v1163 = vadd.f32 %v1092, %v1108
      %v1164 = vadd.f32 %v1093, %v1108
      %v1165 = vadd.f32 %v1094, %v1108
      %v1166 = vadd.f32 %v1095, %v1108
      %v1167 = vadd.f32 %v1096, %v1108
      %v1168 = vadd.f32 %v1097, %v1108
      %v1169 = vadd.f32 %v1098, %v1108
      %v1170 = vadd.f32 %v1099, %v1108
      %v1171 = vadd.f32 %v1100, %v1108
      %v1172 = vadd.f32 %v1101, %v1108
      %v1173 = vadd.f32 %v1102, %v1108
      %v1174 = vpack.c.bf16 %v1111, %v1110
      %v1175 = vpack.c.bf16 %v1113, %v1112
      %v1176 = vpack.c.bf16 %v1115, %v1114
      %v1177 = vpack.c.bf16 %v1117, %v1116
      %v1178 = vpack.c.bf16 %v1119, %v1118
      %v1179 = vpack.c.bf16 %v1121, %v1120
      %v1180 = vpack.c.bf16 %v1123, %v1122
      %v1181 = vpack.c.bf16 %v1125, %v1124
      %v1182 = vpack.c.bf16 %v1127, %v1126
      %v1183 = vpack.c.bf16 %v1129, %v1128
      %v1184 = vpack.c.bf16 %v1131, %v1130
      %v1185 = vpack.c.bf16 %v1133, %v1132
      %v1186 = vpack.c.bf16 %v1135, %v1134
      %v1187 = vpack.c.bf16 %v1137, %v1136
      %v1188 = vpack.c.bf16 %v1139, %v1138
      %v1189 = vpack.c.bf16 %v1141, %v1140
      %v1190 = vpack.c.bf16 %v1143, %v1142
      %v1191 = vpack.c.bf16 %v1145, %v1144
      %v1192 = vpack.c.bf16 %v1147, %v1146
      %v1193 = vpack.c.bf16 %v1149, %v1148
      %v1194 = vpack.c.bf16 %v1151, %v1150
      %v1195 = vpack.c.bf16 %v1153, %v1152
      %v1196 = vpack.c.bf16 %v1155, %v1154
      %v1197 = vpack.c.bf16 %v1157, %v1156
      %v1198 = vpack.c.bf16 %v1159, %v1158
      %v1199 = vpack.c.bf16 %v1161, %v1160
      %v1200 = vpack.c.bf16 %v1163, %v1162
      %v1201 = vpack.c.bf16 %v1165, %v1164
      %v1202 = vpack.c.bf16 %v1167, %v1166
      %v1203 = vpack.c.bf16 %v1169, %v1168
      %v1204 = vpack.c.bf16 %v1171, %v1170
      %v1205 = vpack.c.bf16 %v1173, %v1172
      %1206 = vst [vmem:[#allocation2] sm:$0xff] %v1174
      %1207 = vst [vmem:[#allocation2 + $0x8] sm:$0xff] %v1175
      %1208 = vst [vmem:[#allocation2 + $0x10] sm:$0xff] %v1176
      %1209 = vst [vmem:[#allocation2 + $0x18] sm:$0xff] %v1177
      %1210 = vst [vmem:[#allocation2 + $0x20] sm:$0xff] %v1178
      %1211 = vst [vmem:[#allocation2 + $0x28] sm:$0xff] %v1179
      %1212 = vst [vmem:[#allocation2 + $0x30] sm:$0xff] %v1180
      %1213 = vst [vmem:[#allocation2 + $0x38] sm:$0xff] %v1181
      %1214 = vst [vmem:[#allocation2 + $0x40] sm:$0xff] %v1182
      %1215 = vst [vmem:[#allocation2 + $0x48] sm:$0xff] %v1183
      %1216 = vst [vmem:[#allocation2 + $0x50] sm:$0xff] %v1184
      %1217 = vst [vmem:[#allocation2 + $0x58] sm:$0xff] %v1185
      %1218 = vst [vmem:[#allocation2 + $0x60] sm:$0xff] %v1186
      %1219 = vst [vmem:[#allocation2 + $0x68] sm:$0xff] %v1187
      %1220 = vst [vmem:[#allocation2 + $0x70] sm:$0xff] %v1188
      %1221 = vst [vmem:[#allocation2 + $0x78] sm:$0xff] %v1189
      %1222 = vst [vmem:[#allocation2 + $0x80] sm:$0xff] %v1190
      %1223 = vst [vmem:[#allocation2 + $0x88] sm:$0xff] %v1191
      %1224 = vst [vmem:[#allocation2 + $0x90] sm:$0xff] %v1192
      %1225 = vst [vmem:[#allocation2 + $0x98] sm:$0xff] %v1193
      %1226 = vst [vmem:[#allocation2 + $0xa0] sm:$0xff] %v1194
      %1227 = vst [vmem:[#allocation2 + $0xa8] sm:$0xff] %v1195
      %1228 = vst [vmem:[#allocation2 + $0xb0] sm:$0xff] %v1196
      %1229 = vst [vmem:[#allocation2 + $0xb8] sm:$0xff] %v1197
      %1230 = vst [vmem:[#allocation2 + $0xc0] sm:$0xff] %v1198
      %1231 = vst [vmem:[#allocation2 + $0xc8] sm:$0xff] %v1199
      %1232 = vst [vmem:[#allocation2 + $0xd0] sm:$0xff] %v1200
      %1233 = vst [vmem:[#allocation2 + $0xd8] sm:$0xff] %v1201
      %1234 = vst [vmem:[#allocation2 + $0xe0] sm:$0xff] %v1202
      %1235 = vst [vmem:[#allocation2 + $0xe8] sm:$0xff] %v1203
      %1236 = vst [vmem:[#allocation2 + $0xf0] sm:$0xff] %v1204
      %1237 = vst [vmem:[#allocation2 + $0xf8] sm:$0xff] %v1205
      %1238 = vst [vmem:[#allocation3] sm:$0xff] 0.0
      %1239 = vst [vmem:[#allocation3 + $0x8] sm:$0xff] 0.0
      %1240 = vst [vmem:[#allocation3 + $0x10] sm:$0xff] 0.0
      %1241 = vst [vmem:[#allocation3 + $0x18] sm:$0xff] 0.0
      %1242 = vst [vmem:[#allocation3 + $0x20] sm:$0xff] 0.0
      %1243 = vst [vmem:[#allocation3 + $0x28] sm:$0xff] 0.0
      %1244 = vst [vmem:[#allocation3 + $0x30] sm:$0xff] 0.0
      %1245 = vst [vmem:[#allocation3 + $0x38] sm:$0xff] 0.0
      %1246 = vst [vmem:[#allocation3 + $0x40] sm:$0xff] 0.0
      %1247 = vst [vmem:[#allocation3 + $0x48] sm:$0xff] 0.0
      %1248 = vst [vmem:[#allocation3 + $0x50] sm:$0xff] 0.0
      %1249 = vst [vmem:[#allocation3 + $0x58] sm:$0xff] 0.0
      %1250 = vst [vmem:[#allocation3 + $0x60] sm:$0xff] 0.0
      %1251 = vst [vmem:[#allocation3 + $0x68] sm:$0xff] 0.0
      %1252 = vst [vmem:[#allocation3 + $0x70] sm:$0xff] 0.0
      %1253 = vst [vmem:[#allocation3 + $0x78] sm:$0xff] 0.0
      %1254 = vst [vmem:[#allocation3 + $0x80] sm:$0xff] 0.0
      %1255 = vst [vmem:[#allocation3 + $0x88] sm:$0xff] 0.0
      %1256 = vst [vmem:[#allocation3 + $0x90] sm:$0xff] 0.0
      %1257 = vst [vmem:[#allocation3 + $0x98] sm:$0xff] 0.0
      %1258 = vst [vmem:[#allocation3 + $0xa0] sm:$0xff] 0.0
      %1259 = vst [vmem:[#allocation3 + $0xa8] sm:$0xff] 0.0
      %1260 = vst [vmem:[#allocation3 + $0xb0] sm:$0xff] 0.0
      %1261 = vst [vmem:[#allocation3 + $0xb8] sm:$0xff] 0.0
      %1262 = vst [vmem:[#allocation3 + $0xc0] sm:$0xff] 0.0
      %1263 = vst [vmem:[#allocation3 + $0xc8] sm:$0xff] 0.0
      %1264 = vst [vmem:[#allocation3 + $0xd0] sm:$0xff] 0.0
      %1265 = vst [vmem:[#allocation3 + $0xd8] sm:$0xff] 0.0
      %1266 = vst [vmem:[#allocation3 + $0xe0] sm:$0xff] 0.0
      %1267 = vst [vmem:[#allocation3 + $0xe8] sm:$0xff] 0.0
      %1268 = vst [vmem:[#allocation3 + $0xf0] sm:$0xff] 0.0
      %1269 = vst [vmem:[#allocation3 + $0xf8] sm:$0xff] 0.0
      %1270 = vst [vmem:[#allocation3 + $0x100] sm:$0xff] 0.0
      %1271 = vst [vmem:[#allocation3 + $0x108] sm:$0xff] 0.0
      %1272 = vst [vmem:[#allocation3 + $0x110] sm:$0xff] 0.0
      %1273 = vst [vmem:[#allocation3 + $0x118] sm:$0xff] 0.0
      %1274 = vst [vmem:[#allocation3 + $0x120] sm:$0xff] 0.0
      %1275 = vst [vmem:[#allocation3 + $0x128] sm:$0xff] 0.0
      %1276 = vst [vmem:[#allocation3 + $0x130] sm:$0xff] 0.0
      %1277 = vst [vmem:[#allocation3 + $0x138] sm:$0xff] 0.0
      %1278 = vst [vmem:[#allocation3 + $0x140] sm:$0xff] 0.0
      %1279 = vst [vmem:[#allocation3 + $0x148] sm:$0xff] 0.0
      %1280 = vst [vmem:[#allocation3 + $0x150] sm:$0xff] 0.0
      %1281 = vst [vmem:[#allocation3 + $0x158] sm:$0xff] 0.0
      %1282 = vst [vmem:[#allocation3 + $0x160] sm:$0xff] 0.0
      %1283 = vst [vmem:[#allocation3 + $0x168] sm:$0xff] 0.0
      %1284 = vst [vmem:[#allocation3 + $0x170] sm:$0xff] 0.0
      %1285 = vst [vmem:[#allocation3 + $0x178] sm:$0xff] 0.0
      %1286 = vst [vmem:[#allocation3 + $0x180] sm:$0xff] 0.0
      %1287 = vst [vmem:[#allocation3 + $0x188] sm:$0xff] 0.0
      %1288 = vst [vmem:[#allocation3 + $0x190] sm:$0xff] 0.0
      %1289 = vst [vmem:[#allocation3 + $0x198] sm:$0xff] 0.0
      %1290 = vst [vmem:[#allocation3 + $0x1a0] sm:$0xff] 0.0
      %1291 = vst [vmem:[#allocation3 + $0x1a8] sm:$0xff] 0.0
      %1292 = vst [vmem:[#allocation3 + $0x1b0] sm:$0xff] 0.0
      %1293 = vst [vmem:[#allocation3 + $0x1b8] sm:$0xff] 0.0
      %1294 = vst [vmem:[#allocation3 + $0x1c0] sm:$0xff] 0.0
      %1295 = vst [vmem:[#allocation3 + $0x1c8] sm:$0xff] 0.0
      %1296 = vst [vmem:[#allocation3 + $0x1d0] sm:$0xff] 0.0
      %1297 = vst [vmem:[#allocation3 + $0x1d8] sm:$0xff] 0.0
      %1298 = vst [vmem:[#allocation3 + $0x1e0] sm:$0xff] 0.0
      %1299 = vst [vmem:[#allocation3 + $0x1e8] sm:$0xff] 0.0
      %1300 = vst [vmem:[#allocation3 + $0x1f0] sm:$0xff] 0.0
      %1301 = vst [vmem:[#allocation3 + $0x1f8] sm:$0xff] 0.0
    $region69: #{tpu_custom_call.1} parent=1 // pred_fallthru
      _
    %v1302 = vld [vmem:[#allocation2] sm:$0xff]
    %v1303 = vld [vmem:[#allocation2 + $0x8] sm:$0xff]
    %v1304 = vld [vmem:[#allocation2 + $0x10] sm:$0xff]
    %v1305 = vld [vmem:[#allocation2 + $0x18] sm:$0xff]
    %v1306 = vld [vmem:[#allocation2 + $0x20] sm:$0xff]
    %v1307 = vld [vmem:[#allocation2 + $0x28] sm:$0xff]
    %v1308 = vld [vmem:[#allocation2 + $0x30] sm:$0xff]
    %v1309 = vld [vmem:[#allocation2 + $0x38] sm:$0xff]
    %v1310 = vld [vmem:[#allocation2 + $0x40] sm:$0xff]
    %v1311 = vld [vmem:[#allocation2 + $0x48] sm:$0xff]
    %v1312 = vld [vmem:[#allocation2 + $0x50] sm:$0xff]
    %v1313 = vld [vmem:[#allocation2 + $0x58] sm:$0xff]
    %v1314 = vld [vmem:[#allocation2 + $0x60] sm:$0xff]
    %v1315 = vld [vmem:[#allocation2 + $0x68] sm:$0xff]
    %v1316 = vld [vmem:[#allocation2 + $0x70] sm:$0xff]
    %v1317 = vld [vmem:[#allocation2 + $0x78] sm:$0xff]
    %v1318 = vld [vmem:[#allocation2 + $0x80] sm:$0xff]
    %v1319 = vld [vmem:[#allocation2 + $0x88] sm:$0xff]
    %v1320 = vld [vmem:[#allocation2 + $0x90] sm:$0xff]
    %v1321 = vld [vmem:[#allocation2 + $0x98] sm:$0xff]
    %v1322 = vld [vmem:[#allocation2 + $0xa0] sm:$0xff]
    %v1323 = vld [vmem:[#allocation2 + $0xa8] sm:$0xff]
    %v1324 = vld [vmem:[#allocation2 + $0xb0] sm:$0xff]
    %v1325 = vld [vmem:[#allocation2 + $0xb8] sm:$0xff]
    %v1326 = vld [vmem:[#allocation2 + $0xc0] sm:$0xff]
    %v1327 = vld [vmem:[#allocation2 + $0xc8] sm:$0xff]
    %v1328 = vld [vmem:[#allocation2 + $0xd0] sm:$0xff]
    %v1329 = vld [vmem:[#allocation2 + $0xd8] sm:$0xff]
    %v1330 = vld [vmem:[#allocation2 + $0xe0] sm:$0xff]
    %v1331 = vld [vmem:[#allocation2 + $0xe8] sm:$0xff]
    %v1332 = vld [vmem:[#allocation2 + $0xf0] sm:$0xff]
    %v1333 = vld [vmem:[#allocation2 + $0xf8] sm:$0xff]
    %v1334 = vld [vmem:[#allocation10] sm:$0xff]
    %v1335 = vld [vmem:[#allocation10 + $0x8] sm:$0xff]
    %v1336 = vld [vmem:[#allocation10 + $0x10] sm:$0xff]
    %v1337 = vld [vmem:[#allocation10 + $0x18] sm:$0xff]
    %v1338 = vld [vmem:[#allocation10 + $0x20] sm:$0xff]
    %v1339 = vld [vmem:[#allocation10 + $0x28] sm:$0xff]
    %v1340 = vld [vmem:[#allocation10 + $0x30] sm:$0xff]
    %v1341 = vld [vmem:[#allocation10 + $0x38] sm:$0xff]
    %v1342 = vld [vmem:[#allocation10 + $0x40] sm:$0xff]
    %v1343 = vld [vmem:[#allocation10 + $0x48] sm:$0xff]
    %v1344 = vld [vmem:[#allocation10 + $0x50] sm:$0xff]
    %v1345 = vld [vmem:[#allocation10 + $0x58] sm:$0xff]
    %v1346 = vld [vmem:[#allocation10 + $0x60] sm:$0xff]
    %v1347 = vld [vmem:[#allocation10 + $0x68] sm:$0xff]
    %v1348 = vld [vmem:[#allocation10 + $0x70] sm:$0xff]
    %v1349 = vld [vmem:[#allocation10 + $0x78] sm:$0xff]
    %v1350 = vld [vmem:[#allocation12] sm:$0x3]
    %v1352 = vlaneseq
    %v1353 = vshrl.u32 %v1352, 7
    %v1354 = vsub.s32 0, %v1353
    %v1355 = vrot.slane %v1350, %v1354
    %v1356 = vlaneseq
    %v1357 = vshrl.u32 %v1356, 7
    %v1358 = vsub.s32 1, %v1357
    %v1359 = vrot.slane %v1350, %v1358
    %v1378 = vunpack.c.l.b16 %v1334
    %v1379 = vunpack.c.h.b16 %v1334
    %v1380 = vunpack.c.l.b16 %v1335
    %v1381 = vunpack.c.h.b16 %v1335
    %v1382 = vunpack.c.l.b16 %v1336
    %v1383 = vunpack.c.h.b16 %v1336
    %v1384 = vunpack.c.l.b16 %v1337
    %v1385 = vunpack.c.h.b16 %v1337
    %v1386 = vunpack.c.l.b16 %v1338
    %v1387 = vunpack.c.h.b16 %v1338
    %v1388 = vunpack.c.l.b16 %v1339
    %v1389 = vunpack.c.h.b16 %v1339
    %v1390 = vunpack.c.l.b16 %v1340
    %v1391 = vunpack.c.h.b16 %v1340
    %v1392 = vunpack.c.l.b16 %v1341
    %v1393 = vunpack.c.h.b16 %v1341
    %v1394 = vunpack.c.l.b16 %v1342
    %v1395 = vunpack.c.h.b16 %v1342
    %v1396 = vunpack.c.l.b16 %v1343
    %v1397 = vunpack.c.h.b16 %v1343
    %v1398 = vunpack.c.l.b16 %v1344
    %v1399 = vunpack.c.h.b16 %v1344
    %v1400 = vunpack.c.l.b16 %v1345
    %v1401 = vunpack.c.h.b16 %v1345
    %v1402 = vunpack.c.l.b16 %v1346
    %v1403 = vunpack.c.h.b16 %v1346
    %v1404 = vunpack.c.l.b16 %v1347
    %v1405 = vunpack.c.h.b16 %v1347
    %v1406 = vunpack.c.l.b16 %v1348
    %v1407 = vunpack.c.h.b16 %v1348
    %v1408 = vunpack.c.l.b16 %v1349
    %v1409 = vunpack.c.h.b16 %v1349
    %v1410 = vpack.c.b16 %v1380, %v1378
    %v1411 = vpack.c.b16 %v1381, %v1379
    %v1412 = vpack.c.b16 %v1384, %v1382
    %v1413 = vpack.c.b16 %v1385, %v1383
    %v1414 = vpack.c.b16 %v1388, %v1386
    %v1415 = vpack.c.b16 %v1389, %v1387
    %v1416 = vpack.c.b16 %v1392, %v1390
    %v1417 = vpack.c.b16 %v1393, %v1391
    %v1418 = vpack.c.b16 %v1396, %v1394
    %v1419 = vpack.c.b16 %v1397, %v1395
    %v1420 = vpack.c.b16 %v1400, %v1398
    %v1421 = vpack.c.b16 %v1401, %v1399
    %v1422 = vpack.c.b16 %v1404, %v1402
    %v1423 = vpack.c.b16 %v1405, %v1403
    %v1424 = vpack.c.b16 %v1408, %v1406
    %v1425 = vpack.c.b16 %v1409, %v1407
    %1442 = vmatprep.subr.bf16.mxu0 %v1411
    %1443 = vmatpush1.bf16.msra.mxu0 %v1410
    %1444 = vmatprep.subr.bf16.mxu0 %v1413
    %1445 = vmatpush1.bf16.msra.mxu0 %v1412
    %1446 = vmatprep.subr.bf16.mxu0 %v1415
    %1447 = vmatpush1.bf16.msra.mxu0 %v1414
    %1448 = vmatprep.subr.bf16.mxu0 %v1417
    %1449 = vmatpush1.bf16.msra.mxu0 %v1416
    %1450 = vmatprep.subr.bf16.mxu0 %v1419
    %1451 = vmatpush1.bf16.msra.mxu0 %v1418
    %1452 = vmatprep.subr.bf16.mxu0 %v1421
    %1453 = vmatpush1.bf16.msra.mxu0 %v1420
    %1454 = vmatprep.subr.bf16.mxu0 %v1423
    %1455 = vmatpush1.bf16.msra.mxu0 %v1422
    %1456 = vmatprep.subr.bf16.mxu0 %v1425
    %1457 = vmatpush1.bf16.msra.mxu0 %v1424
    %1458 = vmatprep.subr.bf16.mxu0 0
    %1459 = vmatpush1.bf16.msra.mxu0 0
    %1460 = vmatprep.subr.bf16.mxu0 0
    %1461 = vmatpush1.bf16.msra.mxu0 0
    %1462 = vmatprep.subr.bf16.mxu0 0
    %1463 = vmatpush1.bf16.msra.mxu0 0
    %1464 = vmatprep.subr.bf16.mxu0 0
    %1465 = vmatpush1.bf16.msra.mxu0 0
    %1466 = vmatprep.subr.bf16.mxu0 0
    %1467 = vmatpush1.bf16.msra.mxu0 0
    %1468 = vmatprep.subr.bf16.mxu0 0
    %1469 = vmatpush1.bf16.msra.mxu0 0
    %1470 = vmatprep.subr.bf16.mxu0 0
    %1471 = vmatpush1.bf16.msra.mxu0 0
    %1472 = vmatprep.subr.bf16.mxu0 0
    %1473 = vmatpush1.bf16.msra.mxu0 0
    %1474 = vmatprep.mubr.bf16.mxu0 0
    %1475 = vmatmul.mubr.bf16.gmra.mrb[0].mxu0 %v1302
    %v1476 = vpop.f32.mrb[0].mxu0
    %v1477 = vadd.f32 %v1355, %v1476
    %v1478 = vpop.f32.mrb[0].mxu0
    %v1479 = vadd.f32 %v1359, %v1478
    %v1480 = vpop.f32.mrb[0].mxu0
    %v1481 = vadd.f32 %v1355, %v1480
    %v1482 = vpop.f32.mrb[0].mxu0
    %v1483 = vadd.f32 %v1359, %v1482
    %1484 = vmatprep.mubr.bf16.mxu0 0
    %1485 = vmatmul.mubr.bf16.gmra.mrb[0].mxu0 %v1303
    %v1486 = vpop.f32.mrb[0].mxu0
    %v1487 = vadd.f32 %v1355, %v1486
    %v1488 = vpop.f32.mrb[0].mxu0
    %v1489 = vadd.f32 %v1359, %v1488
    %v1490 = vpop.f32.mrb[0].mxu0
    %v1491 = vadd.f32 %v1355, %v1490
    %v1492 = vpop.f32.mrb[0].mxu0
    %v1493 = vadd.f32 %v1359, %v1492
    %1494 = vmatprep.mubr.bf16.mxu0 0
    %1495 = vmatmul.mubr.bf16.gmra.mrb[0].mxu0 %v1304
    %v1496 = vpop.f32.mrb[0].mxu0
    %v1497 = vadd.f32 %v1355, %v1496
    %v1498 = vpop.f32.mrb[0].mxu0
    %v1499 = vadd.f32 %v1359, %v1498
    %v1500 = vpop.f32.mrb[0].mxu0
    %v1501 = vadd.f32 %v1355, %v1500
    %v1502 = vpop.f32.mrb[0].mxu0
    %v1503 = vadd.f32 %v1359, %v1502
    %1504 = vmatprep.mubr.bf16.mxu0 0
    %1505 = vmatmul.mubr.bf16.gmra.mrb[0].mxu0 %v1305
    %v1506 = vpop.f32.mrb[0].mxu0
    %v1507 = vadd.f32 %v1355, %v1506
    %v1508 = vpop.f32.mrb[0].mxu0
    %v1509 = vadd.f32 %v1359, %v1508
    %v1510 = vpop.f32.mrb[0].mxu0
    %v1511 = vadd.f32 %v1355, %v1510
    %v1512 = vpop.f32.mrb[0].mxu0
    %v1513 = vadd.f32 %v1359, %v1512
    %1514 = vmatprep.mubr.bf16.mxu0 0
    %1515 = vmatmul.mubr.bf16.gmra.mrb[0].mxu0 %v1306
    %v1516 = vpop.f32.mrb[0].mxu0
    %v1517 = vadd.f32 %v1355, %v1516
    %v1518 = vpop.f32.mrb[0].mxu0
    %v1519 = vadd.f32 %v1359, %v1518
    %v1520 = vpop.f32.mrb[0].mxu0
    %v1521 = vadd.f32 %v1355, %v1520
    %v1522 = vpop.f32.mrb[0].mxu0
    %v1523 = vadd.f32 %v1359, %v1522
    %1524 = vmatprep.mubr.bf16.mxu0 0
    %1525 = vmatmul.mubr.bf16.gmra.mrb[0].mxu0 %v1307
    %v1526 = vpop.f32.mrb[0].mxu0
    %v1527 = vadd.f32 %v1355, %v1526
    %v1528 = vpop.f32.mrb[0].mxu0
    %v1529 = vadd.f32 %v1359, %v1528
    %v1530 = vpop.f32.mrb[0].mxu0
    %v1531 = vadd.f32 %v1355, %v1530
    %v1532 = vpop.f32.mrb[0].mxu0
    %v1533 = vadd.f32 %v1359, %v1532
    %1534 = vmatprep.mubr.bf16.mxu0 0
    %1535 = vmatmul.mubr.bf16.gmra.mrb[0].mxu0 %v1308
    %v1536 = vpop.f32.mrb[0].mxu0
    %v1537 = vadd.f32 %v1355, %v1536
    %v1538 = vpop.f32.mrb[0].mxu0
    %v1539 = vadd.f32 %v1359, %v1538
    %v1540 = vpop.f32.mrb[0].mxu0
    %v1541 = vadd.f32 %v1355, %v1540
    %v1542 = vpop.f32.mrb[0].mxu0
    %v1543 = vadd.f32 %v1359, %v1542
    %1544 = vmatprep.mubr.bf16.mxu0 0
    %1545 = vmatmul.mubr.bf16.gmra.mrb[0].mxu0 %v1309
    %v1546 = vpop.f32.mrb[0].mxu0
    %v1547 = vadd.f32 %v1355, %v1546
    %v1548 = vpop.f32.mrb[0].mxu0
    %v1549 = vadd.f32 %v1359, %v1548
    %v1550 = vpop.f32.mrb[0].mxu0
    %v1551 = vadd.f32 %v1355, %v1550
    %v1552 = vpop.f32.mrb[0].mxu0
    %v1553 = vadd.f32 %v1359, %v1552
    %1554 = vmatprep.mubr.bf16.mxu0 0
    %1555 = vmatmul.mubr.bf16.gmra.mrb[0].mxu0 %v1310
    %v1556 = vpop.f32.mrb[0].mxu0
    %v1557 = vadd.f32 %v1355, %v1556
    %v1558 = vpop.f32.mrb[0].mxu0
    %v1559 = vadd.f32 %v1359, %v1558
    %v1560 = vpop.f32.mrb[0].mxu0
    %v1561 = vadd.f32 %v1355, %v1560
    %v1562 = vpop.f32.mrb[0].mxu0
    %v1563 = vadd.f32 %v1359, %v1562
    %1564 = vmatprep.mubr.bf16.mxu0 0
    %1565 = vmatmul.mubr.bf16.gmra.mrb[0].mxu0 %v1311
    %v1566 = vpop.f32.mrb[0].mxu0
    %v1567 = vadd.f32 %v1355, %v1566
    %v1568 = vpop.f32.mrb[0].mxu0
    %v1569 = vadd.f32 %v1359, %v1568
    %v1570 = vpop.f32.mrb[0].mxu0
    %v1571 = vadd.f32 %v1355, %v1570
    %v1572 = vpop.f32.mrb[0].mxu0
    %v1573 = vadd.f32 %v1359, %v1572
    %1574 = vmatprep.mubr.bf16.mxu0 0
    %1575 = vmatmul.mubr.bf16.gmra.mrb[0].mxu0 %v1312
    %v1576 = vpop.f32.mrb[0].mxu0
    %v1577 = vadd.f32 %v1355, %v1576
    %v1578 = vpop.f32.mrb[0].mxu0
    %v1579 = vadd.f32 %v1359, %v1578
    %v1580 = vpop.f32.mrb[0].mxu0
    %v1581 = vadd.f32 %v1355, %v1580
    %v1582 = vpop.f32.mrb[0].mxu0
    %v1583 = vadd.f32 %v1359, %v1582
    %1584 = vmatprep.mubr.bf16.mxu0 0
    %1585 = vmatmul.mubr.bf16.gmra.mrb[0].mxu0 %v1313
    %v1586 = vpop.f32.mrb[0].mxu0
    %v1587 = vadd.f32 %v1355, %v1586
    %v1588 = vpop.f32.mrb[0].mxu0
    %v1589 = vadd.f32 %v1359, %v1588
    %v1590 = vpop.f32.mrb[0].mxu0
    %v1591 = vadd.f32 %v1355, %v1590
    %v1592 = vpop.f32.mrb[0].mxu0
    %v1593 = vadd.f32 %v1359, %v1592
    %1594 = vmatprep.mubr.bf16.mxu0 0
    %1595 = vmatmul.mubr.bf16.gmra.mrb[0].mxu0 %v1314
    %v1596 = vpop.f32.mrb[0].mxu0
    %v1597 = vadd.f32 %v1355, %v1596
    %v1598 = vpop.f32.mrb[0].mxu0
    %v1599 = vadd.f32 %v1359, %v1598
    %v1600 = vpop.f32.mrb[0].mxu0
    %v1601 = vadd.f32 %v1355, %v1600
    %v1602 = vpop.f32.mrb[0].mxu0
    %v1603 = vadd.f32 %v1359, %v1602
    %1604 = vmatprep.mubr.bf16.mxu0 0
    %1605 = vmatmul.mubr.bf16.gmra.mrb[0].mxu0 %v1315
    %v1606 = vpop.f32.mrb[0].mxu0
    %v1607 = vadd.f32 %v1355, %v1606
    %v1608 = vpop.f32.mrb[0].mxu0
    %v1609 = vadd.f32 %v1359, %v1608
    %v1610 = vpop.f32.mrb[0].mxu0
    %v1611 = vadd.f32 %v1355, %v1610
    %v1612 = vpop.f32.mrb[0].mxu0
    %v1613 = vadd.f32 %v1359, %v1612
    %1614 = vmatprep.mubr.bf16.mxu0 0
    %1615 = vmatmul.mubr.bf16.gmra.mrb[0].mxu0 %v1316
    %v1616 = vpop.f32.mrb[0].mxu0
    %v1617 = vadd.f32 %v1355, %v1616
    %v1618 = vpop.f32.mrb[0].mxu0
    %v1619 = vadd.f32 %v1359, %v1618
    %v1620 = vpop.f32.mrb[0].mxu0
    %v1621 = vadd.f32 %v1355, %v1620
    %v1622 = vpop.f32.mrb[0].mxu0
    %v1623 = vadd.f32 %v1359, %v1622
    %1624 = vmatprep.mubr.bf16.mxu0 0
    %1625 = vmatmul.mubr.bf16.gmra.mrb[0].mxu0 %v1317
    %v1626 = vpop.f32.mrb[0].mxu0
    %v1627 = vadd.f32 %v1355, %v1626
    %v1628 = vpop.f32.mrb[0].mxu0
    %v1629 = vadd.f32 %v1359, %v1628
    %v1630 = vpop.f32.mrb[0].mxu0
    %v1631 = vadd.f32 %v1355, %v1630
    %v1632 = vpop.f32.mrb[0].mxu0
    %v1633 = vadd.f32 %v1359, %v1632
    %1634 = vmatprep.mubr.bf16.mxu0 0
    %1635 = vmatmul.mubr.bf16.gmra.mrb[0].mxu0 %v1318
    %v1636 = vpop.f32.mrb[0].mxu0
    %v1637 = vadd.f32 %v1355, %v1636
    %v1638 = vpop.f32.mrb[0].mxu0
    %v1639 = vadd.f32 %v1359, %v1638
    %v1640 = vpop.f32.mrb[0].mxu0
    %v1641 = vadd.f32 %v1355, %v1640
    %v1642 = vpop.f32.mrb[0].mxu0
    %v1643 = vadd.f32 %v1359, %v1642
    %1644 = vmatprep.mubr.bf16.mxu0 0
    %1645 = vmatmul.mubr.bf16.gmra.mrb[0].mxu0 %v1319
    %v1646 = vpop.f32.mrb[0].mxu0
    %v1647 = vadd.f32 %v1355, %v1646
    %v1648 = vpop.f32.mrb[0].mxu0
    %v1649 = vadd.f32 %v1359, %v1648
    %v1650 = vpop.f32.mrb[0].mxu0
    %v1651 = vadd.f32 %v1355, %v1650
    %v1652 = vpop.f32.mrb[0].mxu0
    %v1653 = vadd.f32 %v1359, %v1652
    %1654 = vmatprep.mubr.bf16.mxu0 0
    %1655 = vmatmul.mubr.bf16.gmra.mrb[0].mxu0 %v1320
    %v1656 = vpop.f32.mrb[0].mxu0
    %v1657 = vadd.f32 %v1355, %v1656
    %v1658 = vpop.f32.mrb[0].mxu0
    %v1659 = vadd.f32 %v1359, %v1658
    %v1660 = vpop.f32.mrb[0].mxu0
    %v1661 = vadd.f32 %v1355, %v1660
    %v1662 = vpop.f32.mrb[0].mxu0
    %v1663 = vadd.f32 %v1359, %v1662
    %1664 = vmatprep.mubr.bf16.mxu0 0
    %1665 = vmatmul.mubr.bf16.gmra.mrb[0].mxu0 %v1321
    %v1666 = vpop.f32.mrb[0].mxu0
    %v1667 = vadd.f32 %v1355, %v1666
    %v1668 = vpop.f32.mrb[0].mxu0
    %v1669 = vadd.f32 %v1359, %v1668
    %v1670 = vpop.f32.mrb[0].mxu0
    %v1671 = vadd.f32 %v1355, %v1670
    %v1672 = vpop.f32.mrb[0].mxu0
    %v1673 = vadd.f32 %v1359, %v1672
    %1674 = vmatprep.mubr.bf16.mxu0 0
    %1675 = vmatmul.mubr.bf16.gmra.mrb[0].mxu0 %v1322
    %v1676 = vpop.f32.mrb[0].mxu0
    %v1677 = vadd.f32 %v1355, %v1676
    %v1678 = vpop.f32.mrb[0].mxu0
    %v1679 = vadd.f32 %v1359, %v1678
    %v1680 = vpop.f32.mrb[0].mxu0
    %v1681 = vadd.f32 %v1355, %v1680
    %v1682 = vpop.f32.mrb[0].mxu0
    %v1683 = vadd.f32 %v1359, %v1682
    %1684 = vmatprep.mubr.bf16.mxu0 0
    %1685 = vmatmul.mubr.bf16.gmra.mrb[0].mxu0 %v1323
    %v1686 = vpop.f32.mrb[0].mxu0
    %v1687 = vadd.f32 %v1355, %v1686
    %v1688 = vpop.f32.mrb[0].mxu0
    %v1689 = vadd.f32 %v1359, %v1688
    %v1690 = vpop.f32.mrb[0].mxu0
    %v1691 = vadd.f32 %v1355, %v1690
    %v1692 = vpop.f32.mrb[0].mxu0
    %v1693 = vadd.f32 %v1359, %v1692
    %1694 = vmatprep.mubr.bf16.mxu0 0
    %1695 = vmatmul.mubr.bf16.gmra.mrb[0].mxu0 %v1324
    %v1696 = vpop.f32.mrb[0].mxu0
    %v1697 = vadd.f32 %v1355, %v1696
    %v1698 = vpop.f32.mrb[0].mxu0
    %v1699 = vadd.f32 %v1359, %v1698
    %v1700 = vpop.f32.mrb[0].mxu0
    %v1701 = vadd.f32 %v1355, %v1700
    %v1702 = vpop.f32.mrb[0].mxu0
    %v1703 = vadd.f32 %v1359, %v1702
    %1704 = vmatprep.mubr.bf16.mxu0 0
    %1705 = vmatmul.mubr.bf16.gmra.mrb[0].mxu0 %v1325
    %v1706 = vpop.f32.mrb[0].mxu0
    %v1707 = vadd.f32 %v1355, %v1706
    %v1708 = vpop.f32.mrb[0].mxu0
    %v1709 = vadd.f32 %v1359, %v1708
    %v1710 = vpop.f32.mrb[0].mxu0
    %v1711 = vadd.f32 %v1355, %v1710
    %v1712 = vpop.f32.mrb[0].mxu0
    %v1713 = vadd.f32 %v1359, %v1712
    %1714 = vmatprep.mubr.bf16.mxu0 0
    %1715 = vmatmul.mubr.bf16.gmra.mrb[0].mxu0 %v1326
    %v1716 = vpop.f32.mrb[0].mxu0
    %v1717 = vadd.f32 %v1355, %v1716
    %v1718 = vpop.f32.mrb[0].mxu0
    %v1719 = vadd.f32 %v1359, %v1718
    %v1720 = vpop.f32.mrb[0].mxu0
    %v1721 = vadd.f32 %v1355, %v1720
    %v1722 = vpop.f32.mrb[0].mxu0
    %v1723 = vadd.f32 %v1359, %v1722
    %1724 = vmatprep.mubr.bf16.mxu0 0
    %1725 = vmatmul.mubr.bf16.gmra.mrb[0].mxu0 %v1327
    %v1726 = vpop.f32.mrb[0].mxu0
    %v1727 = vadd.f32 %v1355, %v1726
    %v1728 = vpop.f32.mrb[0].mxu0
    %v1729 = vadd.f32 %v1359, %v1728
    %v1730 = vpop.f32.mrb[0].mxu0
    %v1731 = vadd.f32 %v1355, %v1730
    %v1732 = vpop.f32.mrb[0].mxu0
    %v1733 = vadd.f32 %v1359, %v1732
    %1734 = vmatprep.mubr.bf16.mxu0 0
    %1735 = vmatmul.mubr.bf16.gmra.mrb[0].mxu0 %v1328
    %v1736 = vpop.f32.mrb[0].mxu0
    %v1737 = vadd.f32 %v1355, %v1736
    %v1738 = vpop.f32.mrb[0].mxu0
    %v1739 = vadd.f32 %v1359, %v1738
    %v1740 = vpop.f32.mrb[0].mxu0
    %v1741 = vadd.f32 %v1355, %v1740
    %v1742 = vpop.f32.mrb[0].mxu0
    %v1743 = vadd.f32 %v1359, %v1742
    %1744 = vmatprep.mubr.bf16.mxu0 0
    %1745 = vmatmul.mubr.bf16.gmra.mrb[0].mxu0 %v1329
    %v1746 = vpop.f32.mrb[0].mxu0
    %v1747 = vadd.f32 %v1355, %v1746
    %v1748 = vpop.f32.mrb[0].mxu0
    %v1749 = vadd.f32 %v1359, %v1748
    %v1750 = vpop.f32.mrb[0].mxu0
    %v1751 = vadd.f32 %v1355, %v1750
    %v1752 = vpop.f32.mrb[0].mxu0
    %v1753 = vadd.f32 %v1359, %v1752
    %1754 = vmatprep.mubr.bf16.mxu0 0
    %1755 = vmatmul.mubr.bf16.gmra.mrb[0].mxu0 %v1330
    %v1756 = vpop.f32.mrb[0].mxu0
    %v1757 = vadd.f32 %v1355, %v1756
    %v1758 = vpop.f32.mrb[0].mxu0
    %v1759 = vadd.f32 %v1359, %v1758
    %v1760 = vpop.f32.mrb[0].mxu0
    %v1761 = vadd.f32 %v1355, %v1760
    %v1762 = vpop.f32.mrb[0].mxu0
    %v1763 = vadd.f32 %v1359, %v1762
    %1764 = vmatprep.mubr.bf16.mxu0 0
    %1765 = vmatmul.mubr.bf16.gmra.mrb[0].mxu0 %v1331
    %v1766 = vpop.f32.mrb[0].mxu0
    %v1767 = vadd.f32 %v1355, %v1766
    %v1768 = vpop.f32.mrb[0].mxu0
    %v1769 = vadd.f32 %v1359, %v1768
    %v1770 = vpop.f32.mrb[0].mxu0
    %v1771 = vadd.f32 %v1355, %v1770
    %v1772 = vpop.f32.mrb[0].mxu0
    %v1773 = vadd.f32 %v1359, %v1772
    %1774 = vmatprep.mubr.bf16.mxu0 0
    %1775 = vmatmul.mubr.bf16.gmra.mrb[0].mxu0 %v1332
    %v1776 = vpop.f32.mrb[0].mxu0
    %v1777 = vadd.f32 %v1355, %v1776
    %v1778 = vpop.f32.mrb[0].mxu0
    %v1779 = vadd.f32 %v1359, %v1778
    %v1780 = vpop.f32.mrb[0].mxu0
    %v1781 = vadd.f32 %v1355, %v1780
    %v1782 = vpop.f32.mrb[0].mxu0
    %v1783 = vadd.f32 %v1359, %v1782
    %1784 = vmatprep.mubr.bf16.mxu0 0
    %1785 = vmatmul.mubr.bf16.gmra.mrb[0].mxu0 %v1333
    %v1786 = vpop.f32.mrb[0].mxu0
    %v1787 = vadd.f32 %v1355, %v1786
    %v1788 = vpop.f32.mrb[0].mxu0
    %v1789 = vadd.f32 %v1359, %v1788
    %v1790 = vpop.f32.mrb[0].mxu0
    %v1791 = vadd.f32 %v1355, %v1790
    %v1792 = vpop.f32.mrb[0].mxu0
    %v1793 = vadd.f32 %v1359, %v1792
    %1794 = vdwg.mxu0
    %v1795 = vld [vmem:[#allocation13] sm:$0xff]
    %v1796 = vld [vmem:[#allocation13 + $0x8] sm:$0xff]
    %v1797 = vld [vmem:[#allocation13 + $0x10] sm:$0xff]
    %v1798 = vld [vmem:[#allocation13 + $0x18] sm:$0xff]
    %v1799 = vld [vmem:[#allocation13 + $0x20] sm:$0xff]
    %v1800 = vld [vmem:[#allocation13 + $0x28] sm:$0xff]
    %v1801 = vld [vmem:[#allocation13 + $0x30] sm:$0xff]
    %v1802 = vld [vmem:[#allocation13 + $0x38] sm:$0xff]
    %v1803 = vld [vmem:[#allocation13 + $0x40] sm:$0xff]
    %v1804 = vld [vmem:[#allocation13 + $0x48] sm:$0xff]
    %v1805 = vld [vmem:[#allocation13 + $0x50] sm:$0xff]
    %v1806 = vld [vmem:[#allocation13 + $0x58] sm:$0xff]
    %v1807 = vld [vmem:[#allocation13 + $0x60] sm:$0xff]
    %v1808 = vld [vmem:[#allocation13 + $0x68] sm:$0xff]
    %v1809 = vld [vmem:[#allocation13 + $0x70] sm:$0xff]
    %v1810 = vld [vmem:[#allocation13 + $0x78] sm:$0xff]
    %v1811 = vld [vmem:[#allocation15] sm:$0x3]
    %v1813 = vlaneseq
    %v1814 = vshrl.u32 %v1813, 7
    %v1815 = vsub.s32 0, %v1814
    %v1816 = vrot.slane %v1811, %v1815
    %v1817 = vlaneseq
    %v1818 = vshrl.u32 %v1817, 7
    %v1819 = vsub.s32 1, %v1818
    %v1820 = vrot.slane %v1811, %v1819
    %v1839 = vunpack.c.l.b16 %v1795
    %v1840 = vunpack.c.h.b16 %v1795
    %v1841 = vunpack.c.l.b16 %v1796
    %v1842 = vunpack.c.h.b16 %v1796
    %v1843 = vunpack.c.l.b16 %v1797
    %v1844 = vunpack.c.h.b16 %v1797
    %v1845 = vunpack.c.l.b16 %v1798
    %v1846 = vunpack.c.h.b16 %v1798
    %v1847 = vunpack.c.l.b16 %v1799
    %v1848 = vunpack.c.h.b16 %v1799
    %v1849 = vunpack.c.l.b16 %v1800
    %v1850 = vunpack.c.h.b16 %v1800
    %v1851 = vunpack.c.l.b16 %v1801
    %v1852 = vunpack.c.h.b16 %v1801
    %v1853 = vunpack.c.l.b16 %v1802
    %v1854 = vunpack.c.h.b16 %v1802
    %v1855 = vunpack.c.l.b16 %v1803
    %v1856 = vunpack.c.h.b16 %v1803
    %v1857 = vunpack.c.l.b16 %v1804
    %v1858 = vunpack.c.h.b16 %v1804
    %v1859 = vunpack.c.l.b16 %v1805
    %v1860 = vunpack.c.h.b16 %v1805
    %v1861 = vunpack.c.l.b16 %v1806
    %v1862 = vunpack.c.h.b16 %v1806
    %v1863 = vunpack.c.l.b16 %v1807
    %v1864 = vunpack.c.h.b16 %v1807
    %v1865 = vunpack.c.l.b16 %v1808
    %v1866 = vunpack.c.h.b16 %v1808
    %v1867 = vunpack.c.l.b16 %v1809
    %v1868 = vunpack.c.h.b16 %v1809
    %v1869 = vunpack.c.l.b16 %v1810
    %v1870 = vunpack.c.h.b16 %v1810
    %v1871 = vpack.c.b16 %v1841, %v1839
    %v1872 = vpack.c.b16 %v1842, %v1840
    %v1873 = vpack.c.b16 %v1845, %v1843
    %v1874 = vpack.c.b16 %v1846, %v1844
    %v1875 = vpack.c.b16 %v1849, %v1847
    %v1876 = vpack.c.b16 %v1850, %v1848
    %v1877 = vpack.c.b16 %v1853, %v1851
    %v1878 = vpack.c.b16 %v1854, %v1852
    %v1879 = vpack.c.b16 %v1857, %v1855
    %v1880 = vpack.c.b16 %v1858, %v1856
    %v1881 = vpack.c.b16 %v1861, %v1859
    %v1882 = vpack.c.b16 %v1862, %v1860
    %v1883 = vpack.c.b16 %v1865, %v1863
    %v1884 = vpack.c.b16 %v1866, %v1864
    %v1885 = vpack.c.b16 %v1869, %v1867
    %v1886 = vpack.c.b16 %v1870, %v1868
    %1903 = vmatprep.subr.bf16.mxu0 %v1872
    %1904 = vmatpush1.bf16.msra.mxu0 %v1871
    %1905 = vmatprep.subr.bf16.mxu0 %v1874
    %1906 = vmatpush1.bf16.msra.mxu0 %v1873
    %1907 = vmatprep.subr.bf16.mxu0 %v1876
    %1908 = vmatpush1.bf16.msra.mxu0 %v1875
    %1909 = vmatprep.subr.bf16.mxu0 %v1878
    %1910 = vmatpush1.bf16.msra.mxu0 %v1877
    %1911 = vmatprep.subr.bf16.mxu0 %v1880
    %1912 = vmatpush1.bf16.msra.mxu0 %v1879
    %1913 = vmatprep.subr.bf16.mxu0 %v1882
    %1914 = vmatpush1.bf16.msra.mxu0 %v1881
    %1915 = vmatprep.subr.bf16.mxu0 %v1884
    %1916 = vmatpush1.bf16.msra.mxu0 %v1883
    %1917 = vmatprep.subr.bf16.mxu0 %v1886
    %1918 = vmatpush1.bf16.msra.mxu0 %v1885
    %1919 = vmatprep.subr.bf16.mxu0 0
    %1920 = vmatpush1.bf16.msra.mxu0 0
    %1921 = vmatprep.subr.bf16.mxu0 0
    %1922 = vmatpush1.bf16.msra.mxu0 0
    %1923 = vmatprep.subr.bf16.mxu0 0
    %1924 = vmatpush1.bf16.msra.mxu0 0
    %1925 = vmatprep.subr.bf16.mxu0 0
    %1926 = vmatpush1.bf16.msra.mxu0 0
    %1927 = vmatprep.subr.bf16.mxu0 0
    %1928 = vmatpush1.bf16.msra.mxu0 0
    %1929 = vmatprep.subr.bf16.mxu0 0
    %1930 = vmatpush1.bf16.msra.mxu0 0
    %1931 = vmatprep.subr.bf16.mxu0 0
    %1932 = vmatpush1.bf16.msra.mxu0 0
    %1933 = vmatprep.subr.bf16.mxu0 0
    %1934 = vmatpush1.bf16.msra.mxu0 0
    %1935 = vmatprep.mubr.bf16.mxu0 0
    %1936 = vmatmul.mubr.bf16.gmra.mrb[0].mxu0 %v1302
    %v1937 = vpop.f32.mrb[0].mxu0
    %v1938 = vadd.f32 %v1816, %v1937
    %v1939 = vpop.f32.mrb[0].mxu0
    %v1940 = vadd.f32 %v1820, %v1939
    %v1941 = vpop.f32.mrb[0].mxu0
    %v1942 = vadd.f32 %v1816, %v1941
    %v1943 = vpop.f32.mrb[0].mxu0
    %v1944 = vadd.f32 %v1820, %v1943
    %1945 = vmatprep.mubr.bf16.mxu0 0
    %1946 = vmatmul.mubr.bf16.gmra.mrb[0].mxu0 %v1303
    %v1947 = vpop.f32.mrb[0].mxu0
    %v1948 = vadd.f32 %v1816, %v1947
    %v1949 = vpop.f32.mrb[0].mxu0
    %v1950 = vadd.f32 %v1820, %v1949
    %v1951 = vpop.f32.mrb[0].mxu0
    %v1952 = vadd.f32 %v1816, %v1951
    %v1953 = vpop.f32.mrb[0].mxu0
    %v1954 = vadd.f32 %v1820, %v1953
    %1955 = vmatprep.mubr.bf16.mxu0 0
    %1956 = vmatmul.mubr.bf16.gmra.mrb[0].mxu0 %v1304
    %v1957 = vpop.f32.mrb[0].mxu0
    %v1958 = vadd.f32 %v1816, %v1957
    %v1959 = vpop.f32.mrb[0].mxu0
    %v1960 = vadd.f32 %v1820, %v1959
    %v1961 = vpop.f32.mrb[0].mxu0
    %v1962 = vadd.f32 %v1816, %v1961
    %v1963 = vpop.f32.mrb[0].mxu0
    %v1964 = vadd.f32 %v1820, %v1963
    %1965 = vmatprep.mubr.bf16.mxu0 0
    %1966 = vmatmul.mubr.bf16.gmra.mrb[0].mxu0 %v1305
    %v1967 = vpop.f32.mrb[0].mxu0
    %v1968 = vadd.f32 %v1816, %v1967
    %v1969 = vpop.f32.mrb[0].mxu0
    %v1970 = vadd.f32 %v1820, %v1969
    %v1971 = vpop.f32.mrb[0].mxu0
    %v1972 = vadd.f32 %v1816, %v1971
    %v1973 = vpop.f32.mrb[0].mxu0
    %v1974 = vadd.f32 %v1820, %v1973
    %1975 = vmatprep.mubr.bf16.mxu0 0
    %1976 = vmatmul.mubr.bf16.gmra.mrb[0].mxu0 %v1306
    %v1977 = vpop.f32.mrb[0].mxu0
    %v1978 = vadd.f32 %v1816, %v1977
    %v1979 = vpop.f32.mrb[0].mxu0
    %v1980 = vadd.f32 %v1820, %v1979
    %v1981 = vpop.f32.mrb[0].mxu0
    %v1982 = vadd.f32 %v1816, %v1981
    %v1983 = vpop.f32.mrb[0].mxu0
    %v1984 = vadd.f32 %v1820, %v1983
    %1985 = vmatprep.mubr.bf16.mxu0 0
    %1986 = vmatmul.mubr.bf16.gmra.mrb[0].mxu0 %v1307
    %v1987 = vpop.f32.mrb[0].mxu0
    %v1988 = vadd.f32 %v1816, %v1987
    %v1989 = vpop.f32.mrb[0].mxu0
    %v1990 = vadd.f32 %v1820, %v1989
    %v1991 = vpop.f32.mrb[0].mxu0
    %v1992 = vadd.f32 %v1816, %v1991
    %v1993 = vpop.f32.mrb[0].mxu0
    %v1994 = vadd.f32 %v1820, %v1993
    %1995 = vmatprep.mubr.bf16.mxu0 0
    %1996 = vmatmul.mubr.bf16.gmra.mrb[0].mxu0 %v1308
    %v1997 = vpop.f32.mrb[0].mxu0
    %v1998 = vadd.f32 %v1816, %v1997
    %v1999 = vpop.f32.mrb[0].mxu0
    %v2000 = vadd.f32 %v1820, %v1999
    %v2001 = vpop.f32.mrb[0].mxu0
    %v2002 = vadd.f32 %v1816, %v2001
    %v2003 = vpop.f32.mrb[0].mxu0
    %v2004 = vadd.f32 %v1820, %v2003
    %2005 = vmatprep.mubr.bf16.mxu0 0
    %2006 = vmatmul.mubr.bf16.gmra.mrb[0].mxu0 %v1309
    %v2007 = vpop.f32.mrb[0].mxu0
    %v2008 = vadd.f32 %v1816, %v2007
    %v2009 = vpop.f32.mrb[0].mxu0
    %v2010 = vadd.f32 %v1820, %v2009
    %v2011 = vpop.f32.mrb[0].mxu0
    %v2012 = vadd.f32 %v1816, %v2011
    %v2013 = vpop.f32.mrb[0].mxu0
    %v2014 = vadd.f32 %v1820, %v2013
    %2015 = vmatprep.mubr.bf16.mxu0 0
    %2016 = vmatmul.mubr.bf16.gmra.mrb[0].mxu0 %v1310
    %v2017 = vpop.f32.mrb[0].mxu0
    %v2018 = vadd.f32 %v1816, %v2017
    %v2019 = vpop.f32.mrb[0].mxu0
    %v2020 = vadd.f32 %v1820, %v2019
    %v2021 = vpop.f32.mrb[0].mxu0
    %v2022 = vadd.f32 %v1816, %v2021
    %v2023 = vpop.f32.mrb[0].mxu0
    %v2024 = vadd.f32 %v1820, %v2023
    %2025 = vmatprep.mubr.bf16.mxu0 0
    %2026 = vmatmul.mubr.bf16.gmra.mrb[0].mxu0 %v1311
    %v2027 = vpop.f32.mrb[0].mxu0
    %v2028 = vadd.f32 %v1816, %v2027
    %v2029 = vpop.f32.mrb[0].mxu0
    %v2030 = vadd.f32 %v1820, %v2029
    %v2031 = vpop.f32.mrb[0].mxu0
    %v2032 = vadd.f32 %v1816, %v2031
    %v2033 = vpop.f32.mrb[0].mxu0
    %v2034 = vadd.f32 %v1820, %v2033
    %2035 = vmatprep.mubr.bf16.mxu0 0
    %2036 = vmatmul.mubr.bf16.gmra.mrb[0].mxu0 %v1312
    %v2037 = vpop.f32.mrb[0].mxu0
    %v2038 = vadd.f32 %v1816, %v2037
    %v2039 = vpop.f32.mrb[0].mxu0
    %v2040 = vadd.f32 %v1820, %v2039
    %v2041 = vpop.f32.mrb[0].mxu0
    %v2042 = vadd.f32 %v1816, %v2041
    %v2043 = vpop.f32.mrb[0].mxu0
    %v2044 = vadd.f32 %v1820, %v2043
    %2045 = vmatprep.mubr.bf16.mxu0 0
    %2046 = vmatmul.mubr.bf16.gmra.mrb[0].mxu0 %v1313
    %v2047 = vpop.f32.mrb[0].mxu0
    %v2048 = vadd.f32 %v1816, %v2047
    %v2049 = vpop.f32.mrb[0].mxu0
    %v2050 = vadd.f32 %v1820, %v2049
    %v2051 = vpop.f32.mrb[0].mxu0
    %v2052 = vadd.f32 %v1816, %v2051
    %v2053 = vpop.f32.mrb[0].mxu0
    %v2054 = vadd.f32 %v1820, %v2053
    %2055 = vmatprep.mubr.bf16.mxu0 0
    %2056 = vmatmul.mubr.bf16.gmra.mrb[0].mxu0 %v1314
    %v2057 = vpop.f32.mrb[0].mxu0
    %v2058 = vadd.f32 %v1816, %v2057
    %v2059 = vpop.f32.mrb[0].mxu0
    %v2060 = vadd.f32 %v1820, %v2059
    %v2061 = vpop.f32.mrb[0].mxu0
    %v2062 = vadd.f32 %v1816, %v2061
    %v2063 = vpop.f32.mrb[0].mxu0
    %v2064 = vadd.f32 %v1820, %v2063
    %2065 = vmatprep.mubr.bf16.mxu0 0
    %2066 = vmatmul.mubr.bf16.gmra.mrb[0].mxu0 %v1315
    %v2067 = vpop.f32.mrb[0].mxu0
    %v2068 = vadd.f32 %v1816, %v2067
    %v2069 = vpop.f32.mrb[0].mxu0
    %v2070 = vadd.f32 %v1820, %v2069
    %v2071 = vpop.f32.mrb[0].mxu0
    %v2072 = vadd.f32 %v1816, %v2071
    %v2073 = vpop.f32.mrb[0].mxu0
    %v2074 = vadd.f32 %v1820, %v2073
    %2075 = vmatprep.mubr.bf16.mxu0 0
    %2076 = vmatmul.mubr.bf16.gmra.mrb[0].mxu0 %v1316
    %v2077 = vpop.f32.mrb[0].mxu0
    %v2078 = vadd.f32 %v1816, %v2077
    %v2079 = vpop.f32.mrb[0].mxu0
    %v2080 = vadd.f32 %v1820, %v2079
    %v2081 = vpop.f32.mrb[0].mxu0
    %v2082 = vadd.f32 %v1816, %v2081
    %v2083 = vpop.f32.mrb[0].mxu0
    %v2084 = vadd.f32 %v1820, %v2083
    %2085 = vmatprep.mubr.bf16.mxu0 0
    %2086 = vmatmul.mubr.bf16.gmra.mrb[0].mxu0 %v1317
    %v2087 = vpop.f32.mrb[0].mxu0
    %v2088 = vadd.f32 %v1816, %v2087
    %v2089 = vpop.f32.mrb[0].mxu0
    %v2090 = vadd.f32 %v1820, %v2089
    %v2091 = vpop.f32.mrb[0].mxu0
    %v2092 = vadd.f32 %v1816, %v2091
    %v2093 = vpop.f32.mrb[0].mxu0
    %v2094 = vadd.f32 %v1820, %v2093
    %2095 = vmatprep.mubr.bf16.mxu0 0
    %2096 = vmatmul.mubr.bf16.gmra.mrb[0].mxu0 %v1318
    %v2097 = vpop.f32.mrb[0].mxu0
    %v2098 = vadd.f32 %v1816, %v2097
    %v2099 = vpop.f32.mrb[0].mxu0
    %v2100 = vadd.f32 %v1820, %v2099
    %v2101 = vpop.f32.mrb[0].mxu0
    %v2102 = vadd.f32 %v1816, %v2101
    %v2103 = vpop.f32.mrb[0].mxu0
    %v2104 = vadd.f32 %v1820, %v2103
    %2105 = vmatprep.mubr.bf16.mxu0 0
    %2106 = vmatmul.mubr.bf16.gmra.mrb[0].mxu0 %v1319
    %v2107 = vpop.f32.mrb[0].mxu0
    %v2108 = vadd.f32 %v1816, %v2107
    %v2109 = vpop.f32.mrb[0].mxu0
    %v2110 = vadd.f32 %v1820, %v2109
    %v2111 = vpop.f32.mrb[0].mxu0
    %v2112 = vadd.f32 %v1816, %v2111
    %v2113 = vpop.f32.mrb[0].mxu0
    %v2114 = vadd.f32 %v1820, %v2113
    %2115 = vmatprep.mubr.bf16.mxu0 0
    %2116 = vmatmul.mubr.bf16.gmra.mrb[0].mxu0 %v1320
    %v2117 = vpop.f32.mrb[0].mxu0
    %v2118 = vadd.f32 %v1816, %v2117
    %v2119 = vpop.f32.mrb[0].mxu0
    %v2120 = vadd.f32 %v1820, %v2119
    %v2121 = vpop.f32.mrb[0].mxu0
    %v2122 = vadd.f32 %v1816, %v2121
    %v2123 = vpop.f32.mrb[0].mxu0
    %v2124 = vadd.f32 %v1820, %v2123
    %2125 = vmatprep.mubr.bf16.mxu0 0
    %2126 = vmatmul.mubr.bf16.gmra.mrb[0].mxu0 %v1321
    %v2127 = vpop.f32.mrb[0].mxu0
    %v2128 = vadd.f32 %v1816, %v2127
    %v2129 = vpop.f32.mrb[0].mxu0
    %v2130 = vadd.f32 %v1820, %v2129
    %v2131 = vpop.f32.mrb[0].mxu0
    %v2132 = vadd.f32 %v1816, %v2131
    %v2133 = vpop.f32.mrb[0].mxu0
    %v2134 = vadd.f32 %v1820, %v2133
    %2135 = vmatprep.mubr.bf16.mxu0 0
    %2136 = vmatmul.mubr.bf16.gmra.mrb[0].mxu0 %v1322
    %v2137 = vpop.f32.mrb[0].mxu0
    %v2138 = vadd.f32 %v1816, %v2137
    %v2139 = vpop.f32.mrb[0].mxu0
    %v2140 = vadd.f32 %v1820, %v2139
    %v2141 = vpop.f32.mrb[0].mxu0
    %v2142 = vadd.f32 %v1816, %v2141
    %v2143 = vpop.f32.mrb[0].mxu0
    %v2144 = vadd.f32 %v1820, %v2143
    %2145 = vmatprep.mubr.bf16.mxu0 0
    %2146 = vmatmul.mubr.bf16.gmra.mrb[0].mxu0 %v1323
    %v2147 = vpop.f32.mrb[0].mxu0
    %v2148 = vadd.f32 %v1816, %v2147
    %v2149 = vpop.f32.mrb[0].mxu0
    %v2150 = vadd.f32 %v1820, %v2149
    %v2151 = vpop.f32.mrb[0].mxu0
    %v2152 = vadd.f32 %v1816, %v2151
    %v2153 = vpop.f32.mrb[0].mxu0
    %v2154 = vadd.f32 %v1820, %v2153
    %2155 = vmatprep.mubr.bf16.mxu0 0
    %2156 = vmatmul.mubr.bf16.gmra.mrb[0].mxu0 %v1324
    %v2157 = vpop.f32.mrb[0].mxu0
    %v2158 = vadd.f32 %v1816, %v2157
    %v2159 = vpop.f32.mrb[0].mxu0
    %v2160 = vadd.f32 %v1820, %v2159
    %v2161 = vpop.f32.mrb[0].mxu0
    %v2162 = vadd.f32 %v1816, %v2161
    %v2163 = vpop.f32.mrb[0].mxu0
    %v2164 = vadd.f32 %v1820, %v2163
    %2165 = vmatprep.mubr.bf16.mxu0 0
    %2166 = vmatmul.mubr.bf16.gmra.mrb[0].mxu0 %v1325
    %v2167 = vpop.f32.mrb[0].mxu0
    %v2168 = vadd.f32 %v1816, %v2167
    %v2169 = vpop.f32.mrb[0].mxu0
    %v2170 = vadd.f32 %v1820, %v2169
    %v2171 = vpop.f32.mrb[0].mxu0
    %v2172 = vadd.f32 %v1816, %v2171
    %v2173 = vpop.f32.mrb[0].mxu0
    %v2174 = vadd.f32 %v1820, %v2173
    %2175 = vmatprep.mubr.bf16.mxu0 0
    %2176 = vmatmul.mubr.bf16.gmra.mrb[0].mxu0 %v1326
    %v2177 = vpop.f32.mrb[0].mxu0
    %v2178 = vadd.f32 %v1816, %v2177
    %v2179 = vpop.f32.mrb[0].mxu0
    %v2180 = vadd.f32 %v1820, %v2179
    %v2181 = vpop.f32.mrb[0].mxu0
    %v2182 = vadd.f32 %v1816, %v2181
    %v2183 = vpop.f32.mrb[0].mxu0
    %v2184 = vadd.f32 %v1820, %v2183
    %2185 = vmatprep.mubr.bf16.mxu0 0
    %2186 = vmatmul.mubr.bf16.gmra.mrb[0].mxu0 %v1327
    %v2187 = vpop.f32.mrb[0].mxu0
    %v2188 = vadd.f32 %v1816, %v2187
    %v2189 = vpop.f32.mrb[0].mxu0
    %v2190 = vadd.f32 %v1820, %v2189
    %v2191 = vpop.f32.mrb[0].mxu0
    %v2192 = vadd.f32 %v1816, %v2191
    %v2193 = vpop.f32.mrb[0].mxu0
    %v2194 = vadd.f32 %v1820, %v2193
    %2195 = vmatprep.mubr.bf16.mxu0 0
    %2196 = vmatmul.mubr.bf16.gmra.mrb[0].mxu0 %v1328
    %v2197 = vpop.f32.mrb[0].mxu0
    %v2198 = vadd.f32 %v1816, %v2197
    %v2199 = vpop.f32.mrb[0].mxu0
    %v2200 = vadd.f32 %v1820, %v2199
    %v2201 = vpop.f32.mrb[0].mxu0
    %v2202 = vadd.f32 %v1816, %v2201
    %v2203 = vpop.f32.mrb[0].mxu0
    %v2204 = vadd.f32 %v1820, %v2203
    %2205 = vmatprep.mubr.bf16.mxu0 0
    %2206 = vmatmul.mubr.bf16.gmra.mrb[0].mxu0 %v1329
    %v2207 = vpop.f32.mrb[0].mxu0
    %v2208 = vadd.f32 %v1816, %v2207
    %v2209 = vpop.f32.mrb[0].mxu0
    %v2210 = vadd.f32 %v1820, %v2209
    %v2211 = vpop.f32.mrb[0].mxu0
    %v2212 = vadd.f32 %v1816, %v2211
    %v2213 = vpop.f32.mrb[0].mxu0
    %v2214 = vadd.f32 %v1820, %v2213
    %2215 = vmatprep.mubr.bf16.mxu0 0
    %2216 = vmatmul.mubr.bf16.gmra.mrb[0].mxu0 %v1330
    %v2217 = vpop.f32.mrb[0].mxu0
    %v2218 = vadd.f32 %v1816, %v2217
    %v2219 = vpop.f32.mrb[0].mxu0
    %v2220 = vadd.f32 %v1820, %v2219
    %v2221 = vpop.f32.mrb[0].mxu0
    %v2222 = vadd.f32 %v1816, %v2221
    %v2223 = vpop.f32.mrb[0].mxu0
    %v2224 = vadd.f32 %v1820, %v2223
    %2225 = vmatprep.mubr.bf16.mxu0 0
    %2226 = vmatmul.mubr.bf16.gmra.mrb[0].mxu0 %v1331
    %v2227 = vpop.f32.mrb[0].mxu0
    %v2228 = vadd.f32 %v1816, %v2227
    %v2229 = vpop.f32.mrb[0].mxu0
    %v2230 = vadd.f32 %v1820, %v2229
    %v2231 = vpop.f32.mrb[0].mxu0
    %v2232 = vadd.f32 %v1816, %v2231
    %v2233 = vpop.f32.mrb[0].mxu0
    %v2234 = vadd.f32 %v1820, %v2233
    %2235 = vmatprep.mubr.bf16.mxu0 0
    %2236 = vmatmul.mubr.bf16.gmra.mrb[0].mxu0 %v1332
    %v2237 = vpop.f32.mrb[0].mxu0
    %v2238 = vadd.f32 %v1816, %v2237
    %v2239 = vpop.f32.mrb[0].mxu0
    %v2240 = vadd.f32 %v1820, %v2239
    %v2241 = vpop.f32.mrb[0].mxu0
    %v2242 = vadd.f32 %v1816, %v2241
    %v2243 = vpop.f32.mrb[0].mxu0
    %v2244 = vadd.f32 %v1820, %v2243
    %2245 = vmatprep.mubr.bf16.mxu0 0
    %2246 = vmatmul.mubr.bf16.gmra.mrb[0].mxu0 %v1333
    %v2247 = vpop.f32.mrb[0].mxu0
    %v2248 = vadd.f32 %v1816, %v2247
    %v2249 = vpop.f32.mrb[0].mxu0
    %v2250 = vadd.f32 %v1820, %v2249
    %v2251 = vpop.f32.mrb[0].mxu0
    %v2252 = vadd.f32 %v1816, %v2251
    %v2253 = vpop.f32.mrb[0].mxu0
    %v2254 = vadd.f32 %v1820, %v2253
    %2255 = vdwg.mxu0
    %v2256 = vxor.u32 %v1477, 2147483648
    %v2257 = vxor.u32 %v1479, 2147483648
    %v2258 = vxor.u32 %v1481, 2147483648
    %v2259 = vxor.u32 %v1483, 2147483648
    %v2260 = vxor.u32 %v1487, 2147483648
    %v2261 = vxor.u32 %v1489, 2147483648
    %v2262 = vxor.u32 %v1491, 2147483648
    %v2263 = vxor.u32 %v1493, 2147483648
    %v2264 = vxor.u32 %v1497, 2147483648
    %v2265 = vxor.u32 %v1499, 2147483648
    %v2266 = vxor.u32 %v1501, 2147483648
    %v2267 = vxor.u32 %v1503, 2147483648
    %v2268 = vxor.u32 %v1507, 2147483648
    %v2269 = vxor.u32 %v1509, 2147483648
    %v2270 = vxor.u32 %v1511, 2147483648
    %v2271 = vxor.u32 %v1513, 2147483648
    %v2272 = vxor.u32 %v1517, 2147483648
    %v2273 = vxor.u32 %v1519, 2147483648
    %v2274 = vxor.u32 %v1521, 2147483648
    %v2275 = vxor.u32 %v1523, 2147483648
    %v2276 = vxor.u32 %v1527, 2147483648
    %v2277 = vxor.u32 %v1529, 2147483648
    %v2278 = vxor.u32 %v1531, 2147483648
    %v2279 = vxor.u32 %v1533, 2147483648
    %v2280 = vxor.u32 %v1537, 2147483648
    %v2281 = vxor.u32 %v1539, 2147483648
    %v2282 = vxor.u32 %v1541, 2147483648
    %v2283 = vxor.u32 %v1543, 2147483648
    %v2284 = vxor.u32 %v1547, 2147483648
    %v2285 = vxor.u32 %v1549, 2147483648
    %v2286 = vxor.u32 %v1551, 2147483648
    %v2287 = vxor.u32 %v1553, 2147483648
    %v2288 = vxor.u32 %v1557, 2147483648
    %v2289 = vxor.u32 %v1559, 2147483648
    %v2290 = vxor.u32 %v1561, 2147483648
    %v2291 = vxor.u32 %v1563, 2147483648
    %v2292 = vxor.u32 %v1567, 2147483648
    %v2293 = vxor.u32 %v1569, 2147483648
    %v2294 = vxor.u32 %v1571, 2147483648
    %v2295 = vxor.u32 %v1573, 2147483648
    %v2296 = vxor.u32 %v1577, 2147483648
    %v2297 = vxor.u32 %v1579, 2147483648
    %v2298 = vxor.u32 %v1581, 2147483648
    %v2299 = vxor.u32 %v1583, 2147483648
    %v2300 = vxor.u32 %v1587, 2147483648
    %v2301 = vxor.u32 %v1589, 2147483648
    %v2302 = vxor.u32 %v1591, 2147483648
    %v2303 = vxor.u32 %v1593, 2147483648
    %v2304 = vxor.u32 %v1597, 2147483648
    %v2305 = vxor.u32 %v1599, 2147483648
    %v2306 = vxor.u32 %v1601, 2147483648
    %v2307 = vxor.u32 %v1603, 2147483648
    %v2308 = vxor.u32 %v1607, 2147483648
    %v2309 = vxor.u32 %v1609, 2147483648
    %v2310 = vxor.u32 %v1611, 2147483648
    %v2311 = vxor.u32 %v1613, 2147483648
    %v2312 = vxor.u32 %v1617, 2147483648
    %v2313 = vxor.u32 %v1619, 2147483648
    %v2314 = vxor.u32 %v1621, 2147483648
    %v2315 = vxor.u32 %v1623, 2147483648
    %v2316 = vxor.u32 %v1627, 2147483648
    %v2317 = vxor.u32 %v1629, 2147483648
    %v2318 = vxor.u32 %v1631, 2147483648
    %v2319 = vxor.u32 %v1633, 2147483648
    %v2320 = vxor.u32 %v1637, 2147483648
    %v2321 = vxor.u32 %v1639, 2147483648
    %v2322 = vxor.u32 %v1641, 2147483648
    %v2323 = vxor.u32 %v1643, 2147483648
    %v2324 = vxor.u32 %v1647, 2147483648
    %v2325 = vxor.u32 %v1649, 2147483648
    %v2326 = vxor.u32 %v1651, 2147483648
    %v2327 = vxor.u32 %v1653, 2147483648
    %v2328 = vxor.u32 %v1657, 2147483648
    %v2329 = vxor.u32 %v1659, 2147483648
    %v2330 = vxor.u32 %v1661, 2147483648
    %v2331 = vxor.u32 %v1663, 2147483648
    %v2332 = vxor.u32 %v1667, 2147483648
    %v2333 = vxor.u32 %v1669, 2147483648
    %v2334 = vxor.u32 %v1671, 2147483648
    %v2335 = vxor.u32 %v1673, 2147483648
    %v2336 = vxor.u32 %v1677, 2147483648
    %v2337 = vxor.u32 %v1679, 2147483648
    %v2338 = vxor.u32 %v1681, 2147483648
    %v2339 = vxor.u32 %v1683, 2147483648
    %v2340 = vxor.u32 %v1687, 2147483648
    %v2341 = vxor.u32 %v1689, 2147483648
    %v2342 = vxor.u32 %v1691, 2147483648
    %v2343 = vxor.u32 %v1693, 2147483648
    %v2344 = vxor.u32 %v1697, 2147483648
    %v2345 = vxor.u32 %v1699, 2147483648
    %v2346 = vxor.u32 %v1701, 2147483648
    %v2347 = vxor.u32 %v1703, 2147483648
    %v2348 = vxor.u32 %v1707, 2147483648
    %v2349 = vxor.u32 %v1709, 2147483648
    %v2350 = vxor.u32 %v1711, 2147483648
    %v2351 = vxor.u32 %v1713, 2147483648
    %v2352 = vxor.u32 %v1717, 2147483648
    %v2353 = vxor.u32 %v1719, 2147483648
    %v2354 = vxor.u32 %v1721, 2147483648
    %v2355 = vxor.u32 %v1723, 2147483648
    %v2356 = vxor.u32 %v1727, 2147483648
    %v2357 = vxor.u32 %v1729, 2147483648
    %v2358 = vxor.u32 %v1731, 2147483648
    %v2359 = vxor.u32 %v1733, 2147483648
    %v2360 = vxor.u32 %v1737, 2147483648
    %v2361 = vxor.u32 %v1739, 2147483648
    %v2362 = vxor.u32 %v1741, 2147483648
    %v2363 = vxor.u32 %v1743, 2147483648
    %v2364 = vxor.u32 %v1747, 2147483648
    %v2365 = vxor.u32 %v1749, 2147483648
    %v2366 = vxor.u32 %v1751, 2147483648
    %v2367 = vxor.u32 %v1753, 2147483648
    %v2368 = vxor.u32 %v1757, 2147483648
    %v2369 = vxor.u32 %v1759, 2147483648
    %v2370 = vxor.u32 %v1761, 2147483648
    %v2371 = vxor.u32 %v1763, 2147483648
    %v2372 = vxor.u32 %v1767, 2147483648
    %v2373 = vxor.u32 %v1769, 2147483648
    %v2374 = vxor.u32 %v1771, 2147483648
    %v2375 = vxor.u32 %v1773, 2147483648
    %v2376 = vxor.u32 %v1777, 2147483648
    %v2377 = vxor.u32 %v1779, 2147483648
    %v2378 = vxor.u32 %v1781, 2147483648
    %v2379 = vxor.u32 %v1783, 2147483648
    %v2380 = vxor.u32 %v1787, 2147483648
    %v2381 = vxor.u32 %v1789, 2147483648
    %v2382 = vxor.u32 %v1791, 2147483648
    %v2383 = vxor.u32 %v1793, 2147483648
    %v2384 = vmul.f32 %v2256, 1.442695
    %v2385 = vpow.pop %v2384
    %v2386 = vmul.f32 %v2257, 1.442695
    %v2387 = vpow.pop %v2386
    %v2388 = vmul.f32 %v2258, 1.442695
    %v2389 = vpow.pop %v2388
    %v2390 = vmul.f32 %v2259, 1.442695
    %v2391 = vpow.pop %v2390
    %v2392 = vmul.f32 %v2260, 1.442695
    %v2393 = vpow.pop %v2392
    %v2394 = vmul.f32 %v2261, 1.442695
    %v2395 = vpow.pop %v2394
    %v2396 = vmul.f32 %v2262, 1.442695
    %v2397 = vpow.pop %v2396
    %v2398 = vmul.f32 %v2263, 1.442695
    %v2399 = vpow.pop %v2398
    %v2400 = vmul.f32 %v2264, 1.442695
    %v2401 = vpow.pop %v2400
    %v2402 = vmul.f32 %v2265, 1.442695
    %v2403 = vpow.pop %v2402
    %v2404 = vmul.f32 %v2266, 1.442695
    %v2405 = vpow.pop %v2404
    %v2406 = vmul.f32 %v2267, 1.442695
    %v2407 = vpow.pop %v2406
    %v2408 = vmul.f32 %v2268, 1.442695
    %v2409 = vpow.pop %v2408
    %v2410 = vmul.f32 %v2269, 1.442695
    %v2411 = vpow.pop %v2410
    %v2412 = vmul.f32 %v2270, 1.442695
    %v2413 = vpow.pop %v2412
    %v2414 = vmul.f32 %v2271, 1.442695
    %v2415 = vpow.pop %v2414
    %v2416 = vmul.f32 %v2272, 1.442695
    %v2417 = vpow.pop %v2416
    %v2418 = vmul.f32 %v2273, 1.442695
    %v2419 = vpow.pop %v2418
    %v2420 = vmul.f32 %v2274, 1.442695
    %v2421 = vpow.pop %v2420
    %v2422 = vmul.f32 %v2275, 1.442695
    %v2423 = vpow.pop %v2422
    %v2424 = vmul.f32 %v2276, 1.442695
    %v2425 = vpow.pop %v2424
    %v2426 = vmul.f32 %v2277, 1.442695
    %v2427 = vpow.pop %v2426
    %v2428 = vmul.f32 %v2278, 1.442695
    %v2429 = vpow.pop %v2428
    %v2430 = vmul.f32 %v2279, 1.442695
    %v2431 = vpow.pop %v2430
    %v2432 = vmul.f32 %v2280, 1.442695
    %v2433 = vpow.pop %v2432
    %v2434 = vmul.f32 %v2281, 1.442695
    %v2435 = vpow.pop %v2434
    %v2436 = vmul.f32 %v2282, 1.442695
    %v2437 = vpow.pop %v2436
    %v2438 = vmul.f32 %v2283, 1.442695
    %v2439 = vpow.pop %v2438
    %v2440 = vmul.f32 %v2284, 1.442695
    %v2441 = vpow.pop %v2440
    %v2442 = vmul.f32 %v2285, 1.442695
    %v2443 = vpow.pop %v2442
    %v2444 = vmul.f32 %v2286, 1.442695
    %v2445 = vpow.pop %v2444
    %v2446 = vmul.f32 %v2287, 1.442695
    %v2447 = vpow.pop %v2446
    %v2448 = vmul.f32 %v2288, 1.442695
    %v2449 = vpow.pop %v2448
    %v2450 = vmul.f32 %v2289, 1.442695
    %v2451 = vpow.pop %v2450
    %v2452 = vmul.f32 %v2290, 1.442695
    %v2453 = vpow.pop %v2452
    %v2454 = vmul.f32 %v2291, 1.442695
    %v2455 = vpow.pop %v2454
    %v2456 = vmul.f32 %v2292, 1.442695
    %v2457 = vpow.pop %v2456
    %v2458 = vmul.f32 %v2293, 1.442695
    %v2459 = vpow.pop %v2458
    %v2460 = vmul.f32 %v2294, 1.442695
    %v2461 = vpow.pop %v2460
    %v2462 = vmul.f32 %v2295, 1.442695
    %v2463 = vpow.pop %v2462
    %v2464 = vmul.f32 %v2296, 1.442695
    %v2465 = vpow.pop %v2464
    %v2466 = vmul.f32 %v2297, 1.442695
    %v2467 = vpow.pop %v2466
    %v2468 = vmul.f32 %v2298, 1.442695
    %v2469 = vpow.pop %v2468
    %v2470 = vmul.f32 %v2299, 1.442695
    %v2471 = vpow.pop %v2470
    %v2472 = vmul.f32 %v2300, 1.442695
    %v2473 = vpow.pop %v2472
    %v2474 = vmul.f32 %v2301, 1.442695
    %v2475 = vpow.pop %v2474
    %v2476 = vmul.f32 %v2302, 1.442695
    %v2477 = vpow.pop %v2476
    %v2478 = vmul.f32 %v2303, 1.442695
    %v2479 = vpow.pop %v2478
    %v2480 = vmul.f32 %v2304, 1.442695
    %v2481 = vpow.pop %v2480
    %v2482 = vmul.f32 %v2305, 1.442695
    %v2483 = vpow.pop %v2482
    %v2484 = vmul.f32 %v2306, 1.442695
    %v2485 = vpow.pop %v2484
    %v2486 = vmul.f32 %v2307, 1.442695
    %v2487 = vpow.pop %v2486
    %v2488 = vmul.f32 %v2308, 1.442695
    %v2489 = vpow.pop %v2488
    %v2490 = vmul.f32 %v2309, 1.442695
    %v2491 = vpow.pop %v2490
    %v2492 = vmul.f32 %v2310, 1.442695
    %v2493 = vpow.pop %v2492
    %v2494 = vmul.f32 %v2311, 1.442695
    %v2495 = vpow.pop %v2494
    %v2496 = vmul.f32 %v2312, 1.442695
    %v2497 = vpow.pop %v2496
    %v2498 = vmul.f32 %v2313, 1.442695
    %v2499 = vpow.pop %v2498
    %v2500 = vmul.f32 %v2314, 1.442695
    %v2501 = vpow.pop %v2500
    %v2502 = vmul.f32 %v2315, 1.442695
    %v2503 = vpow.pop %v2502
    %v2504 = vmul.f32 %v2316, 1.442695
    %v2505 = vpow.pop %v2504
    %v2506 = vmul.f32 %v2317, 1.442695
    %v2507 = vpow.pop %v2506
    %v2508 = vmul.f32 %v2318, 1.442695
    %v2509 = vpow.pop %v2508
    %v2510 = vmul.f32 %v2319, 1.442695
    %v2511 = vpow.pop %v2510
    %v2512 = vmul.f32 %v2320, 1.442695
    %v2513 = vpow.pop %v2512
    %v2514 = vmul.f32 %v2321, 1.442695
    %v2515 = vpow.pop %v2514
    %v2516 = vmul.f32 %v2322, 1.442695
    %v2517 = vpow.pop %v2516
    %v2518 = vmul.f32 %v2323, 1.442695
    %v2519 = vpow.pop %v2518
    %v2520 = vmul.f32 %v2324, 1.442695
    %v2521 = vpow.pop %v2520
    %v2522 = vmul.f32 %v2325, 1.442695
    %v2523 = vpow.pop %v2522
    %v2524 = vmul.f32 %v2326, 1.442695
    %v2525 = vpow.pop %v2524
    %v2526 = vmul.f32 %v2327, 1.442695
    %v2527 = vpow.pop %v2526
    %v2528 = vmul.f32 %v2328, 1.442695
    %v2529 = vpow.pop %v2528
    %v2530 = vmul.f32 %v2329, 1.442695
    %v2531 = vpow.pop %v2530
    %v2532 = vmul.f32 %v2330, 1.442695
    %v2533 = vpow.pop %v2532
    %v2534 = vmul.f32 %v2331, 1.442695
    %v2535 = vpow.pop %v2534
    %v2536 = vmul.f32 %v2332, 1.442695
    %v2537 = vpow.pop %v2536
    %v2538 = vmul.f32 %v2333, 1.442695
    %v2539 = vpow.pop %v2538
    %v2540 = vmul.f32 %v2334, 1.442695
    %v2541 = vpow.pop %v2540
    %v2542 = vmul.f32 %v2335, 1.442695
    %v2543 = vpow.pop %v2542
    %v2544 = vmul.f32 %v2336, 1.442695
    %v2545 = vpow.pop %v2544
    %v2546 = vmul.f32 %v2337, 1.442695
    %v2547 = vpow.pop %v2546
    %v2548 = vmul.f32 %v2338, 1.442695
    %v2549 = vpow.pop %v2548
    %v2550 = vmul.f32 %v2339, 1.442695
    %v2551 = vpow.pop %v2550
    %v2552 = vmul.f32 %v2340, 1.442695
    %v2553 = vpow.pop %v2552
    %v2554 = vmul.f32 %v2341, 1.442695
    %v2555 = vpow.pop %v2554
    %v2556 = vmul.f32 %v2342, 1.442695
    %v2557 = vpow.pop %v2556
    %v2558 = vmul.f32 %v2343, 1.442695
    %v2559 = vpow.pop %v2558
    %v2560 = vmul.f32 %v2344, 1.442695
    %v2561 = vpow.pop %v2560
    %v2562 = vmul.f32 %v2345, 1.442695
    %v2563 = vpow.pop %v2562
    %v2564 = vmul.f32 %v2346, 1.442695
    %v2565 = vpow.pop %v2564
    %v2566 = vmul.f32 %v2347, 1.442695
    %v2567 = vpow.pop %v2566
    %v2568 = vmul.f32 %v2348, 1.442695
    %v2569 = vpow.pop %v2568
    %v2570 = vmul.f32 %v2349, 1.442695
    %v2571 = vpow.pop %v2570
    %v2572 = vmul.f32 %v2350, 1.442695
    %v2573 = vpow.pop %v2572
    %v2574 = vmul.f32 %v2351, 1.442695
    %v2575 = vpow.pop %v2574
    %v2576 = vmul.f32 %v2352, 1.442695
    %v2577 = vpow.pop %v2576
    %v2578 = vmul.f32 %v2353, 1.442695
    %v2579 = vpow.pop %v2578
    %v2580 = vmul.f32 %v2354, 1.442695
    %v2581 = vpow.pop %v2580
    %v2582 = vmul.f32 %v2355, 1.442695
    %v2583 = vpow.pop %v2582
    %v2584 = vmul.f32 %v2356, 1.442695
    %v2585 = vpow.pop %v2584
    %v2586 = vmul.f32 %v2357, 1.442695
    %v2587 = vpow.pop %v2586
    %v2588 = vmul.f32 %v2358, 1.442695
    %v2589 = vpow.pop %v2588
    %v2590 = vmul.f32 %v2359, 1.442695
    %v2591 = vpow.pop %v2590
    %v2592 = vmul.f32 %v2360, 1.442695
    %v2593 = vpow.pop %v2592
    %v2594 = vmul.f32 %v2361, 1.442695
    %v2595 = vpow.pop %v2594
    %v2596 = vmul.f32 %v2362, 1.442695
    %v2597 = vpow.pop %v2596
    %v2598 = vmul.f32 %v2363, 1.442695
    %v2599 = vpow.pop %v2598
    %v2600 = vmul.f32 %v2364, 1.442695
    %v2601 = vpow.pop %v2600
    %v2602 = vmul.f32 %v2365, 1.442695
    %v2603 = vpow.pop %v2602
    %v2604 = vmul.f32 %v2366, 1.442695
    %v2605 = vpow.pop %v2604
    %v2606 = vmul.f32 %v2367, 1.442695
    %v2607 = vpow.pop %v2606
    %v2608 = vmul.f32 %v2368, 1.442695
    %v2609 = vpow.pop %v2608
    %v2610 = vmul.f32 %v2369, 1.442695
    %v2611 = vpow.pop %v2610
    %v2612 = vmul.f32 %v2370, 1.442695
    %v2613 = vpow.pop %v2612
    %v2614 = vmul.f32 %v2371, 1.442695
    %v2615 = vpow.pop %v2614
    %v2616 = vmul.f32 %v2372, 1.442695
    %v2617 = vpow.pop %v2616
    %v2618 = vmul.f32 %v2373, 1.442695
    %v2619 = vpow.pop %v2618
    %v2620 = vmul.f32 %v2374, 1.442695
    %v2621 = vpow.pop %v2620
    %v2622 = vmul.f32 %v2375, 1.442695
    %v2623 = vpow.pop %v2622
    %v2624 = vmul.f32 %v2376, 1.442695
    %v2625 = vpow.pop %v2624
    %v2626 = vmul.f32 %v2377, 1.442695
    %v2627 = vpow.pop %v2626
    %v2628 = vmul.f32 %v2378, 1.442695
    %v2629 = vpow.pop %v2628
    %v2630 = vmul.f32 %v2379, 1.442695
    %v2631 = vpow.pop %v2630
    %v2632 = vmul.f32 %v2380, 1.442695
    %v2633 = vpow.pop %v2632
    %v2634 = vmul.f32 %v2381, 1.442695
    %v2635 = vpow.pop %v2634
    %v2636 = vmul.f32 %v2382, 1.442695
    %v2637 = vpow.pop %v2636
    %v2638 = vmul.f32 %v2383, 1.442695
    %v2639 = vpow.pop %v2638
    %v2640 = vadd.f32 %v2385, 1.0
    %v2641 = vadd.f32 %v2387, 1.0
    %v2642 = vadd.f32 %v2389, 1.0
    %v2643 = vadd.f32 %v2391, 1.0
    %v2644 = vadd.f32 %v2393, 1.0
    %v2645 = vadd.f32 %v2395, 1.0
    %v2646 = vadd.f32 %v2397, 1.0
    %v2647 = vadd.f32 %v2399, 1.0
    %v2648 = vadd.f32 %v2401, 1.0
    %v2649 = vadd.f32 %v2403, 1.0
    %v2650 = vadd.f32 %v2405, 1.0
    %v2651 = vadd.f32 %v2407, 1.0
    %v2652 = vadd.f32 %v2409, 1.0
    %v2653 = vadd.f32 %v2411, 1.0
    %v2654 = vadd.f32 %v2413, 1.0
    %v2655 = vadd.f32 %v2415, 1.0
    %v2656 = vadd.f32 %v2417, 1.0
    %v2657 = vadd.f32 %v2419, 1.0
    %v2658 = vadd.f32 %v2421, 1.0
    %v2659 = vadd.f32 %v2423, 1.0
    %v2660 = vadd.f32 %v2425, 1.0
    %v2661 = vadd.f32 %v2427, 1.0
    %v2662 = vadd.f32 %v2429, 1.0
    %v2663 = vadd.f32 %v2431, 1.0
    %v2664 = vadd.f32 %v2433, 1.0
    %v2665 = vadd.f32 %v2435, 1.0
    %v2666 = vadd.f32 %v2437, 1.0
    %v2667 = vadd.f32 %v2439, 1.0
    %v2668 = vadd.f32 %v2441, 1.0
    %v2669 = vadd.f32 %v2443, 1.0
    %v2670 = vadd.f32 %v2445, 1.0
    %v2671 = vadd.f32 %v2447, 1.0
    %v2672 = vadd.f32 %v2449, 1.0
    %v2673 = vadd.f32 %v2451, 1.0
    %v2674 = vadd.f32 %v2453, 1.0
    %v2675 = vadd.f32 %v2455, 1.0
    %v2676 = vadd.f32 %v2457, 1.0
    %v2677 = vadd.f32 %v2459, 1.0
    %v2678 = vadd.f32 %v2461, 1.0
    %v2679 = vadd.f32 %v2463, 1.0
    %v2680 = vadd.f32 %v2465, 1.0
    %v2681 = vadd.f32 %v2467, 1.0
    %v2682 = vadd.f32 %v2469, 1.0
    %v2683 = vadd.f32 %v2471, 1.0
    %v2684 = vadd.f32 %v2473, 1.0
    %v2685 = vadd.f32 %v2475, 1.0
    %v2686 = vadd.f32 %v2477, 1.0
    %v2687 = vadd.f32 %v2479, 1.0
    %v2688 = vadd.f32 %v2481, 1.0
    %v2689 = vadd.f32 %v2483, 1.0
    %v2690 = vadd.f32 %v2485, 1.0
    %v2691 = vadd.f32 %v2487, 1.0
    %v2692 = vadd.f32 %v2489, 1.0
    %v2693 = vadd.f32 %v2491, 1.0
    %v2694 = vadd.f32 %v2493, 1.0
    %v2695 = vadd.f32 %v2495, 1.0
    %v2696 = vadd.f32 %v2497, 1.0
    %v2697 = vadd.f32 %v2499, 1.0
    %v2698 = vadd.f32 %v2501, 1.0
    %v2699 = vadd.f32 %v2503, 1.0
    %v2700 = vadd.f32 %v2505, 1.0
    %v2701 = vadd.f32 %v2507, 1.0
    %v2702 = vadd.f32 %v2509, 1.0
    %v2703 = vadd.f32 %v2511, 1.0
    %v2704 = vadd.f32 %v2513, 1.0
    %v2705 = vadd.f32 %v2515, 1.0
    %v2706 = vadd.f32 %v2517, 1.0
    %v2707 = vadd.f32 %v2519, 1.0
    %v2708 = vadd.f32 %v2521, 1.0
    %v2709 = vadd.f32 %v2523, 1.0
    %v2710 = vadd.f32 %v2525, 1.0
    %v2711 = vadd.f32 %v2527, 1.0
    %v2712 = vadd.f32 %v2529, 1.0
    %v2713 = vadd.f32 %v2531, 1.0
    %v2714 = vadd.f32 %v2533, 1.0
    %v2715 = vadd.f32 %v2535, 1.0
    %v2716 = vadd.f32 %v2537, 1.0
    %v2717 = vadd.f32 %v2539, 1.0
    %v2718 = vadd.f32 %v2541, 1.0
    %v2719 = vadd.f32 %v2543, 1.0
    %v2720 = vadd.f32 %v2545, 1.0
    %v2721 = vadd.f32 %v2547, 1.0
    %v2722 = vadd.f32 %v2549, 1.0
    %v2723 = vadd.f32 %v2551, 1.0
    %v2724 = vadd.f32 %v2553, 1.0
    %v2725 = vadd.f32 %v2555, 1.0
    %v2726 = vadd.f32 %v2557, 1.0
    %v2727 = vadd.f32 %v2559, 1.0
    %v2728 = vadd.f32 %v2561, 1.0
    %v2729 = vadd.f32 %v2563, 1.0
    %v2730 = vadd.f32 %v2565, 1.0
    %v2731 = vadd.f32 %v2567, 1.0
    %v2732 = vadd.f32 %v2569, 1.0
    %v2733 = vadd.f32 %v2571, 1.0
    %v2734 = vadd.f32 %v2573, 1.0
    %v2735 = vadd.f32 %v2575, 1.0
    %v2736 = vadd.f32 %v2577, 1.0
    %v2737 = vadd.f32 %v2579, 1.0
    %v2738 = vadd.f32 %v2581, 1.0
    %v2739 = vadd.f32 %v2583, 1.0
    %v2740 = vadd.f32 %v2585, 1.0
    %v2741 = vadd.f32 %v2587, 1.0
    %v2742 = vadd.f32 %v2589, 1.0
    %v2743 = vadd.f32 %v2591, 1.0
    %v2744 = vadd.f32 %v2593, 1.0
    %v2745 = vadd.f32 %v2595, 1.0
    %v2746 = vadd.f32 %v2597, 1.0
    %v2747 = vadd.f32 %v2599, 1.0
    %v2748 = vadd.f32 %v2601, 1.0
    %v2749 = vadd.f32 %v2603, 1.0
    %v2750 = vadd.f32 %v2605, 1.0
    %v2751 = vadd.f32 %v2607, 1.0
    %v2752 = vadd.f32 %v2609, 1.0
    %v2753 = vadd.f32 %v2611, 1.0
    %v2754 = vadd.f32 %v2613, 1.0
    %v2755 = vadd.f32 %v2615, 1.0
    %v2756 = vadd.f32 %v2617, 1.0
    %v2757 = vadd.f32 %v2619, 1.0
    %v2758 = vadd.f32 %v2621, 1.0
    %v2759 = vadd.f32 %v2623, 1.0
    %v2760 = vadd.f32 %v2625, 1.0
    %v2761 = vadd.f32 %v2627, 1.0
    %v2762 = vadd.f32 %v2629, 1.0
    %v2763 = vadd.f32 %v2631, 1.0
    %v2764 = vadd.f32 %v2633, 1.0
    %v2765 = vadd.f32 %v2635, 1.0
    %v2766 = vadd.f32 %v2637, 1.0
    %v2767 = vadd.f32 %v2639, 1.0
    %v2768 = vrcp.pop %v2640
    %v2769 = vmul.f32 1.0, %v2768
    %v2770 = vrcp.pop %v2641
    %v2771 = vmul.f32 1.0, %v2770
    %v2772 = vrcp.pop %v2642
    %v2773 = vmul.f32 1.0, %v2772
    %v2774 = vrcp.pop %v2643
    %v2775 = vmul.f32 1.0, %v2774
    %v2776 = vrcp.pop %v2644
    %v2777 = vmul.f32 1.0, %v2776
    %v2778 = vrcp.pop %v2645
    %v2779 = vmul.f32 1.0, %v2778
    %v2780 = vrcp.pop %v2646
    %v2781 = vmul.f32 1.0, %v2780
    %v2782 = vrcp.pop %v2647
    %v2783 = vmul.f32 1.0, %v2782
    %v2784 = vrcp.pop %v2648
    %v2785 = vmul.f32 1.0, %v2784
    %v2786 = vrcp.pop %v2649
    %v2787 = vmul.f32 1.0, %v2786
    %v2788 = vrcp.pop %v2650
    %v2789 = vmul.f32 1.0, %v2788
    %v2790 = vrcp.pop %v2651
    %v2791 = vmul.f32 1.0, %v2790
    %v2792 = vrcp.pop %v2652
    %v2793 = vmul.f32 1.0, %v2792
    %v2794 = vrcp.pop %v2653
    %v2795 = vmul.f32 1.0, %v2794
    %v2796 = vrcp.pop %v2654
    %v2797 = vmul.f32 1.0, %v2796
    %v2798 = vrcp.pop %v2655
    %v2799 = vmul.f32 1.0, %v2798
    %v2800 = vrcp.pop %v2656
    %v2801 = vmul.f32 1.0, %v2800
    %v2802 = vrcp.pop %v2657
    %v2803 = vmul.f32 1.0, %v2802
    %v2804 = vrcp.pop %v2658
    %v2805 = vmul.f32 1.0, %v2804
    %v2806 = vrcp.pop %v2659
    %v2807 = vmul.f32 1.0, %v2806
    %v2808 = vrcp.pop %v2660
    %v2809 = vmul.f32 1.0, %v2808
    %v2810 = vrcp.pop %v2661
    %v2811 = vmul.f32 1.0, %v2810
    %v2812 = vrcp.pop %v2662
    %v2813 = vmul.f32 1.0, %v2812
    %v2814 = vrcp.pop %v2663
    %v2815 = vmul.f32 1.0, %v2814
    %v2816 = vrcp.pop %v2664
    %v2817 = vmul.f32 1.0, %v2816
    %v2818 = vrcp.pop %v2665
    %v2819 = vmul.f32 1.0, %v2818
    %v2820 = vrcp.pop %v2666
    %v2821 = vmul.f32 1.0, %v2820
    %v2822 = vrcp.pop %v2667
    %v2823 = vmul.f32 1.0, %v2822
    %v2824 = vrcp.pop %v2668
    %v2825 = vmul.f32 1.0, %v2824
    %v2826 = vrcp.pop %v2669
    %v2827 = vmul.f32 1.0, %v2826
    %v2828 = vrcp.pop %v2670
    %v2829 = vmul.f32 1.0, %v2828
    %v2830 = vrcp.pop %v2671
    %v2831 = vmul.f32 1.0, %v2830
    %v2832 = vrcp.pop %v2672
    %v2833 = vmul.f32 1.0, %v2832
    %v2834 = vrcp.pop %v2673
    %v2835 = vmul.f32 1.0, %v2834
    %v2836 = vrcp.pop %v2674
    %v2837 = vmul.f32 1.0, %v2836
    %v2838 = vrcp.pop %v2675
    %v2839 = vmul.f32 1.0, %v2838
    %v2840 = vrcp.pop %v2676
    %v2841 = vmul.f32 1.0, %v2840
    %v2842 = vrcp.pop %v2677
    %v2843 = vmul.f32 1.0, %v2842
    %v2844 = vrcp.pop %v2678
    %v2845 = vmul.f32 1.0, %v2844
    %v2846 = vrcp.pop %v2679
    %v2847 = vmul.f32 1.0, %v2846
    %v2848 = vrcp.pop %v2680
    %v2849 = vmul.f32 1.0, %v2848
    %v2850 = vrcp.pop %v2681
    %v2851 = vmul.f32 1.0, %v2850
    %v2852 = vrcp.pop %v2682
    %v2853 = vmul.f32 1.0, %v2852
    %v2854 = vrcp.pop %v2683
    %v2855 = vmul.f32 1.0, %v2854
    %v2856 = vrcp.pop %v2684
    %v2857 = vmul.f32 1.0, %v2856
    %v2858 = vrcp.pop %v2685
    %v2859 = vmul.f32 1.0, %v2858
    %v2860 = vrcp.pop %v2686
    %v2861 = vmul.f32 1.0, %v2860
    %v2862 = vrcp.pop %v2687
    %v2863 = vmul.f32 1.0, %v2862
    %v2864 = vrcp.pop %v2688
    %v2865 = vmul.f32 1.0, %v2864
    %v2866 = vrcp.pop %v2689
    %v2867 = vmul.f32 1.0, %v2866
    %v2868 = vrcp.pop %v2690
    %v2869 = vmul.f32 1.0, %v2868
    %v2870 = vrcp.pop %v2691
    %v2871 = vmul.f32 1.0, %v2870
    %v2872 = vrcp.pop %v2692
    %v2873 = vmul.f32 1.0, %v2872
    %v2874 = vrcp.pop %v2693
    %v2875 = vmul.f32 1.0, %v2874
    %v2876 = vrcp.pop %v2694
    %v2877 = vmul.f32 1.0, %v2876
    %v2878 = vrcp.pop %v2695
    %v2879 = vmul.f32 1.0, %v2878
    %v2880 = vrcp.pop %v2696
    %v2881 = vmul.f32 1.0, %v2880
    %v2882 = vrcp.pop %v2697
    %v2883 = vmul.f32 1.0, %v2882
    %v2884 = vrcp.pop %v2698
    %v2885 = vmul.f32 1.0, %v2884
    %v2886 = vrcp.pop %v2699
    %v2887 = vmul.f32 1.0, %v2886
    %v2888 = vrcp.pop %v2700
    %v2889 = vmul.f32 1.0, %v2888
    %v2890 = vrcp.pop %v2701
    %v2891 = vmul.f32 1.0, %v2890
    %v2892 = vrcp.pop %v2702
    %v2893 = vmul.f32 1.0, %v2892
    %v2894 = vrcp.pop %v2703
    %v2895 = vmul.f32 1.0, %v2894
    %v2896 = vrcp.pop %v2704
    %v2897 = vmul.f32 1.0, %v2896
    %v2898 = vrcp.pop %v2705
    %v2899 = vmul.f32 1.0, %v2898
    %v2900 = vrcp.pop %v2706
    %v2901 = vmul.f32 1.0, %v2900
    %v2902 = vrcp.pop %v2707
    %v2903 = vmul.f32 1.0, %v2902
    %v2904 = vrcp.pop %v2708
    %v2905 = vmul.f32 1.0, %v2904
    %v2906 = vrcp.pop %v2709
    %v2907 = vmul.f32 1.0, %v2906
    %v2908 = vrcp.pop %v2710
    %v2909 = vmul.f32 1.0, %v2908
    %v2910 = vrcp.pop %v2711
    %v2911 = vmul.f32 1.0, %v2910
    %v2912 = vrcp.pop %v2712
    %v2913 = vmul.f32 1.0, %v2912
    %v2914 = vrcp.pop %v2713
    %v2915 = vmul.f32 1.0, %v2914
    %v2916 = vrcp.pop %v2714
    %v2917 = vmul.f32 1.0, %v2916
    %v2918 = vrcp.pop %v2715
    %v2919 = vmul.f32 1.0, %v2918
    %v2920 = vrcp.pop %v2716
    %v2921 = vmul.f32 1.0, %v2920
    %v2922 = vrcp.pop %v2717
    %v2923 = vmul.f32 1.0, %v2922
    %v2924 = vrcp.pop %v2718
    %v2925 = vmul.f32 1.0, %v2924
    %v2926 = vrcp.pop %v2719
    %v2927 = vmul.f32 1.0, %v2926
    %v2928 = vrcp.pop %v2720
    %v2929 = vmul.f32 1.0, %v2928
    %v2930 = vrcp.pop %v2721
    %v2931 = vmul.f32 1.0, %v2930
    %v2932 = vrcp.pop %v2722
    %v2933 = vmul.f32 1.0, %v2932
    %v2934 = vrcp.pop %v2723
    %v2935 = vmul.f32 1.0, %v2934
    %v2936 = vrcp.pop %v2724
    %v2937 = vmul.f32 1.0, %v2936
    %v2938 = vrcp.pop %v2725
    %v2939 = vmul.f32 1.0, %v2938
    %v2940 = vrcp.pop %v2726
    %v2941 = vmul.f32 1.0, %v2940
    %v2942 = vrcp.pop %v2727
    %v2943 = vmul.f32 1.0, %v2942
    %v2944 = vrcp.pop %v2728
    %v2945 = vmul.f32 1.0, %v2944
    %v2946 = vrcp.pop %v2729
    %v2947 = vmul.f32 1.0, %v2946
    %v2948 = vrcp.pop %v2730
    %v2949 = vmul.f32 1.0, %v2948
    %v2950 = vrcp.pop %v2731
    %v2951 = vmul.f32 1.0, %v2950
    %v2952 = vrcp.pop %v2732
    %v2953 = vmul.f32 1.0, %v2952
    %v2954 = vrcp.pop %v2733
    %v2955 = vmul.f32 1.0, %v2954
    %v2956 = vrcp.pop %v2734
    %v2957 = vmul.f32 1.0, %v2956
    %v2958 = vrcp.pop %v2735
    %v2959 = vmul.f32 1.0, %v2958
    %v2960 = vrcp.pop %v2736
    %v2961 = vmul.f32 1.0, %v2960
    %v2962 = vrcp.pop %v2737
    %v2963 = vmul.f32 1.0, %v2962
    %v2964 = vrcp.pop %v2738
    %v2965 = vmul.f32 1.0, %v2964
    %v2966 = vrcp.pop %v2739
    %v2967 = vmul.f32 1.0, %v2966
    %v2968 = vrcp.pop %v2740
    %v2969 = vmul.f32 1.0, %v2968
    %v2970 = vrcp.pop %v2741
    %v2971 = vmul.f32 1.0, %v2970
    %v2972 = vrcp.pop %v2742
    %v2973 = vmul.f32 1.0, %v2972
    %v2974 = vrcp.pop %v2743
    %v2975 = vmul.f32 1.0, %v2974
    %v2976 = vrcp.pop %v2744
    %v2977 = vmul.f32 1.0, %v2976
    %v2978 = vrcp.pop %v2745
    %v2979 = vmul.f32 1.0, %v2978
    %v2980 = vrcp.pop %v2746
    %v2981 = vmul.f32 1.0, %v2980
    %v2982 = vrcp.pop %v2747
    %v2983 = vmul.f32 1.0, %v2982
    %v2984 = vrcp.pop %v2748
    %v2985 = vmul.f32 1.0, %v2984
    %v2986 = vrcp.pop %v2749
    %v2987 = vmul.f32 1.0, %v2986
    %v2988 = vrcp.pop %v2750
    %v2989 = vmul.f32 1.0, %v2988
    %v2990 = vrcp.pop %v2751
    %v2991 = vmul.f32 1.0, %v2990
    %v2992 = vrcp.pop %v2752
    %v2993 = vmul.f32 1.0, %v2992
    %v2994 = vrcp.pop %v2753
    %v2995 = vmul.f32 1.0, %v2994
    %v2996 = vrcp.pop %v2754
    %v2997 = vmul.f32 1.0, %v2996
    %v2998 = vrcp.pop %v2755
    %v2999 = vmul.f32 1.0, %v2998
    %v3000 = vrcp.pop %v2756
    %v3001 = vmul.f32 1.0, %v3000
    %v3002 = vrcp.pop %v2757
    %v3003 = vmul.f32 1.0, %v3002
    %v3004 = vrcp.pop %v2758
    %v3005 = vmul.f32 1.0, %v3004
    %v3006 = vrcp.pop %v2759
    %v3007 = vmul.f32 1.0, %v3006
    %v3008 = vrcp.pop %v2760
    %v3009 = vmul.f32 1.0, %v3008
    %v3010 = vrcp.pop %v2761
    %v3011 = vmul.f32 1.0, %v3010
    %v3012 = vrcp.pop %v2762
    %v3013 = vmul.f32 1.0, %v3012
    %v3014 = vrcp.pop %v2763
    %v3015 = vmul.f32 1.0, %v3014
    %v3016 = vrcp.pop %v2764
    %v3017 = vmul.f32 1.0, %v3016
    %v3018 = vrcp.pop %v2765
    %v3019 = vmul.f32 1.0, %v3018
    %v3020 = vrcp.pop %v2766
    %v3021 = vmul.f32 1.0, %v3020
    %v3022 = vrcp.pop %v2767
    %v3023 = vmul.f32 1.0, %v3022
    %v3024 = vmax.f32 %v1938, 0.0
    %v3025 = vmax.f32 %v1940, 0.0
    %v3026 = vmax.f32 %v1942, 0.0
    %v3027 = vmax.f32 %v1944, 0.0
    %v3028 = vmax.f32 %v1948, 0.0
    %v3029 = vmax.f32 %v1950, 0.0
    %v3030 = vmax.f32 %v1952, 0.0
    %v3031 = vmax.f32 %v1954, 0.0
    %v3032 = vmax.f32 %v1958, 0.0
    %v3033 = vmax.f32 %v1960, 0.0
    %v3034 = vmax.f32 %v1962, 0.0
    %v3035 = vmax.f32 %v1964, 0.0
    %v3036 = vmax.f32 %v1968, 0.0
    %v3037 = vmax.f32 %v1970, 0.0
    %v3038 = vmax.f32 %v1972, 0.0
    %v3039 = vmax.f32 %v1974, 0.0
    %v3040 = vmax.f32 %v1978, 0.0
    %v3041 = vmax.f32 %v1980, 0.0
    %v3042 = vmax.f32 %v1982, 0.0
    %v3043 = vmax.f32 %v1984, 0.0
    %v3044 = vmax.f32 %v1988, 0.0
    %v3045 = vmax.f32 %v1990, 0.0
    %v3046 = vmax.f32 %v1992, 0.0
    %v3047 = vmax.f32 %v1994, 0.0
    %v3048 = vmax.f32 %v1998, 0.0
    %v3049 = vmax.f32 %v2000, 0.0
    %v3050 = vmax.f32 %v2002, 0.0
    %v3051 = vmax.f32 %v2004, 0.0
    %v3052 = vmax.f32 %v2008, 0.0
    %v3053 = vmax.f32 %v2010, 0.0
    %v3054 = vmax.f32 %v2012, 0.0
    %v3055 = vmax.f32 %v2014, 0.0
    %v3056 = vmax.f32 %v2018, 0.0
    %v3057 = vmax.f32 %v2020, 0.0
    %v3058 = vmax.f32 %v2022, 0.0
    %v3059 = vmax.f32 %v2024, 0.0
    %v3060 = vmax.f32 %v2028, 0.0
    %v3061 = vmax.f32 %v2030, 0.0
    %v3062 = vmax.f32 %v2032, 0.0
    %v3063 = vmax.f32 %v2034, 0.0
    %v3064 = vmax.f32 %v2038, 0.0
    %v3065 = vmax.f32 %v2040, 0.0
    %v3066 = vmax.f32 %v2042, 0.0
    %v3067 = vmax.f32 %v2044, 0.0
    %v3068 = vmax.f32 %v2048, 0.0
    %v3069 = vmax.f32 %v2050, 0.0
    %v3070 = vmax.f32 %v2052, 0.0
    %v3071 = vmax.f32 %v2054, 0.0
    %v3072 = vmax.f32 %v2058, 0.0
    %v3073 = vmax.f32 %v2060, 0.0
    %v3074 = vmax.f32 %v2062, 0.0
    %v3075 = vmax.f32 %v2064, 0.0
    %v3076 = vmax.f32 %v2068, 0.0
    %v3077 = vmax.f32 %v2070, 0.0
    %v3078 = vmax.f32 %v2072, 0.0
    %v3079 = vmax.f32 %v2074, 0.0
    %v3080 = vmax.f32 %v2078, 0.0
    %v3081 = vmax.f32 %v2080, 0.0
    %v3082 = vmax.f32 %v2082, 0.0
    %v3083 = vmax.f32 %v2084, 0.0
    %v3084 = vmax.f32 %v2088, 0.0
    %v3085 = vmax.f32 %v2090, 0.0
    %v3086 = vmax.f32 %v2092, 0.0
    %v3087 = vmax.f32 %v2094, 0.0
    %v3088 = vmax.f32 %v2098, 0.0
    %v3089 = vmax.f32 %v2100, 0.0
    %v3090 = vmax.f32 %v2102, 0.0
    %v3091 = vmax.f32 %v2104, 0.0
    %v3092 = vmax.f32 %v2108, 0.0
    %v3093 = vmax.f32 %v2110, 0.0
    %v3094 = vmax.f32 %v2112, 0.0
    %v3095 = vmax.f32 %v2114, 0.0
    %v3096 = vmax.f32 %v2118, 0.0
    %v3097 = vmax.f32 %v2120, 0.0
    %v3098 = vmax.f32 %v2122, 0.0
    %v3099 = vmax.f32 %v2124, 0.0
    %v3100 = vmax.f32 %v2128, 0.0
    %v3101 = vmax.f32 %v2130, 0.0
    %v3102 = vmax.f32 %v2132, 0.0
    %v3103 = vmax.f32 %v2134, 0.0
    %v3104 = vmax.f32 %v2138, 0.0
    %v3105 = vmax.f32 %v2140, 0.0
    %v3106 = vmax.f32 %v2142, 0.0
    %v3107 = vmax.f32 %v2144, 0.0
    %v3108 = vmax.f32 %v2148, 0.0
    %v3109 = vmax.f32 %v2150, 0.0
    %v3110 = vmax.f32 %v2152, 0.0
    %v3111 = vmax.f32 %v2154, 0.0
    %v3112 = vmax.f32 %v2158, 0.0
    %v3113 = vmax.f32 %v2160, 0.0
    %v3114 = vmax.f32 %v2162, 0.0
    %v3115 = vmax.f32 %v2164, 0.0
    %v3116 = vmax.f32 %v2168, 0.0
    %v3117 = vmax.f32 %v2170, 0.0
    %v3118 = vmax.f32 %v2172, 0.0
    %v3119 = vmax.f32 %v2174, 0.0
    %v3120 = vmax.f32 %v2178, 0.0
    %v3121 = vmax.f32 %v2180, 0.0
    %v3122 = vmax.f32 %v2182, 0.0
    %v3123 = vmax.f32 %v2184, 0.0
    %v3124 = vmax.f32 %v2188, 0.0
    %v3125 = vmax.f32 %v2190, 0.0
    %v3126 = vmax.f32 %v2192, 0.0
    %v3127 = vmax.f32 %v2194, 0.0
    %v3128 = vmax.f32 %v2198, 0.0
    %v3129 = vmax.f32 %v2200, 0.0
    %v3130 = vmax.f32 %v2202, 0.0
    %v3131 = vmax.f32 %v2204, 0.0
    %v3132 = vmax.f32 %v2208, 0.0
    %v3133 = vmax.f32 %v2210, 0.0
    %v3134 = vmax.f32 %v2212, 0.0
    %v3135 = vmax.f32 %v2214, 0.0
    %v3136 = vmax.f32 %v2218, 0.0
    %v3137 = vmax.f32 %v2220, 0.0
    %v3138 = vmax.f32 %v2222, 0.0
    %v3139 = vmax.f32 %v2224, 0.0
    %v3140 = vmax.f32 %v2228, 0.0
    %v3141 = vmax.f32 %v2230, 0.0
    %v3142 = vmax.f32 %v2232, 0.0
    %v3143 = vmax.f32 %v2234, 0.0
    %v3144 = vmax.f32 %v2238, 0.0
    %v3145 = vmax.f32 %v2240, 0.0
    %v3146 = vmax.f32 %v2242, 0.0
    %v3147 = vmax.f32 %v2244, 0.0
    %v3148 = vmax.f32 %v2248, 0.0
    %v3149 = vmax.f32 %v2250, 0.0
    %v3150 = vmax.f32 %v2252, 0.0
    %v3151 = vmax.f32 %v2254, 0.0
    %v3152 = vmul.f32 %v2769, %v3024
    %v3153 = vmul.f32 %v2771, %v3025
    %v3154 = vmul.f32 %v2773, %v3026
    %v3155 = vmul.f32 %v2775, %v3027
    %v3156 = vmul.f32 %v2777, %v3028
    %v3157 = vmul.f32 %v2779, %v3029
    %v3158 = vmul.f32 %v2781, %v3030
    %v3159 = vmul.f32 %v2783, %v3031
    %v3160 = vmul.f32 %v2785, %v3032
    %v3161 = vmul.f32 %v2787, %v3033
    %v3162 = vmul.f32 %v2789, %v3034
    %v3163 = vmul.f32 %v2791, %v3035
    %v3164 = vmul.f32 %v2793, %v3036
    %v3165 = vmul.f32 %v2795, %v3037
    %v3166 = vmul.f32 %v2797, %v3038
    %v3167 = vmul.f32 %v2799, %v3039
    %v3168 = vmul.f32 %v2801, %v3040
    %v3169 = vmul.f32 %v2803, %v3041
    %v3170 = vmul.f32 %v2805, %v3042
    %v3171 = vmul.f32 %v2807, %v3043
    %v3172 = vmul.f32 %v2809, %v3044
    %v3173 = vmul.f32 %v2811, %v3045
    %v3174 = vmul.f32 %v2813, %v3046
    %v3175 = vmul.f32 %v2815, %v3047
    %v3176 = vmul.f32 %v2817, %v3048
    %v3177 = vmul.f32 %v2819, %v3049
    %v3178 = vmul.f32 %v2821, %v3050
    %v3179 = vmul.f32 %v2823, %v3051
    %v3180 = vmul.f32 %v2825, %v3052
    %v3181 = vmul.f32 %v2827, %v3053
    %v3182 = vmul.f32 %v2829, %v3054
    %v3183 = vmul.f32 %v2831, %v3055
    %v3184 = vmul.f32 %v2833, %v3056
    %v3185 = vmul.f32 %v2835, %v3057
    %v3186 = vmul.f32 %v2837, %v3058
    %v3187 = vmul.f32 %v2839, %v3059
    %v3188 = vmul.f32 %v2841, %v3060
    %v3189 = vmul.f32 %v2843, %v3061
    %v3190 = vmul.f32 %v2845, %v3062
    %v3191 = vmul.f32 %v2847, %v3063
    %v3192 = vmul.f32 %v2849, %v3064
    %v3193 = vmul.f32 %v2851, %v3065
    %v3194 = vmul.f32 %v2853, %v3066
    %v3195 = vmul.f32 %v2855, %v3067
    %v3196 = vmul.f32 %v2857, %v3068
    %v3197 = vmul.f32 %v2859, %v3069
    %v3198 = vmul.f32 %v2861, %v3070
    %v3199 = vmul.f32 %v2863, %v3071
    %v3200 = vmul.f32 %v2865, %v3072
    %v3201 = vmul.f32 %v2867, %v3073
    %v3202 = vmul.f32 %v2869, %v3074
    %v3203 = vmul.f32 %v2871, %v3075
    %v3204 = vmul.f32 %v2873, %v3076
    %v3205 = vmul.f32 %v2875, %v3077
    %v3206 = vmul.f32 %v2877, %v3078
    %v3207 = vmul.f32 %v2879, %v3079
    %v3208 = vmul.f32 %v2881, %v3080
    %v3209 = vmul.f32 %v2883, %v3081
    %v3210 = vmul.f32 %v2885, %v3082
    %v3211 = vmul.f32 %v2887, %v3083
    %v3212 = vmul.f32 %v2889, %v3084
    %v3213 = vmul.f32 %v2891, %v3085
    %v3214 = vmul.f32 %v2893, %v3086
    %v3215 = vmul.f32 %v2895, %v3087
    %v3216 = vmul.f32 %v2897, %v3088
    %v3217 = vmul.f32 %v2899, %v3089
    %v3218 = vmul.f32 %v2901, %v3090
    %v3219 = vmul.f32 %v2903, %v3091
    %v3220 = vmul.f32 %v2905, %v3092
    %v3221 = vmul.f32 %v2907, %v3093
    %v3222 = vmul.f32 %v2909, %v3094
    %v3223 = vmul.f32 %v2911, %v3095
    %v3224 = vmul.f32 %v2913, %v3096
    %v3225 = vmul.f32 %v2915, %v3097
    %v3226 = vmul.f32 %v2917, %v3098
    %v3227 = vmul.f32 %v2919, %v3099
    %v3228 = vmul.f32 %v2921, %v3100
    %v3229 = vmul.f32 %v2923, %v3101
    %v3230 = vmul.f32 %v2925, %v3102
    %v3231 = vmul.f32 %v2927, %v3103
    %v3232 = vmul.f32 %v2929, %v3104
    %v3233 = vmul.f32 %v2931, %v3105
    %v3234 = vmul.f32 %v2933, %v3106
    %v3235 = vmul.f32 %v2935, %v3107
    %v3236 = vmul.f32 %v2937, %v3108
    %v3237 = vmul.f32 %v2939, %v3109
    %v3238 = vmul.f32 %v2941, %v3110
    %v3239 = vmul.f32 %v2943, %v3111
    %v3240 = vmul.f32 %v2945, %v3112
    %v3241 = vmul.f32 %v2947, %v3113
    %v3242 = vmul.f32 %v2949, %v3114
    %v3243 = vmul.f32 %v2951, %v3115
    %v3244 = vmul.f32 %v2953, %v3116
    %v3245 = vmul.f32 %v2955, %v3117
    %v3246 = vmul.f32 %v2957, %v3118
    %v3247 = vmul.f32 %v2959, %v3119
    %v3248 = vmul.f32 %v2961, %v3120
    %v3249 = vmul.f32 %v2963, %v3121
    %v3250 = vmul.f32 %v2965, %v3122
    %v3251 = vmul.f32 %v2967, %v3123
    %v3252 = vmul.f32 %v2969, %v3124
    %v3253 = vmul.f32 %v2971, %v3125
    %v3254 = vmul.f32 %v2973, %v3126
    %v3255 = vmul.f32 %v2975, %v3127
    %v3256 = vmul.f32 %v2977, %v3128
    %v3257 = vmul.f32 %v2979, %v3129
    %v3258 = vmul.f32 %v2981, %v3130
    %v3259 = vmul.f32 %v2983, %v3131
    %v3260 = vmul.f32 %v2985, %v3132
    %v3261 = vmul.f32 %v2987, %v3133
    %v3262 = vmul.f32 %v2989, %v3134
    %v3263 = vmul.f32 %v2991, %v3135
    %v3264 = vmul.f32 %v2993, %v3136
    %v3265 = vmul.f32 %v2995, %v3137
    %v3266 = vmul.f32 %v2997, %v3138
    %v3267 = vmul.f32 %v2999, %v3139
    %v3268 = vmul.f32 %v3001, %v3140
    %v3269 = vmul.f32 %v3003, %v3141
    %v3270 = vmul.f32 %v3005, %v3142
    %v3271 = vmul.f32 %v3007, %v3143
    %v3272 = vmul.f32 %v3009, %v3144
    %v3273 = vmul.f32 %v3011, %v3145
    %v3274 = vmul.f32 %v3013, %v3146
    %v3275 = vmul.f32 %v3015, %v3147
    %v3276 = vmul.f32 %v3017, %v3148
    %v3277 = vmul.f32 %v3019, %v3149
    %v3278 = vmul.f32 %v3021, %v3150
    %v3279 = vmul.f32 %v3023, %v3151
    %v3280 = vld [vmem:[#allocation3] sm:$0xff]
    %v3281 = vld [vmem:[#allocation3 + $0x8] sm:$0xff]
    %v3282 = vld [vmem:[#allocation3 + $0x10] sm:$0xff]
    %v3283 = vld [vmem:[#allocation3 + $0x18] sm:$0xff]
    %v3284 = vld [vmem:[#allocation3 + $0x20] sm:$0xff]
    %v3285 = vld [vmem:[#allocation3 + $0x28] sm:$0xff]
    %v3286 = vld [vmem:[#allocation3 + $0x30] sm:$0xff]
    %v3287 = vld [vmem:[#allocation3 + $0x38] sm:$0xff]
    %v3288 = vld [vmem:[#allocation3 + $0x40] sm:$0xff]
    %v3289 = vld [vmem:[#allocation3 + $0x48] sm:$0xff]
    %v3290 = vld [vmem:[#allocation3 + $0x50] sm:$0xff]
    %v3291 = vld [vmem:[#allocation3 + $0x58] sm:$0xff]
    %v3292 = vld [vmem:[#allocation3 + $0x60] sm:$0xff]
    %v3293 = vld [vmem:[#allocation3 + $0x68] sm:$0xff]
    %v3294 = vld [vmem:[#allocation3 + $0x70] sm:$0xff]
    %v3295 = vld [vmem:[#allocation3 + $0x78] sm:$0xff]
    %v3296 = vld [vmem:[#allocation3 + $0x80] sm:$0xff]
    %v3297 = vld [vmem:[#allocation3 + $0x88] sm:$0xff]
    %v3298 = vld [vmem:[#allocation3 + $0x90] sm:$0xff]
    %v3299 = vld [vmem:[#allocation3 + $0x98] sm:$0xff]
    %v3300 = vld [vmem:[#allocation3 + $0xa0] sm:$0xff]
    %v3301 = vld [vmem:[#allocation3 + $0xa8] sm:$0xff]
    %v3302 = vld [vmem:[#allocation3 + $0xb0] sm:$0xff]
    %v3303 = vld [vmem:[#allocation3 + $0xb8] sm:$0xff]
    %v3304 = vld [vmem:[#allocation3 + $0xc0] sm:$0xff]
    %v3305 = vld [vmem:[#allocation3 + $0xc8] sm:$0xff]
    %v3306 = vld [vmem:[#allocation3 + $0xd0] sm:$0xff]
    %v3307 = vld [vmem:[#allocation3 + $0xd8] sm:$0xff]
    %v3308 = vld [vmem:[#allocation3 + $0xe0] sm:$0xff]
    %v3309 = vld [vmem:[#allocation3 + $0xe8] sm:$0xff]
    %v3310 = vld [vmem:[#allocation3 + $0xf0] sm:$0xff]
    %v3311 = vld [vmem:[#allocation3 + $0xf8] sm:$0xff]
    %v3312 = vld [vmem:[#allocation3 + $0x100] sm:$0xff]
    %v3313 = vld [vmem:[#allocation3 + $0x108] sm:$0xff]
    %v3314 = vld [vmem:[#allocation3 + $0x110] sm:$0xff]
    %v3315 = vld [vmem:[#allocation3 + $0x118] sm:$0xff]
    %v3316 = vld [vmem:[#allocation3 + $0x120] sm:$0xff]
    %v3317 = vld [vmem:[#allocation3 + $0x128] sm:$0xff]
    %v3318 = vld [vmem:[#allocation3 + $0x130] sm:$0xff]
    %v3319 = vld [vmem:[#allocation3 + $0x138] sm:$0xff]
    %v3320 = vld [vmem:[#allocation3 + $0x140] sm:$0xff]
    %v3321 = vld [vmem:[#allocation3 + $0x148] sm:$0xff]
    %v3322 = vld [vmem:[#allocation3 + $0x150] sm:$0xff]
    %v3323 = vld [vmem:[#allocation3 + $0x158] sm:$0xff]
    %v3324 = vld [vmem:[#allocation3 + $0x160] sm:$0xff]
    %v3325 = vld [vmem:[#allocation3 + $0x168] sm:$0xff]
    %v3326 = vld [vmem:[#allocation3 + $0x170] sm:$0xff]
    %v3327 = vld [vmem:[#allocation3 + $0x178] sm:$0xff]
    %v3328 = vld [vmem:[#allocation3 + $0x180] sm:$0xff]
    %v3329 = vld [vmem:[#allocation3 + $0x188] sm:$0xff]
    %v3330 = vld [vmem:[#allocation3 + $0x190] sm:$0xff]
    %v3331 = vld [vmem:[#allocation3 + $0x198] sm:$0xff]
    %v3332 = vld [vmem:[#allocation3 + $0x1a0] sm:$0xff]
    %v3333 = vld [vmem:[#allocation3 + $0x1a8] sm:$0xff]
    %v3334 = vld [vmem:[#allocation3 + $0x1b0] sm:$0xff]
    %v3335 = vld [vmem:[#allocation3 + $0x1b8] sm:$0xff]
    %v3336 = vld [vmem:[#allocation3 + $0x1c0] sm:$0xff]
    %v3337 = vld [vmem:[#allocation3 + $0x1c8] sm:$0xff]
    %v3338 = vld [vmem:[#allocation3 + $0x1d0] sm:$0xff]
    %v3339 = vld [vmem:[#allocation3 + $0x1d8] sm:$0xff]
    %v3340 = vld [vmem:[#allocation3 + $0x1e0] sm:$0xff]
    %v3341 = vld [vmem:[#allocation3 + $0x1e8] sm:$0xff]
    %v3342 = vld [vmem:[#allocation3 + $0x1f0] sm:$0xff]
    %v3343 = vld [vmem:[#allocation3 + $0x1f8] sm:$0xff]
    %v3344 = vpack.c.bf16 %v3154, %v3152
    %v3345 = vpack.c.bf16 %v3155, %v3153
    %v3346 = vpack.c.bf16 %v3158, %v3156
    %v3347 = vpack.c.bf16 %v3159, %v3157
    %v3348 = vpack.c.bf16 %v3162, %v3160
    %v3349 = vpack.c.bf16 %v3163, %v3161
    %v3350 = vpack.c.bf16 %v3166, %v3164
    %v3351 = vpack.c.bf16 %v3167, %v3165
    %v3352 = vpack.c.bf16 %v3170, %v3168
    %v3353 = vpack.c.bf16 %v3171, %v3169
    %v3354 = vpack.c.bf16 %v3174, %v3172
    %v3355 = vpack.c.bf16 %v3175, %v3173
    %v3356 = vpack.c.bf16 %v3178, %v3176
    %v3357 = vpack.c.bf16 %v3179, %v3177
    %v3358 = vpack.c.bf16 %v3182, %v3180
    %v3359 = vpack.c.bf16 %v3183, %v3181
    %v3360 = vpack.c.bf16 %v3186, %v3184
    %v3361 = vpack.c.bf16 %v3187, %v3185
    %v3362 = vpack.c.bf16 %v3190, %v3188
    %v3363 = vpack.c.bf16 %v3191, %v3189
    %v3364 = vpack.c.bf16 %v3194, %v3192
    %v3365 = vpack.c.bf16 %v3195, %v3193
    %v3366 = vpack.c.bf16 %v3198, %v3196
    %v3367 = vpack.c.bf16 %v3199, %v3197
    %v3368 = vpack.c.bf16 %v3202, %v3200
    %v3369 = vpack.c.bf16 %v3203, %v3201
    %v3370 = vpack.c.bf16 %v3206, %v3204
    %v3371 = vpack.c.bf16 %v3207, %v3205
    %v3372 = vpack.c.bf16 %v3210, %v3208
    %v3373 = vpack.c.bf16 %v3211, %v3209
    %v3374 = vpack.c.bf16 %v3214, %v3212
    %v3375 = vpack.c.bf16 %v3215, %v3213
    %v3376 = vpack.c.bf16 %v3218, %v3216
    %v3377 = vpack.c.bf16 %v3219, %v3217
    %v3378 = vpack.c.bf16 %v3222, %v3220
    %v3379 = vpack.c.bf16 %v3223, %v3221
    %v3380 = vpack.c.bf16 %v3226, %v3224
    %v3381 = vpack.c.bf16 %v3227, %v3225
    %v3382 = vpack.c.bf16 %v3230, %v3228
    %v3383 = vpack.c.bf16 %v3231, %v3229
    %v3384 = vpack.c.bf16 %v3234, %v3232
    %v3385 = vpack.c.bf16 %v3235, %v3233
    %v3386 = vpack.c.bf16 %v3238, %v3236
    %v3387 = vpack.c.bf16 %v3239, %v3237
    %v3388 = vpack.c.bf16 %v3242, %v3240
    %v3389 = vpack.c.bf16 %v3243, %v3241
    %v3390 = vpack.c.bf16 %v3246, %v3244
    %v3391 = vpack.c.bf16 %v3247, %v3245
    %v3392 = vpack.c.bf16 %v3250, %v3248
    %v3393 = vpack.c.bf16 %v3251, %v3249
    %v3394 = vpack.c.bf16 %v3254, %v3252
    %v3395 = vpack.c.bf16 %v3255, %v3253
    %v3396 = vpack.c.bf16 %v3258, %v3256
    %v3397 = vpack.c.bf16 %v3259, %v3257
    %v3398 = vpack.c.bf16 %v3262, %v3260
    %v3399 = vpack.c.bf16 %v3263, %v3261
    %v3400 = vpack.c.bf16 %v3266, %v3264
    %v3401 = vpack.c.bf16 %v3267, %v3265
    %v3402 = vpack.c.bf16 %v3270, %v3268
    %v3403 = vpack.c.bf16 %v3271, %v3269
    %v3404 = vpack.c.bf16 %v3274, %v3272
    %v3405 = vpack.c.bf16 %v3275, %v3273
    %v3406 = vpack.c.bf16 %v3278, %v3276
    %v3407 = vpack.c.bf16 %v3279, %v3277
    %v3408 = vld [vmem:[#allocation16] sm:$0xf]
    %v3409 = vld [vmem:[#allocation16 + $0x4] sm:$0xf]
    %v3410 = vld [vmem:[#allocation16 + $0x8] sm:$0xf]
    %v3411 = vld [vmem:[#allocation16 + $0xc] sm:$0xf]
    %v3412 = vld [vmem:[#allocation16 + $0x10] sm:$0xf]
    %v3413 = vld [vmem:[#allocation16 + $0x14] sm:$0xf]
    %v3414 = vld [vmem:[#allocation16 + $0x18] sm:$0xf]
    %v3415 = vld [vmem:[#allocation16 + $0x1c] sm:$0xf]
    %v3416 = vld [vmem:[#allocation16 + $0x20] sm:$0xf]
    %v3417 = vld [vmem:[#allocation16 + $0x24] sm:$0xf]
    %v3418 = vld [vmem:[#allocation16 + $0x28] sm:$0xf]
    %v3419 = vld [vmem:[#allocation16 + $0x2c] sm:$0xf]
    %v3420 = vld [vmem:[#allocation16 + $0x30] sm:$0xf]
    %v3421 = vld [vmem:[#allocation16 + $0x34] sm:$0xf]
    %v3422 = vld [vmem:[#allocation16 + $0x38] sm:$0xf]
    %v3423 = vld [vmem:[#allocation16 + $0x3c] sm:$0xf]
    %v3424 = vld [vmem:[#allocation16 + $0x40] sm:$0xf]
    %v3425 = vld [vmem:[#allocation16 + $0x44] sm:$0xf]
    %v3426 = vld [vmem:[#allocation16 + $0x48] sm:$0xf]
    %v3427 = vld [vmem:[#allocation16 + $0x4c] sm:$0xf]
    %v3428 = vld [vmem:[#allocation16 + $0x50] sm:$0xf]
    %v3429 = vld [vmem:[#allocation16 + $0x54] sm:$0xf]
    %v3430 = vld [vmem:[#allocation16 + $0x58] sm:$0xf]
    %v3431 = vld [vmem:[#allocation16 + $0x5c] sm:$0xf]
    %v3432 = vld [vmem:[#allocation16 + $0x60] sm:$0xf]
    %v3433 = vld [vmem:[#allocation16 + $0x64] sm:$0xf]
    %v3434 = vld [vmem:[#allocation16 + $0x68] sm:$0xf]
    %v3435 = vld [vmem:[#allocation16 + $0x6c] sm:$0xf]
    %v3436 = vld [vmem:[#allocation16 + $0x70] sm:$0xf]
    %v3437 = vld [vmem:[#allocation16 + $0x74] sm:$0xf]
    %v3438 = vld [vmem:[#allocation16 + $0x78] sm:$0xf]
    %v3439 = vld [vmem:[#allocation16 + $0x7c] sm:$0xf]
    %v3472 = vunpack.c.l.b16 %v3408
    %v3473 = vunpack.c.l.b16 %v3409
    %v3474 = vunpack.c.l.b16 %v3410
    %v3475 = vunpack.c.l.b16 %v3411
    %v3476 = vunpack.c.l.b16 %v3412
    %v3477 = vunpack.c.l.b16 %v3413
    %v3478 = vunpack.c.l.b16 %v3414
    %v3479 = vunpack.c.l.b16 %v3415
    %v3480 = vunpack.c.l.b16 %v3416
    %v3481 = vunpack.c.l.b16 %v3417
    %v3482 = vunpack.c.l.b16 %v3418
    %v3483 = vunpack.c.l.b16 %v3419
    %v3484 = vunpack.c.l.b16 %v3420
    %v3485 = vunpack.c.l.b16 %v3421
    %v3486 = vunpack.c.l.b16 %v3422
    %v3487 = vunpack.c.l.b16 %v3423
    %v3488 = vunpack.c.l.b16 %v3424
    %v3489 = vunpack.c.l.b16 %v3425
    %v3490 = vunpack.c.l.b16 %v3426
    %v3491 = vunpack.c.l.b16 %v3427
    %v3492 = vunpack.c.l.b16 %v3428
    %v3493 = vunpack.c.l.b16 %v3429
    %v3494 = vunpack.c.l.b16 %v3430
    %v3495 = vunpack.c.l.b16 %v3431
    %v3496 = vunpack.c.l.b16 %v3432
    %v3497 = vunpack.c.l.b16 %v3433
    %v3498 = vunpack.c.l.b16 %v3434
    %v3499 = vunpack.c.l.b16 %v3435
    %v3500 = vunpack.c.l.b16 %v3436
    %v3501 = vunpack.c.l.b16 %v3437
    %v3502 = vunpack.c.l.b16 %v3438
    %v3503 = vunpack.c.l.b16 %v3439
    %v3504 = vpack.c.b16 %v3473, %v3472
    %v3505 = vpack.c.b16 %v3475, %v3474
    %v3506 = vpack.c.b16 %v3477, %v3476
    %v3507 = vpack.c.b16 %v3479, %v3478
    %v3508 = vpack.c.b16 %v3481, %v3480
    %v3509 = vpack.c.b16 %v3483, %v3482
    %v3510 = vpack.c.b16 %v3485, %v3484
    %v3511 = vpack.c.b16 %v3487, %v3486
    %v3512 = vpack.c.b16 %v3489, %v3488
    %v3513 = vpack.c.b16 %v3491, %v3490
    %v3514 = vpack.c.b16 %v3493, %v3492
    %v3515 = vpack.c.b16 %v3495, %v3494
    %v3516 = vpack.c.b16 %v3497, %v3496
    %v3517 = vpack.c.b16 %v3499, %v3498
    %v3518 = vpack.c.b16 %v3501, %v3500
    %v3519 = vpack.c.b16 %v3503, %v3502
    %3536 = vmatprep.subr.bf16.mxu0 0
    %3537 = vmatpush1.bf16.msra.mxu0 %v3504
    %3538 = vmatprep.subr.bf16.mxu0 0
    %3539 = vmatpush1.bf16.msra.mxu0 %v3505
    %3540 = vmatprep.subr.bf16.mxu0 0
    %3541 = vmatpush1.bf16.msra.mxu0 %v3506
    %3542 = vmatprep.subr.bf16.mxu0 0
    %3543 = vmatpush1.bf16.msra.mxu0 %v3507
    %3544 = vmatprep.subr.bf16.mxu0 0
    %3545 = vmatpush1.bf16.msra.mxu0 %v3508
    %3546 = vmatprep.subr.bf16.mxu0 0
    %3547 = vmatpush1.bf16.msra.mxu0 %v3509
    %3548 = vmatprep.subr.bf16.mxu0 0
    %3549 = vmatpush1.bf16.msra.mxu0 %v3510
    %3550 = vmatprep.subr.bf16.mxu0 0
    %3551 = vmatpush1.bf16.msra.mxu0 %v3511
    %3552 = vmatprep.subr.bf16.mxu0 0
    %3553 = vmatpush1.bf16.msra.mxu0 %v3512
    %3554 = vmatprep.subr.bf16.mxu0 0
    %3555 = vmatpush1.bf16.msra.mxu0 %v3513
    %3556 = vmatprep.subr.bf16.mxu0 0
    %3557 = vmatpush1.bf16.msra.mxu0 %v3514
    %3558 = vmatprep.subr.bf16.mxu0 0
    %3559 = vmatpush1.bf16.msra.mxu0 %v3515
    %3560 = vmatprep.subr.bf16.mxu0 0
    %3561 = vmatpush1.bf16.msra.mxu0 %v3516
    %3562 = vmatprep.subr.bf16.mxu0 0
    %3563 = vmatpush1.bf16.msra.mxu0 %v3517
    %3564 = vmatprep.subr.bf16.mxu0 0
    %3565 = vmatpush1.bf16.msra.mxu0 %v3518
    %3566 = vmatprep.subr.bf16.mxu0 0
    %3567 = vmatpush1.bf16.msra.mxu0 %v3519
    %3568 = vmatprep.mubr.bf16.mxu0 %v3345
    %3569 = vmatmul.mubr.bf16.gmra.mrb[0].mxu0 %v3344
    %v3570 = vpop.f32.mrb[0].mxu0
    %v3571 = vadd.f32 0.0, %v3570
    %v3572 = vpop.f32.mrb[0].mxu0
    %v3573 = vpop.f32.mrb[0].mxu0
    %v3574 = vadd.f32 0.0, %v3573
    %v3575 = vpop.f32.mrb[0].mxu0
    %3576 = vmatprep.mubr.bf16.mxu0 %v3347
    %3577 = vmatmul.mubr.bf16.gmra.mrb[0].mxu0 %v3346
    %v3578 = vpop.f32.mrb[0].mxu0
    %v3579 = vadd.f32 0.0, %v3578
    %v3580 = vpop.f32.mrb[0].mxu0
    %v3581 = vpop.f32.mrb[0].mxu0
    %v3582 = vadd.f32 0.0, %v3581
    %v3583 = vpop.f32.mrb[0].mxu0
    %3584 = vmatprep.mubr.bf16.mxu0 %v3349
    %3585 = vmatmul.mubr.bf16.gmra.mrb[0].mxu0 %v3348
    %v3586 = vpop.f32.mrb[0].mxu0
    %v3587 = vadd.f32 0.0, %v3586
    %v3588 = vpop.f32.mrb[0].mxu0
    %v3589 = vpop.f32.mrb[0].mxu0
    %v3590 = vadd.f32 0.0, %v3589
    %v3591 = vpop.f32.mrb[0].mxu0
    %3592 = vmatprep.mubr.bf16.mxu0 %v3351
    %3593 = vmatmul.mubr.bf16.gmra.mrb[0].mxu0 %v3350
    %v3594 = vpop.f32.mrb[0].mxu0
    %v3595 = vadd.f32 0.0, %v3594
    %v3596 = vpop.f32.mrb[0].mxu0
    %v3597 = vpop.f32.mrb[0].mxu0
    %v3598 = vadd.f32 0.0, %v3597
    %v3599 = vpop.f32.mrb[0].mxu0
    %3600 = vmatprep.mubr.bf16.mxu0 %v3353
    %3601 = vmatmul.mubr.bf16.gmra.mrb[0].mxu0 %v3352
    %v3602 = vpop.f32.mrb[0].mxu0
    %v3603 = vadd.f32 0.0, %v3602
    %v3604 = vpop.f32.mrb[0].mxu0
    %v3605 = vpop.f32.mrb[0].mxu0
    %v3606 = vadd.f32 0.0, %v3605
    %v3607 = vpop.f32.mrb[0].mxu0
    %3608 = vmatprep.mubr.bf16.mxu0 %v3355
    %3609 = vmatmul.mubr.bf16.gmra.mrb[0].mxu0 %v3354
    %v3610 = vpop.f32.mrb[0].mxu0
    %v3611 = vadd.f32 0.0, %v3610
    %v3612 = vpop.f32.mrb[0].mxu0
    %v3613 = vpop.f32.mrb[0].mxu0
    %v3614 = vadd.f32 0.0, %v3613
    %v3615 = vpop.f32.mrb[0].mxu0
    %3616 = vmatprep.mubr.bf16.mxu0 %v3357
    %3617 = vmatmul.mubr.bf16.gmra.mrb[0].mxu0 %v3356
    %v3618 = vpop.f32.mrb[0].mxu0
    %v3619 = vadd.f32 0.0, %v3618
    %v3620 = vpop.f32.mrb[0].mxu0
    %v3621 = vpop.f32.mrb[0].mxu0
    %v3622 = vadd.f32 0.0, %v3621
    %v3623 = vpop.f32.mrb[0].mxu0
    %3624 = vmatprep.mubr.bf16.mxu0 %v3359
    %3625 = vmatmul.mubr.bf16.gmra.mrb[0].mxu0 %v3358
    %v3626 = vpop.f32.mrb[0].mxu0
    %v3627 = vadd.f32 0.0, %v3626
    %v3628 = vpop.f32.mrb[0].mxu0
    %v3629 = vpop.f32.mrb[0].mxu0
    %v3630 = vadd.f32 0.0, %v3629
    %v3631 = vpop.f32.mrb[0].mxu0
    %3632 = vmatprep.mubr.bf16.mxu0 %v3361
    %3633 = vmatmul.mubr.bf16.gmra.mrb[0].mxu0 %v3360
    %v3634 = vpop.f32.mrb[0].mxu0
    %v3635 = vadd.f32 0.0, %v3634
    %v3636 = vpop.f32.mrb[0].mxu0
    %v3637 = vpop.f32.mrb[0].mxu0
    %v3638 = vadd.f32 0.0, %v3637
    %v3639 = vpop.f32.mrb[0].mxu0
    %3640 = vmatprep.mubr.bf16.mxu0 %v3363
    %3641 = vmatmul.mubr.bf16.gmra.mrb[0].mxu0 %v3362
    %v3642 = vpop.f32.mrb[0].mxu0
    %v3643 = vadd.f32 0.0, %v3642
    %v3644 = vpop.f32.mrb[0].mxu0
    %v3645 = vpop.f32.mrb[0].mxu0
    %v3646 = vadd.f32 0.0, %v3645
    %v3647 = vpop.f32.mrb[0].mxu0
    %3648 = vmatprep.mubr.bf16.mxu0 %v3365
    %3649 = vmatmul.mubr.bf16.gmra.mrb[0].mxu0 %v3364
    %v3650 = vpop.f32.mrb[0].mxu0
    %v3651 = vadd.f32 0.0, %v3650
    %v3652 = vpop.f32.mrb[0].mxu0
    %v3653 = vpop.f32.mrb[0].mxu0
    %v3654 = vadd.f32 0.0, %v3653
    %v3655 = vpop.f32.mrb[0].mxu0
    %3656 = vmatprep.mubr.bf16.mxu0 %v3367
    %3657 = vmatmul.mubr.bf16.gmra.mrb[0].mxu0 %v3366
    %v3658 = vpop.f32.mrb[0].mxu0
    %v3659 = vadd.f32 0.0, %v3658
    %v3660 = vpop.f32.mrb[0].mxu0
    %v3661 = vpop.f32.mrb[0].mxu0
    %v3662 = vadd.f32 0.0, %v3661
    %v3663 = vpop.f32.mrb[0].mxu0
    %3664 = vmatprep.mubr.bf16.mxu0 %v3369
    %3665 = vmatmul.mubr.bf16.gmra.mrb[0].mxu0 %v3368
    %v3666 = vpop.f32.mrb[0].mxu0
    %v3667 = vadd.f32 0.0, %v3666
    %v3668 = vpop.f32.mrb[0].mxu0
    %v3669 = vpop.f32.mrb[0].mxu0
    %v3670 = vadd.f32 0.0, %v3669
    %v3671 = vpop.f32.mrb[0].mxu0
    %3672 = vmatprep.mubr.bf16.mxu0 %v3371
    %3673 = vmatmul.mubr.bf16.gmra.mrb[0].mxu0 %v3370
    %v3674 = vpop.f32.mrb[0].mxu0
    %v3675 = vadd.f32 0.0, %v3674
    %v3676 = vpop.f32.mrb[0].mxu0
    %v3677 = vpop.f32.mrb[0].mxu0
    %v3678 = vadd.f32 0.0, %v3677
    %v3679 = vpop.f32.mrb[0].mxu0
    %3680 = vmatprep.mubr.bf16.mxu0 %v3373
    %3681 = vmatmul.mubr.bf16.gmra.mrb[0].mxu0 %v3372
    %v3682 = vpop.f32.mrb[0].mxu0
    %v3683 = vadd.f32 0.0, %v3682
    %v3684 = vpop.f32.mrb[0].mxu0
    %v3685 = vpop.f32.mrb[0].mxu0
    %v3686 = vadd.f32 0.0, %v3685
    %v3687 = vpop.f32.mrb[0].mxu0
    %3688 = vmatprep.mubr.bf16.mxu0 %v3375
    %3689 = vmatmul.mubr.bf16.gmra.mrb[0].mxu0 %v3374
    %v3690 = vpop.f32.mrb[0].mxu0
    %v3691 = vadd.f32 0.0, %v3690
    %v3692 = vpop.f32.mrb[0].mxu0
    %v3693 = vpop.f32.mrb[0].mxu0
    %v3694 = vadd.f32 0.0, %v3693
    %v3695 = vpop.f32.mrb[0].mxu0
    %3696 = vmatprep.mubr.bf16.mxu0 %v3377
    %3697 = vmatmul.mubr.bf16.gmra.mrb[0].mxu0 %v3376
    %v3698 = vpop.f32.mrb[0].mxu0
    %v3699 = vadd.f32 0.0, %v3698
    %v3700 = vpop.f32.mrb[0].mxu0
    %v3701 = vpop.f32.mrb[0].mxu0
    %v3702 = vadd.f32 0.0, %v3701
    %v3703 = vpop.f32.mrb[0].mxu0
    %3704 = vmatprep.mubr.bf16.mxu0 %v3379
    %3705 = vmatmul.mubr.bf16.gmra.mrb[0].mxu0 %v3378
    %v3706 = vpop.f32.mrb[0].mxu0
    %v3707 = vadd.f32 0.0, %v3706
    %v3708 = vpop.f32.mrb[0].mxu0
    %v3709 = vpop.f32.mrb[0].mxu0
    %v3710 = vadd.f32 0.0, %v3709
    %v3711 = vpop.f32.mrb[0].mxu0
    %3712 = vmatprep.mubr.bf16.mxu0 %v3381
    %3713 = vmatmul.mubr.bf16.gmra.mrb[0].mxu0 %v3380
    %v3714 = vpop.f32.mrb[0].mxu0
    %v3715 = vadd.f32 0.0, %v3714
    %v3716 = vpop.f32.mrb[0].mxu0
    %v3717 = vpop.f32.mrb[0].mxu0
    %v3718 = vadd.f32 0.0, %v3717
    %v3719 = vpop.f32.mrb[0].mxu0
    %3720 = vmatprep.mubr.bf16.mxu0 %v3383
    %3721 = vmatmul.mubr.bf16.gmra.mrb[0].mxu0 %v3382
    %v3722 = vpop.f32.mrb[0].mxu0
    %v3723 = vadd.f32 0.0, %v3722
    %v3724 = vpop.f32.mrb[0].mxu0
    %v3725 = vpop.f32.mrb[0].mxu0
    %v3726 = vadd.f32 0.0, %v3725
    %v3727 = vpop.f32.mrb[0].mxu0
    %3728 = vmatprep.mubr.bf16.mxu0 %v3385
    %3729 = vmatmul.mubr.bf16.gmra.mrb[0].mxu0 %v3384
    %v3730 = vpop.f32.mrb[0].mxu0
    %v3731 = vadd.f32 0.0, %v3730
    %v3732 = vpop.f32.mrb[0].mxu0
    %v3733 = vpop.f32.mrb[0].mxu0
    %v3734 = vadd.f32 0.0, %v3733
    %v3735 = vpop.f32.mrb[0].mxu0
    %3736 = vmatprep.mubr.bf16.mxu0 %v3387
    %3737 = vmatmul.mubr.bf16.gmra.mrb[0].mxu0 %v3386
    %v3738 = vpop.f32.mrb[0].mxu0
    %v3739 = vadd.f32 0.0, %v3738
    %v3740 = vpop.f32.mrb[0].mxu0
    %v3741 = vpop.f32.mrb[0].mxu0
    %v3742 = vadd.f32 0.0, %v3741
    %v3743 = vpop.f32.mrb[0].mxu0
    %3744 = vmatprep.mubr.bf16.mxu0 %v3389
    %3745 = vmatmul.mubr.bf16.gmra.mrb[0].mxu0 %v3388
    %v3746 = vpop.f32.mrb[0].mxu0
    %v3747 = vadd.f32 0.0, %v3746
    %v3748 = vpop.f32.mrb[0].mxu0
    %v3749 = vpop.f32.mrb[0].mxu0
    %v3750 = vadd.f32 0.0, %v3749
    %v3751 = vpop.f32.mrb[0].mxu0
    %3752 = vmatprep.mubr.bf16.mxu0 %v3391
    %3753 = vmatmul.mubr.bf16.gmra.mrb[0].mxu0 %v3390
    %v3754 = vpop.f32.mrb[0].mxu0
    %v3755 = vadd.f32 0.0, %v3754
    %v3756 = vpop.f32.mrb[0].mxu0
    %v3757 = vpop.f32.mrb[0].mxu0
    %v3758 = vadd.f32 0.0, %v3757
    %v3759 = vpop.f32.mrb[0].mxu0
    %3760 = vmatprep.mubr.bf16.mxu0 %v3393
    %3761 = vmatmul.mubr.bf16.gmra.mrb[0].mxu0 %v3392
    %v3762 = vpop.f32.mrb[0].mxu0
    %v3763 = vadd.f32 0.0, %v3762
    %v3764 = vpop.f32.mrb[0].mxu0
    %v3765 = vpop.f32.mrb[0].mxu0
    %v3766 = vadd.f32 0.0, %v3765
    %v3767 = vpop.f32.mrb[0].mxu0
    %3768 = vmatprep.mubr.bf16.mxu0 %v3395
    %3769 = vmatmul.mubr.bf16.gmra.mrb[0].mxu0 %v3394
    %v3770 = vpop.f32.mrb[0].mxu0
    %v3771 = vadd.f32 0.0, %v3770
    %v3772 = vpop.f32.mrb[0].mxu0
    %v3773 = vpop.f32.mrb[0].mxu0
    %v3774 = vadd.f32 0.0, %v3773
    %v3775 = vpop.f32.mrb[0].mxu0
    %3776 = vmatprep.mubr.bf16.mxu0 %v3397
    %3777 = vmatmul.mubr.bf16.gmra.mrb[0].mxu0 %v3396
    %v3778 = vpop.f32.mrb[0].mxu0
    %v3779 = vadd.f32 0.0, %v3778
    %v3780 = vpop.f32.mrb[0].mxu0
    %v3781 = vpop.f32.mrb[0].mxu0
    %v3782 = vadd.f32 0.0, %v3781
    %v3783 = vpop.f32.mrb[0].mxu0
    %3784 = vmatprep.mubr.bf16.mxu0 %v3399
    %3785 = vmatmul.mubr.bf16.gmra.mrb[0].mxu0 %v3398
    %v3786 = vpop.f32.mrb[0].mxu0
    %v3787 = vadd.f32 0.0, %v3786
    %v3788 = vpop.f32.mrb[0].mxu0
    %v3789 = vpop.f32.mrb[0].mxu0
    %v3790 = vadd.f32 0.0, %v3789
    %v3791 = vpop.f32.mrb[0].mxu0
    %3792 = vmatprep.mubr.bf16.mxu0 %v3401
    %3793 = vmatmul.mubr.bf16.gmra.mrb[0].mxu0 %v3400
    %v3794 = vpop.f32.mrb[0].mxu0
    %v3795 = vadd.f32 0.0, %v3794
    %v3796 = vpop.f32.mrb[0].mxu0
    %v3797 = vpop.f32.mrb[0].mxu0
    %v3798 = vadd.f32 0.0, %v3797
    %v3799 = vpop.f32.mrb[0].mxu0
    %3800 = vmatprep.mubr.bf16.mxu0 %v3403
    %3801 = vmatmul.mubr.bf16.gmra.mrb[0].mxu0 %v3402
    %v3802 = vpop.f32.mrb[0].mxu0
    %v3803 = vadd.f32 0.0, %v3802
    %v3804 = vpop.f32.mrb[0].mxu0
    %v3805 = vpop.f32.mrb[0].mxu0
    %v3806 = vadd.f32 0.0, %v3805
    %v3807 = vpop.f32.mrb[0].mxu0
    %3808 = vmatprep.mubr.bf16.mxu0 %v3405
    %3809 = vmatmul.mubr.bf16.gmra.mrb[0].mxu0 %v3404
    %v3810 = vpop.f32.mrb[0].mxu0
    %v3811 = vadd.f32 0.0, %v3810
    %v3812 = vpop.f32.mrb[0].mxu0
    %v3813 = vpop.f32.mrb[0].mxu0
    %v3814 = vadd.f32 0.0, %v3813
    %v3815 = vpop.f32.mrb[0].mxu0
    %3816 = vmatprep.mubr.bf16.mxu0 %v3407
    %3817 = vmatmul.mubr.bf16.gmra.mrb[0].mxu0 %v3406
    %v3818 = vpop.f32.mrb[0].mxu0
    %v3819 = vadd.f32 0.0, %v3818
    %v3820 = vpop.f32.mrb[0].mxu0
    %v3821 = vpop.f32.mrb[0].mxu0
    %v3822 = vadd.f32 0.0, %v3821
    %v3823 = vpop.f32.mrb[0].mxu0
    %3824 = vdwg.mxu0
    %v3825 = vadd.f32 %v3280, %v3571
    %v3826 = vadd.f32 %v3281, %v3574
    %v3827 = vadd.f32 %v3282, %v3579
    %v3828 = vadd.f32 %v3283, %v3582
    %v3829 = vadd.f32 %v3284, %v3587
    %v3830 = vadd.f32 %v3285, %v3590
    %v3831 = vadd.f32 %v3286, %v3595
    %v3832 = vadd.f32 %v3287, %v3598
    %v3833 = vadd.f32 %v3288, %v3603
    %v3834 = vadd.f32 %v3289, %v3606
    %v3835 = vadd.f32 %v3290, %v3611
    %v3836 = vadd.f32 %v3291, %v3614
    %v3837 = vadd.f32 %v3292, %v3619
    %v3838 = vadd.f32 %v3293, %v3622
    %v3839 = vadd.f32 %v3294, %v3627
    %v3840 = vadd.f32 %v3295, %v3630
    %v3841 = vadd.f32 %v3296, %v3635
    %v3842 = vadd.f32 %v3297, %v3638
    %v3843 = vadd.f32 %v3298, %v3643
    %v3844 = vadd.f32 %v3299, %v3646
    %v3845 = vadd.f32 %v3300, %v3651
    %v3846 = vadd.f32 %v3301, %v3654
    %v3847 = vadd.f32 %v3302, %v3659
    %v3848 = vadd.f32 %v3303, %v3662
    %v3849 = vadd.f32 %v3304, %v3667
    %v3850 = vadd.f32 %v3305, %v3670
    %v3851 = vadd.f32 %v3306, %v3675
    %v3852 = vadd.f32 %v3307, %v3678
    %v3853 = vadd.f32 %v3308, %v3683
    %v3854 = vadd.f32 %v3309, %v3686
    %v3855 = vadd.f32 %v3310, %v3691
    %v3856 = vadd.f32 %v3311, %v3694
    %v3857 = vadd.f32 %v3312, %v3699
    %v3858 = vadd.f32 %v3313, %v3702
    %v3859 = vadd.f32 %v3314, %v3707
    %v3860 = vadd.f32 %v3315, %v3710
    %v3861 = vadd.f32 %v3316, %v3715
    %v3862 = vadd.f32 %v3317, %v3718
    %v3863 = vadd.f32 %v3318, %v3723
    %v3864 = vadd.f32 %v3319, %v3726
    %v3865 = vadd.f32 %v3320, %v3731
    %v3866 = vadd.f32 %v3321, %v3734
    %v3867 = vadd.f32 %v3322, %v3739
    %v3868 = vadd.f32 %v3323, %v3742
    %v3869 = vadd.f32 %v3324, %v3747
    %v3870 = vadd.f32 %v3325, %v3750
    %v3871 = vadd.f32 %v3326, %v3755
    %v3872 = vadd.f32 %v3327, %v3758
    %v3873 = vadd.f32 %v3328, %v3763
    %v3874 = vadd.f32 %v3329, %v3766
    %v3875 = vadd.f32 %v3330, %v3771
    %v3876 = vadd.f32 %v3331, %v3774
    %v3877 = vadd.f32 %v3332, %v3779
    %v3878 = vadd.f32 %v3333, %v3782
    %v3879 = vadd.f32 %v3334, %v3787
    %v3880 = vadd.f32 %v3335, %v3790
    %v3881 = vadd.f32 %v3336, %v3795
    %v3882 = vadd.f32 %v3337, %v3798
    %v3883 = vadd.f32 %v3338, %v3803
    %v3884 = vadd.f32 %v3339, %v3806
    %v3885 = vadd.f32 %v3340, %v3811
    %v3886 = vadd.f32 %v3341, %v3814
    %v3887 = vadd.f32 %v3342, %v3819
    %v3888 = vadd.f32 %v3343, %v3822
    %3889 = vst [vmem:[#allocation3] sm:$0xff] %v3825
    %3890 = vst [vmem:[#allocation3 + $0x8] sm:$0xff] %v3826
    %3891 = vst [vmem:[#allocation3 + $0x10] sm:$0xff] %v3827
    %3892 = vst [vmem:[#allocation3 + $0x18] sm:$0xff] %v3828
    %3893 = vst [vmem:[#allocation3 + $0x20] sm:$0xff] %v3829
    %3894 = vst [vmem:[#allocation3 + $0x28] sm:$0xff] %v3830
    %3895 = vst [vmem:[#allocation3 + $0x30] sm:$0xff] %v3831
    %3896 = vst [vmem:[#allocation3 + $0x38] sm:$0xff] %v3832
    %3897 = vst [vmem:[#allocation3 + $0x40] sm:$0xff] %v3833
    %3898 = vst [vmem:[#allocation3 + $0x48] sm:$0xff] %v3834
    %3899 = vst [vmem:[#allocation3 + $0x50] sm:$0xff] %v3835
    %3900 = vst [vmem:[#allocation3 + $0x58] sm:$0xff] %v3836
    %3901 = vst [vmem:[#allocation3 + $0x60] sm:$0xff] %v3837
    %3902 = vst [vmem:[#allocation3 + $0x68] sm:$0xff] %v3838
    %3903 = vst [vmem:[#allocation3 + $0x70] sm:$0xff] %v3839
    %3904 = vst [vmem:[#allocation3 + $0x78] sm:$0xff] %v3840
    %3905 = vst [vmem:[#allocation3 + $0x80] sm:$0xff] %v3841
    %3906 = vst [vmem:[#allocation3 + $0x88] sm:$0xff] %v3842
    %3907 = vst [vmem:[#allocation3 + $0x90] sm:$0xff] %v3843
    %3908 = vst [vmem:[#allocation3 + $0x98] sm:$0xff] %v3844
    %3909 = vst [vmem:[#allocation3 + $0xa0] sm:$0xff] %v3845
    %3910 = vst [vmem:[#allocation3 + $0xa8] sm:$0xff] %v3846
    %3911 = vst [vmem:[#allocation3 + $0xb0] sm:$0xff] %v3847
    %3912 = vst [vmem:[#allocation3 + $0xb8] sm:$0xff] %v3848
    %3913 = vst [vmem:[#allocation3 + $0xc0] sm:$0xff] %v3849
    %3914 = vst [vmem:[#allocation3 + $0xc8] sm:$0xff] %v3850
    %3915 = vst [vmem:[#allocation3 + $0xd0] sm:$0xff] %v3851
    %3916 = vst [vmem:[#allocation3 + $0xd8] sm:$0xff] %v3852
    %3917 = vst [vmem:[#allocation3 + $0xe0] sm:$0xff] %v3853
    %3918 = vst [vmem:[#allocation3 + $0xe8] sm:$0xff] %v3854
    %3919 = vst [vmem:[#allocation3 + $0xf0] sm:$0xff] %v3855
    %3920 = vst [vmem:[#allocation3 + $0xf8] sm:$0xff] %v3856
    %3921 = vst [vmem:[#allocation3 + $0x100] sm:$0xff] %v3857
    %3922 = vst [vmem:[#allocation3 + $0x108] sm:$0xff] %v3858
    %3923 = vst [vmem:[#allocation3 + $0x110] sm:$0xff] %v3859
    %3924 = vst [vmem:[#allocation3 + $0x118] sm:$0xff] %v3860
    %3925 = vst [vmem:[#allocation3 + $0x120] sm:$0xff] %v3861
    %3926 = vst [vmem:[#allocation3 + $0x128] sm:$0xff] %v3862
    %3927 = vst [vmem:[#allocation3 + $0x130] sm:$0xff] %v3863
    %3928 = vst [vmem:[#allocation3 + $0x138] sm:$0xff] %v3864
    %3929 = vst [vmem:[#allocation3 + $0x140] sm:$0xff] %v3865
    %3930 = vst [vmem:[#allocation3 + $0x148] sm:$0xff] %v3866
    %3931 = vst [vmem:[#allocation3 + $0x150] sm:$0xff] %v3867
    %3932 = vst [vmem:[#allocation3 + $0x158] sm:$0xff] %v3868
    %3933 = vst [vmem:[#allocation3 + $0x160] sm:$0xff] %v3869
    %3934 = vst [vmem:[#allocation3 + $0x168] sm:$0xff] %v3870
    %3935 = vst [vmem:[#allocation3 + $0x170] sm:$0xff] %v3871
    %3936 = vst [vmem:[#allocation3 + $0x178] sm:$0xff] %v3872
    %3937 = vst [vmem:[#allocation3 + $0x180] sm:$0xff] %v3873
    %3938 = vst [vmem:[#allocation3 + $0x188] sm:$0xff] %v3874
    %3939 = vst [vmem:[#allocation3 + $0x190] sm:$0xff] %v3875
    %3940 = vst [vmem:[#allocation3 + $0x198] sm:$0xff] %v3876
    %3941 = vst [vmem:[#allocation3 + $0x1a0] sm:$0xff] %v3877
    %3942 = vst [vmem:[#allocation3 + $0x1a8] sm:$0xff] %v3878
    %3943 = vst [vmem:[#allocation3 + $0x1b0] sm:$0xff] %v3879
    %3944 = vst [vmem:[#allocation3 + $0x1b8] sm:$0xff] %v3880
    %3945 = vst [vmem:[#allocation3 + $0x1c0] sm:$0xff] %v3881
    %3946 = vst [vmem:[#allocation3 + $0x1c8] sm:$0xff] %v3882
    %3947 = vst [vmem:[#allocation3 + $0x1d0] sm:$0xff] %v3883
    %3948 = vst [vmem:[#allocation3 + $0x1d8] sm:$0xff] %v3884
    %3949 = vst [vmem:[#allocation3 + $0x1e0] sm:$0xff] %v3885
    %3950 = vst [vmem:[#allocation3 + $0x1e8] sm:$0xff] %v3886
    %3951 = vst [vmem:[#allocation3 + $0x1f0] sm:$0xff] %v3887
    %3952 = vst [vmem:[#allocation3 + $0x1f8] sm:$0xff] %v3888
    // Predicated region
    $region70: #{tpu_custom_call.1} parent=1 // pred_check
      %p3953 = pneg %p132
    $region71: #{tpu_custom_call.1} parent=1 // pred_check_branch
      %3955 = sbr.rel (%p3953) target = $region73
    $region72: #{tpu_custom_call.1} parent=1 // pred_region
      %v3956 = vld [vmem:[#allocation3] sm:$0xff]
      %v3957 = vld [vmem:[#allocation3 + $0x8] sm:$0xff]
      %v3958 = vld [vmem:[#allocation3 + $0x10] sm:$0xff]
      %v3959 = vld [vmem:[#allocation3 + $0x18] sm:$0xff]
      %v3960 = vld [vmem:[#allocation3 + $0x20] sm:$0xff]
      %v3961 = vld [vmem:[#allocation3 + $0x28] sm:$0xff]
      %v3962 = vld [vmem:[#allocation3 + $0x30] sm:$0xff]
      %v3963 = vld [vmem:[#allocation3 + $0x38] sm:$0xff]
      %v3964 = vld [vmem:[#allocation3 + $0x40] sm:$0xff]
      %v3965 = vld [vmem:[#allocation3 + $0x48] sm:$0xff]
      %v3966 = vld [vmem:[#allocation3 + $0x50] sm:$0xff]
      %v3967 = vld [vmem:[#allocation3 + $0x58] sm:$0xff]
      %v3968 = vld [vmem:[#allocation3 + $0x60] sm:$0xff]
      %v3969 = vld [vmem:[#allocation3 + $0x68] sm:$0xff]
      %v3970 = vld [vmem:[#allocation3 + $0x70] sm:$0xff]
      %v3971 = vld [vmem:[#allocation3 + $0x78] sm:$0xff]
      %v3972 = vld [vmem:[#allocation3 + $0x80] sm:$0xff]
      %v3973 = vld [vmem:[#allocation3 + $0x88] sm:$0xff]
      %v3974 = vld [vmem:[#allocation3 + $0x90] sm:$0xff]
      %v3975 = vld [vmem:[#allocation3 + $0x98] sm:$0xff]
      %v3976 = vld [vmem:[#allocation3 + $0xa0] sm:$0xff]
      %v3977 = vld [vmem:[#allocation3 + $0xa8] sm:$0xff]
      %v3978 = vld [vmem:[#allocation3 + $0xb0] sm:$0xff]
      %v3979 = vld [vmem:[#allocation3 + $0xb8] sm:$0xff]
      %v3980 = vld [vmem:[#allocation3 + $0xc0] sm:$0xff]
      %v3981 = vld [vmem:[#allocation3 + $0xc8] sm:$0xff]
      %v3982 = vld [vmem:[#allocation3 + $0xd0] sm:$0xff]
      %v3983 = vld [vmem:[#allocation3 + $0xd8] sm:$0xff]
      %v3984 = vld [vmem:[#allocation3 + $0xe0] sm:$0xff]
      %v3985 = vld [vmem:[#allocation3 + $0xe8] sm:$0xff]
      %v3986 = vld [vmem:[#allocation3 + $0xf0] sm:$0xff]
      %v3987 = vld [vmem:[#allocation3 + $0xf8] sm:$0xff]
      %v3988 = vld [vmem:[#allocation3 + $0x100] sm:$0xff]
      %v3989 = vld [vmem:[#allocation3 + $0x108] sm:$0xff]
      %v3990 = vld [vmem:[#allocation3 + $0x110] sm:$0xff]
      %v3991 = vld [vmem:[#allocation3 + $0x118] sm:$0xff]
      %v3992 = vld [vmem:[#allocation3 + $0x120] sm:$0xff]
      %v3993 = vld [vmem:[#allocation3 + $0x128] sm:$0xff]
      %v3994 = vld [vmem:[#allocation3 + $0x130] sm:$0xff]
      %v3995 = vld [vmem:[#allocation3 + $0x138] sm:$0xff]
      %v3996 = vld [vmem:[#allocation3 + $0x140] sm:$0xff]
      %v3997 = vld [vmem:[#allocation3 + $0x148] sm:$0xff]
      %v3998 = vld [vmem:[#allocation3 + $0x150] sm:$0xff]
      %v3999 = vld [vmem:[#allocation3 + $0x158] sm:$0xff]
      %v4000 = vld [vmem:[#allocation3 + $0x160] sm:$0xff]
      %v4001 = vld [vmem:[#allocation3 + $0x168] sm:$0xff]
      %v4002 = vld [vmem:[#allocation3 + $0x170] sm:$0xff]
      %v4003 = vld [vmem:[#allocation3 + $0x178] sm:$0xff]
      %v4004 = vld [vmem:[#allocation3 + $0x180] sm:$0xff]
      %v4005 = vld [vmem:[#allocation3 + $0x188] sm:$0xff]
      %v4006 = vld [vmem:[#allocation3 + $0x190] sm:$0xff]
      %v4007 = vld [vmem:[#allocation3 + $0x198] sm:$0xff]
      %v4008 = vld [vmem:[#allocation3 + $0x1a0] sm:$0xff]
      %v4009 = vld [vmem:[#allocation3 + $0x1a8] sm:$0xff]
      %v4010 = vld [vmem:[#allocation3 + $0x1b0] sm:$0xff]
      %v4011 = vld [vmem:[#allocation3 + $0x1b8] sm:$0xff]
      %v4012 = vld [vmem:[#allocation3 + $0x1c0] sm:$0xff]
      %v4013 = vld [vmem:[#allocation3 + $0x1c8] sm:$0xff]
      %v4014 = vld [vmem:[#allocation3 + $0x1d0] sm:$0xff]
      %v4015 = vld [vmem:[#allocation3 + $0x1d8] sm:$0xff]
      %v4016 = vld [vmem:[#allocation3 + $0x1e0] sm:$0xff]
      %v4017 = vld [vmem:[#allocation3 + $0x1e8] sm:$0xff]
      %v4018 = vld [vmem:[#allocation3 + $0x1f0] sm:$0xff]
      %v4019 = vld [vmem:[#allocation3 + $0x1f8] sm:$0xff]
      %4020 = vst [vmem:[#allocation18] sm:$0xff] %v3956
      %4021 = vst [vmem:[#allocation18 + $0x8] sm:$0xff] %v3957
      %4022 = vst [vmem:[#allocation18 + $0x10] sm:$0xff] %v3958
      %4023 = vst [vmem:[#allocation18 + $0x18] sm:$0xff] %v3959
      %4024 = vst [vmem:[#allocation18 + $0x20] sm:$0xff] %v3960
      %4025 = vst [vmem:[#allocation18 + $0x28] sm:$0xff] %v3961
      %4026 = vst [vmem:[#allocation18 + $0x30] sm:$0xff] %v3962
      %4027 = vst [vmem:[#allocation18 + $0x38] sm:$0xff] %v3963
      %4028 = vst [vmem:[#allocation18 + $0x40] sm:$0xff] %v3964
      %4029 = vst [vmem:[#allocation18 + $0x48] sm:$0xff] %v3965
      %4030 = vst [vmem:[#allocation18 + $0x50] sm:$0xff] %v3966
      %4031 = vst [vmem:[#allocation18 + $0x58] sm:$0xff] %v3967
      %4032 = vst [vmem:[#allocation18 + $0x60] sm:$0xff] %v3968
      %4033 = vst [vmem:[#allocation18 + $0x68] sm:$0xff] %v3969
      %4034 = vst [vmem:[#allocation18 + $0x70] sm:$0xff] %v3970
      %4035 = vst [vmem:[#allocation18 + $0x78] sm:$0xff] %v3971
      %4036 = vst [vmem:[#allocation18 + $0x80] sm:$0xff] %v3972
      %4037 = vst [vmem:[#allocation18 + $0x88] sm:$0xff] %v3973
      %4038 = vst [vmem:[#allocation18 + $0x90] sm:$0xff] %v3974
      %4039 = vst [vmem:[#allocation18 + $0x98] sm:$0xff] %v3975
      %4040 = vst [vmem:[#allocation18 + $0xa0] sm:$0xff] %v3976
      %4041 = vst [vmem:[#allocation18 + $0xa8] sm:$0xff] %v3977
      %4042 = vst [vmem:[#allocation18 + $0xb0] sm:$0xff] %v3978
      %4043 = vst [vmem:[#allocation18 + $0xb8] sm:$0xff] %v3979
      %4044 = vst [vmem:[#allocation18 + $0xc0] sm:$0xff] %v3980
      %4045 = vst [vmem:[#allocation18 + $0xc8] sm:$0xff] %v3981
      %4046 = vst [vmem:[#allocation18 + $0xd0] sm:$0xff] %v3982
      %4047 = vst [vmem:[#allocation18 + $0xd8] sm:$0xff] %v3983
      %4048 = vst [vmem:[#allocation18 + $0xe0] sm:$0xff] %v3984
      %4049 = vst [vmem:[#allocation18 + $0xe8] sm:$0xff] %v3985
      %4050 = vst [vmem:[#allocation18 + $0xf0] sm:$0xff] %v3986
      %4051 = vst [vmem:[#allocation18 + $0xf8] sm:$0xff] %v3987
      %4052 = vst [vmem:[#allocation18 + $0x100] sm:$0xff] %v3988
      %4053 = vst [vmem:[#allocation18 + $0x108] sm:$0xff] %v3989
      %4054 = vst [vmem:[#allocation18 + $0x110] sm:$0xff] %v3990
      %4055 = vst [vmem:[#allocation18 + $0x118] sm:$0xff] %v3991
      %4056 = vst [vmem:[#allocation18 + $0x120] sm:$0xff] %v3992
      %4057 = vst [vmem:[#allocation18 + $0x128] sm:$0xff] %v3993
      %4058 = vst [vmem:[#allocation18 + $0x130] sm:$0xff] %v3994
      %4059 = vst [vmem:[#allocation18 + $0x138] sm:$0xff] %v3995
      %4060 = vst [vmem:[#allocation18 + $0x140] sm:$0xff] %v3996
      %4061 = vst [vmem:[#allocation18 + $0x148] sm:$0xff] %v3997
      %4062 = vst [vmem:[#allocation18 + $0x150] sm:$0xff] %v3998
      %4063 = vst [vmem:[#allocation18 + $0x158] sm:$0xff] %v3999
      %4064 = vst [vmem:[#allocation18 + $0x160] sm:$0xff] %v4000
      %4065 = vst [vmem:[#allocation18 + $0x168] sm:$0xff] %v4001
      %4066 = vst [vmem:[#allocation18 + $0x170] sm:$0xff] %v4002
      %4067 = vst [vmem:[#allocation18 + $0x178] sm:$0xff] %v4003
      %4068 = vst [vmem:[#allocation18 + $0x180] sm:$0xff] %v4004
      %4069 = vst [vmem:[#allocation18 + $0x188] sm:$0xff] %v4005
      %4070 = vst [vmem:[#allocation18 + $0x190] sm:$0xff] %v4006
      %4071 = vst [vmem:[#allocation18 + $0x198] sm:$0xff] %v4007
      %4072 = vst [vmem:[#allocation18 + $0x1a0] sm:$0xff] %v4008
      %4073 = vst [vmem:[#allocation18 + $0x1a8] sm:$0xff] %v4009
      %4074 = vst [vmem:[#allocation18 + $0x1b0] sm:$0xff] %v4010
      %4075 = vst [vmem:[#allocation18 + $0x1b8] sm:$0xff] %v4011
      %4076 = vst [vmem:[#allocation18 + $0x1c0] sm:$0xff] %v4012
      %4077 = vst [vmem:[#allocation18 + $0x1c8] sm:$0xff] %v4013
      %4078 = vst [vmem:[#allocation18 + $0x1d0] sm:$0xff] %v4014
      %4079 = vst [vmem:[#allocation18 + $0x1d8] sm:$0xff] %v4015
      %4080 = vst [vmem:[#allocation18 + $0x1e0] sm:$0xff] %v4016
      %4081 = vst [vmem:[#allocation18 + $0x1e8] sm:$0xff] %v4017
      %4082 = vst [vmem:[#allocation18 + $0x1f0] sm:$0xff] %v4018
      %4083 = vst [vmem:[#allocation18 + $0x1f8] sm:$0xff] %v4019
    $region73: #{tpu_custom_call.1} parent=1 // pred_fallthru
      _
    // Predicated region
    $region74: #{tpu_custom_call.1} parent=1 // pred_check
      _
    $region75: #{tpu_custom_call.1} parent=1 // pred_check_branch
      %4085 = sbr.rel (0) target = $region77
    $region76: #{tpu_custom_call.1} parent=1 // pred_region
      %s4087 = ssub.s32 8192, 8192
      %4088 = vsyncadd [#allocation6], %s4087
      %s4089 = sshll.u32 [#allocation18], 4
      %s4090 = int_to_ptr.vmem [resolvable:$true] %s4089
      %4095 = dma.vmem_to_hbm [thread:$0]  %s4090, 8192, %s8, [#allocation6], 128, 128, 8
    $region77: #{tpu_custom_call.1} parent=1 // pred_fallthru
      _
    // Predicated region
    $region78: #{tpu_custom_call.1} parent=1 // pred_check
      _
    $region79: #{tpu_custom_call.1} parent=1 // pred_check_branch
      %4097 = sbr.rel (0) target = $region81
    $region80: #{tpu_custom_call.1} parent=1 // pred_region
      %4098 = dma.done [#allocation6], 8192
    $region81: #{tpu_custom_call.1} parent=1 // pred_fallthru
      _
    %4099 = vsyncpa [#allocation5], 1
    %4100 = vsyncpa [#allocation8], 1
    %4101 = vsyncpa [#allocation11], 1
    %4102 = vsyncpa [#allocation14], 1
    %4103 = vsyncpa [#allocation17], 1
    %4104 = vsyncpa [#allocation6], 1

</llo_original>
